<compile_context>
chip_gen: v7x
topology: tpu7x:2x2x1
jax: 0.10.0
libtpu: 0.0.40
codegen_flags: <defaults>
</compile_context>

<pallas_src>
import math
import functools

import jax
import jax.numpy as jnp
from jax.experimental import pallas as pl
from jax.experimental.pallas import tpu as pltpu

# Explicit scoped-VMEM cap, safe on every generation (v5e/v6e: 128 MiB
# physical, v7x: 64 MiB physical).  Tile sizes below are chosen to fit it.
VMEM_LIMIT_BYTES = 32 * 1024 * 1024
LN_EPS = 1e-5  # torch nn.LayerNorm default


# ----------------------------- tiling helper --------------------------------

def _pick_tile(dim, max_tile, quantum):
    """Largest tile <= max_tile that divides `dim` and is a multiple of
    `quantum`; falls back to the full dim (always a legal block size)."""
    if dim <= max_tile:
        return dim
    t = (max_tile // quantum) * quantum
    while t >= quantum:
        if dim % t == 0:
            return t
        t -= quantum
    return dim


# ----------------------- generic tiled linear (y = xW + b) ------------------
# Grid over (M, N, K) with a VMEM f32 accumulator; bf16 operands into the MXU.
# Used for fused QKV / fused KV / Q projections and the fc_out vocab proj.

def _linear_kernel(x_ref, w_ref, b_ref, o_ref, acc_ref):
    @pl.when(pl.program_id(2) == 0)
    def _():
        acc_ref[...] = jnp.zeros_like(acc_ref)

    acc_ref[...] += jnp.dot(
        x_ref[...].astype(jnp.bfloat16),      # bf16 into the MXU
        w_ref[...],                           # weights stored as bf16
        preferred_element_type=jnp.float32)   # f32 accumulation

    @pl.when(pl.program_id(2) == pl.num_programs(2) - 1)
    def _():
        o_ref[...] = acc_ref[...] + b_ref[...]


def _linear_single_k_kernel(x_ref, w_ref, b_ref, o_ref):
    # Full-K block: no scratch accumulator, no runtime branches.
    o_ref[...] = jnp.dot(
        x_ref[...].astype(jnp.bfloat16), w_ref[...],
        preferred_element_type=jnp.float32) + b_ref[...]


def linear(x2d, w_bf16, b, *, max_tm=256, max_tn=512, max_tk=512):
    M, K = x2d.shape
    N = w_bf16.shape[1]
    tm = _pick_tile(M, max_tm, 8)
    tn = _pick_tile(N, max_tn, 128)
    tk = _pick_tile(K, max_tk, 128)

    if tk == K:
        # Single-K fast path (common for hidden-dim sized K).
        grid = (M // tm, N // tn)
        return pl.pallas_call(
            _linear_single_k_kernel,
            grid=grid,
            in_specs=[
                pl.BlockSpec((tm, K), lambda i, j: (i, 0)),
                pl.BlockSpec((K, tn), lambda i, j: (0, j)),
                pl.BlockSpec((1, tn), lambda i, j: (0, j)),
            ],
            out_specs=pl.BlockSpec((tm, tn), lambda i, j: (i, j)),
            out_shape=jax.ShapeDtypeStruct((M, N), jnp.float32),
            compiler_params=pltpu.CompilerParams(
                dimension_semantics=("parallel", "parallel"),
                vmem_limit_bytes=VMEM_LIMIT_BYTES),
        )(x2d, w_bf16, b)

    grid = (M // tm, N // tn, K // tk)
    return pl.pallas_call(
        _linear_kernel,
        grid=grid,
        in_specs=[
            pl.BlockSpec((tm, tk), lambda i, j, k: (i, k)),
            pl.BlockSpec((tk, tn), lambda i, j, k: (k, j)),
            pl.BlockSpec((1, tn), lambda i, j, k: (0, j)),
        ],
        out_specs=pl.BlockSpec((tm, tn), lambda i, j, k: (i, j)),
        out_shape=jax.ShapeDtypeStruct((M, N), jnp.float32),
        scratch_shapes=[pltpu.VMEM((tm, tn), jnp.float32)],
        compiler_params=pltpu.CompilerParams(
            dimension_semantics=("parallel", "parallel", "arbitrary"),
            vmem_limit_bytes=VMEM_LIMIT_BYTES),
    )(x2d, w_bf16, b)


# --------------- linear + residual add + LayerNorm (fused epilogue) ---------

def _linear_ln_kernel(x_ref, w_ref, b_ref, r_ref, g_ref, bb_ref, o_ref):
    y = jnp.dot(x_ref[...].astype(jnp.bfloat16), w_ref[...],
                preferred_element_type=jnp.float32) + b_ref[...]
    y = y + r_ref[...]                                        # residual add
    mu = jnp.mean(y, axis=-1, keepdims=True)
    var = jnp.mean((y - mu) ** 2, axis=-1, keepdims=True)     # biased (torch LN)
    inv = jax.lax.rsqrt(var + LN_EPS)
    o_ref[...] = (y - mu) * inv * g_ref[...] + bb_ref[...]


def linear_add_ln(x2d, w_bf16, b, res2d, gamma, beta, *, max_tm=256):
    M, K = x2d.shape
    N = w_bf16.shape[1]
    tm = _pick_tile(M, max_tm, 8)
    grid = (M // tm,)
    return pl.pallas_call(
        _linear_ln_kernel,
        grid=grid,
        in_specs=[
            pl.BlockSpec((tm, K), lambda i: (i, 0)),
            pl.BlockSpec((K, N), lambda i: (0, 0)),
            pl.BlockSpec((1, N), lambda i: (0, 0)),
            pl.BlockSpec((tm, N), lambda i: (i, 0)),
            pl.BlockSpec((1, N), lambda i: (0, 0)),
            pl.BlockSpec((1, N), lambda i: (0, 0)),
        ],
        out_specs=pl.BlockSpec((tm, N), lambda i: (i, 0)),
        out_shape=jax.ShapeDtypeStruct((M, N), jnp.float32),
        compiler_params=pltpu.CompilerParams(
            dimension_semantics=("parallel",),
            vmem_limit_bytes=VMEM_LIMIT_BYTES),
    )(x2d, w_bf16, b, res2d, gamma, beta)


# ------------- FFN (linear->ReLU->linear) + residual + LayerNorm ------------

def _ffn_ln_kernel(x_ref, w1_ref, b1_ref, w2_ref, b2_ref, g_ref, bb_ref, o_ref):
    x = x_ref[...]
    h = jnp.dot(x.astype(jnp.bfloat16), w1_ref[...],
                preferred_element_type=jnp.float32) + b1_ref[...]
    h = jnp.maximum(h, 0.0)                                   # ReLU
    y = jnp.dot(h.astype(jnp.bfloat16), w2_ref[...],
                preferred_element_type=jnp.float32) + b2_ref[...]
    y = y + x                                                 # residual add
    mu = jnp.mean(y, axis=-1, keepdims=True)
    var = jnp.mean((y - mu) ** 2, axis=-1, keepdims=True)
    inv = jax.lax.rsqrt(var + LN_EPS)
    o_ref[...] = (y - mu) * inv * g_ref[...] + bb_ref[...]


def ffn_add_ln(x2d, w1, b1, w2, b2, gamma, beta, *, max_tm=256):
    M, H = x2d.shape
    PF = w1.shape[1]
    tm = _pick_tile(M, max_tm, 8)   # bounds the [tm, PF] f32 intermediate
    grid = (M // tm,)
    return pl.pallas_call(
        _ffn_ln_kernel,
        grid=grid,
        in_specs=[
            pl.BlockSpec((tm, H), lambda i: (i, 0)),
            pl.BlockSpec((H, PF), lambda i: (0, 0)),
            pl.BlockSpec((1, PF), lambda i: (0, 0)),
            pl.BlockSpec((PF, H), lambda i: (0, 0)),
            pl.BlockSpec((1, H), lambda i: (0, 0)),
            pl.BlockSpec((1, H), lambda i: (0, 0)),
            pl.BlockSpec((1, H), lambda i: (0, 0)),
        ],
        out_specs=pl.BlockSpec((tm, H), lambda i: (i, 0)),
        out_shape=jax.ShapeDtypeStruct((M, H), jnp.float32),
        compiler_params=pltpu.CompilerParams(
            dimension_semantics=("parallel",),
            vmem_limit_bytes=VMEM_LIMIT_BYTES),
    )(x2d, w1, b1, w2, b2, gamma, beta)


# ------------------- multi-head attention core (per-batch grid) -------------
# q/k/v stay in lane-dense [B, L, H] layout; heads are sliced inside the
# kernel.  Mask is [B, 1, Lk] (key-pad) or [B, Lq, Lk] (causal&pad) — never
# broadcast over heads.  Attention weights are only written when requested.

def _make_mha_kernel(n_heads, dh, inv_scale, return_attn):
    def kernel(q_ref, k_ref, v_ref, m_ref, *out_refs):
        if return_attn:
            o_ref, a_ref = out_refs
        else:
            (o_ref,) = out_refs
        # Fold the 1/sqrt(dh) scale into q once (cheaper than scaling every
        # per-head [Lq, Lk] energy tile).
        q = q_ref[0] * jnp.float32(inv_scale)   # [Lq, H]  (H dense on lanes)
        k = k_ref[0]                            # [Lk, H]
        v = v_ref[0]                            # [Lk, H]
        keep = m_ref[0] > 0.0                   # [1 or Lq, Lk] — hoisted
        neg = jnp.float32(-1e10)
        outs = []
        for h in range(n_heads):                # static, unrolled per-head loop
            sl = slice(h * dh, (h + 1) * dh)
            qh = q[:, sl].astype(jnp.bfloat16)
            kh = k[:, sl].astype(jnp.bfloat16)
            vh = v[:, sl].astype(jnp.bfloat16)
            energy = jax.lax.dot_general(       # q @ k.T with f32 accumulate
                qh, kh, (((1,), (1,)), ((), ())),
                preferred_element_type=jnp.float32)
            energy = jnp.where(keep, energy, neg)      # masked_fill(mask == 0)
            emax = jnp.max(energy, axis=-1, keepdims=True)
            p = jnp.exp(energy - emax)
            denom = jnp.sum(p, axis=-1, keepdims=True)
            attn = p * pl.reciprocal(denom, approx=True)   # softmax (EUP recip)
            if return_attn:
                a_ref[0, h] = attn
            outs.append(jnp.dot(attn.astype(jnp.bfloat16), vh,
                                preferred_element_type=jnp.float32))
        o_ref[0] = jnp.concatenate(outs, axis=-1)   # single lane-dense store
    return kernel


def mha(q, k, v, mask_f, n_heads, return_attn):
    B, Lq, H = q.shape
    Lk = k.shape[1]
    Mq = mask_f.shape[1]              # 1 (key-pad mask) or Lq (causal & pad)
    dh = H // n_heads
    inv_scale = 1.0 / math.sqrt(dh)
    kern = _make_mha_kernel(n_heads, dh, inv_scale, return_attn)
    o_shape = jax.ShapeDtypeStruct((B, Lq, H), jnp.float32)
    o_spec = pl.BlockSpec((1, Lq, H), lambda i: (i, 0, 0))
    if return_attn:
        out_shape = [o_shape,
                     jax.ShapeDtypeStruct((B, n_heads, Lq, Lk), jnp.float32)]
        out_specs = [o_spec,
                     pl.BlockSpec((1, n_heads, Lq, Lk), lambda i: (i, 0, 0, 0))]
    else:
        out_shape = o_shape
        out_specs = o_spec
    res = pl.pallas_call(
        kern,
        grid=(B,),
        in_specs=[
            pl.BlockSpec((1, Lq, H), lambda i: (i, 0, 0)),
            pl.BlockSpec((1, Lk, H), lambda i: (i, 0, 0)),
            pl.BlockSpec((1, Lk, H), lambda i: (i, 0, 0)),
            pl.BlockSpec((1, Mq, Lk), lambda i: (i, 0, 0)),
        ],
        out_specs=out_specs,
        out_shape=out_shape,
        compiler_params=pltpu.CompilerParams(
            dimension_semantics=("parallel",),
            vmem_limit_bytes=VMEM_LIMIT_BYTES),
    )(q, k, v, mask_f)
    if return_attn:
        return res[0], res[1]
    return res, None


# --------------------------- Transformer modules ----------------------------

def self_attention(p, x, mask_f, n_heads, return_attn=False):
    B, L, H = x.shape
    qkv = linear(x.reshape(B * L, H), p["wqkv"], p["bqkv"])   # fused Q/K/V matmul
    q = qkv[:, 0 * H:1 * H].reshape(B, L, H)
    k = qkv[:, 1 * H:2 * H].reshape(B, L, H)
    v = qkv[:, 2 * H:3 * H].reshape(B, L, H)
    ctx, attn = mha(q, k, v, mask_f, n_heads, return_attn)
    return ctx.reshape(B * L, H), attn


def cross_attention(p, x, mem, mask_f, n_heads, return_attn=False):
    B, L, H = x.shape
    Bm, Lm, _ = mem.shape
    q = linear(x.reshape(B * L, H), p["wq"], p["bq"]).reshape(B, L, H)
    kv = linear(mem.reshape(Bm * Lm, H), p["wkv"], p["bkv"])  # fused K/V matmul
    k = kv[:, 0:H].reshape(Bm, Lm, H)
    v = kv[:, H:2 * H].reshape(Bm, Lm, H)
    ctx, attn = mha(q, k, v, mask_f, n_heads, return_attn)
    return ctx.reshape(B * L, H), attn


def encoder_layer(p, src, src_mask, n_heads):
    B, S, H = src.shape
    src2d = src.reshape(B * S, H)
    ctx2d, _ = self_attention(p["attn"], src, src_mask, n_heads, return_attn=False)
    # output projection + residual + LayerNorm fused
    src2d = linear_add_ln(ctx2d, p["attn"]["wo"], p["attn"]["bo"], src2d,
                          p["ln1_g"], p["ln1_b"])
    # FFN + residual + LayerNorm fused
    src2d = ffn_add_ln(src2d, p["ff_w1"], p["ff_b1"], p["ff_w2"], p["ff_b2"],
                       p["ln2_g"], p["ln2_b"])
    return src2d.reshape(B, S, H)


def encoder(p, src_ids, src_mask, n_heads):
    B, S = src_ids.shape
    H = p["tok_emb"].shape[1]
    scale = math.sqrt(H)
    x = jnp.take(p["tok_emb"], src_ids, axis=0) * scale + p["pos_emb"][:S][None]
    # TODO(synk): dropout is identity (eval mode)
    for lp in p["layers"]:
        x = encoder_layer(lp, x, src_mask, n_heads)
    return x


def decoder_layer(p, trg, enc_src, trg_mask, src_mask, n_heads, return_attn):
    B, T, H = trg.shape
    trg2d = trg.reshape(B * T, H)
    ctx2d, _ = self_attention(p["self_attn"], trg, trg_mask, n_heads, False)
    trg2d = linear_add_ln(ctx2d, p["self_attn"]["wo"], p["self_attn"]["bo"],
                          trg2d, p["ln1_g"], p["ln1_b"])
    trg3d = trg2d.reshape(B, T, H)
    ctx2d, attention = cross_attention(p["enc_attn"], trg3d, enc_src, src_mask,
                                       n_heads, return_attn)
    trg2d = linear_add_ln(ctx2d, p["enc_attn"]["wo"], p["enc_attn"]["bo"],
                          trg2d, p["ln2_g"], p["ln2_b"])
    trg2d = ffn_add_ln(trg2d, p["ff_w1"], p["ff_b1"], p["ff_w2"], p["ff_b2"],
                       p["ln3_g"], p["ln3_b"])
    return trg2d.reshape(B, T, H), attention


def decoder(p, trg_ids, enc_src, trg_mask, src_mask, n_heads):
    B, T = trg_ids.shape
    H = p["tok_emb"].shape[1]
    scale = math.sqrt(H)
    x = jnp.take(p["tok_emb"], trg_ids, axis=0) * scale + p["pos_emb"][:T][None]
    n_layers = len(p["layers"])
    attention = None
    for li, lp in enumerate(p["layers"]):
        # only the last layer's cross-attention weights are returned (as in torch)
        x, attn = decoder_layer(lp, x, enc_src, trg_mask, src_mask, n_heads,
                                return_attn=(li == n_layers - 1))
        if attn is not None:
            attention = attn
    out = linear(x.reshape(B * T, H), p["fc_out_w"], p["fc_out_b"])
    V = p["fc_out_w"].shape[1]
    return out.reshape(B, T, V), attention


def seq2seq_transformer_forward(params, src, trg, src_pad_idx, trg_pad_idx, n_heads):
    B, S = src.shape
    T = trg.shape[1]
    # src mask ([B,1,1,S] in torch): key-pad mask, passed compactly as [B,1,S]
    src_mask = (src != src_pad_idx).astype(jnp.float32)[:, None, :]
    # trg mask ([B,1,T,T] in torch): key-pad & causal tril, passed as [B,T,T]
    trg_keep = (trg != trg_pad_idx)
    tri = jnp.tril(jnp.ones((T, T), dtype=bool))
    trg_mask = (trg_keep[:, None, :] & tri[None, :, :]).astype(jnp.float32)

    enc_src = encoder(params["encoder"], src, src_mask, n_heads)
    output, attention = decoder(params["decoder"], trg, enc_src, trg_mask,
                                src_mask, n_heads)
    return output, attention


# ------------------------------ parameter init ------------------------------

def _normal(key, shape, std=0.02):
    return std * jax.random.normal(key, shape, dtype=jnp.float32)


def _w(key, shape, std=0.02):
    # matmul weights are stored in bf16 (MXU-native); accumulation stays f32
    return _normal(key, shape, std).astype(jnp.bfloat16)


def init_self_attn(key, hid):
    k1, k2 = jax.random.split(key)
    return {
        "wqkv": _w(k1, (hid, 3 * hid)), "bqkv": jnp.zeros((1, 3 * hid), jnp.float32),
        "wo": _w(k2, (hid, hid)), "bo": jnp.zeros((1, hid), jnp.float32),
    }


def init_cross_attn(key, hid):
    k1, k2, k3 = jax.random.split(key, 3)
    return {
        "wq": _w(k1, (hid, hid)), "bq": jnp.zeros((1, hid), jnp.float32),
        "wkv": _w(k2, (hid, 2 * hid)), "bkv": jnp.zeros((1, 2 * hid), jnp.float32),
        "wo": _w(k3, (hid, hid)), "bo": jnp.zeros((1, hid), jnp.float32),
    }


def init_enc_layer(key, hid, pf):
    ks = jax.random.split(key, 3)
    return {
        "attn": init_self_attn(ks[0], hid),
        "ln1_g": jnp.ones((1, hid), jnp.float32), "ln1_b": jnp.zeros((1, hid), jnp.float32),
        "ff_w1": _w(ks[1], (hid, pf)), "ff_b1": jnp.zeros((1, pf), jnp.float32),
        "ff_w2": _w(ks[2], (pf, hid)), "ff_b2": jnp.zeros((1, hid), jnp.float32),
        "ln2_g": jnp.ones((1, hid), jnp.float32), "ln2_b": jnp.zeros((1, hid), jnp.float32),
    }


def init_dec_layer(key, hid, pf):
    ks = jax.random.split(key, 4)
    return {
        "self_attn": init_self_attn(ks[0], hid),
        "enc_attn": init_cross_attn(ks[1], hid),
        "ln1_g": jnp.ones((1, hid), jnp.float32), "ln1_b": jnp.zeros((1, hid), jnp.float32),
        "ln2_g": jnp.ones((1, hid), jnp.float32), "ln2_b": jnp.zeros((1, hid), jnp.float32),
        "ff_w1": _w(ks[2], (hid, pf)), "ff_b1": jnp.zeros((1, pf), jnp.float32),
        "ff_w2": _w(ks[3], (pf, hid)), "ff_b2": jnp.zeros((1, hid), jnp.float32),
        "ln3_g": jnp.ones((1, hid), jnp.float32), "ln3_b": jnp.zeros((1, hid), jnp.float32),
    }


def init_params(key, input_dim, output_dim, hid, pf, n_layers, max_len):
    k_enc, k_dec = jax.random.split(key)
    ek = jax.random.split(k_enc, n_layers + 2)
    dk = jax.random.split(k_dec, n_layers + 3)
    enc = {
        "tok_emb": _normal(ek[0], (input_dim, hid), std=1.0),
        "pos_emb": _normal(ek[1], (max_len, hid), std=1.0),
        "layers": [init_enc_layer(ek[2 + i], hid, pf) for i in range(n_layers)],
    }
    dec = {
        "tok_emb": _normal(dk[0], (output_dim, hid), std=1.0),
        "pos_emb": _normal(dk[1], (max_len, hid), std=1.0),
        "layers": [init_dec_layer(dk[2 + i], hid, pf) for i in range(n_layers)],
        "fc_out_w": _w(dk[2 + n_layers], (hid, output_dim)),
        "fc_out_b": jnp.zeros((1, output_dim), jnp.float32),
    }
    return {"encoder": enc, "decoder": dec}


# ----------------------------------- main -----------------------------------

if __name__ == "__main__":
    INPUT_DIM = 16     # src vocab
    OUTPUT_DIM = 16    # trg vocab
    HID_DIM = 32
    N_HEADS = 4
    N_LAYERS = 2
    PF_DIM = 64
    MAX_LEN = 32
    SRC_PAD_IDX = 0
    TRG_PAD_IDX = 0
    B, S, T = 2, 8, 8

    key = jax.random.PRNGKey(0)
    k_params, k_src, k_trg = jax.random.split(key, 3)
    params = init_params(k_params, INPUT_DIM, OUTPUT_DIM, HID_DIM, PF_DIM,
                         N_LAYERS, MAX_LEN)

    src = jax.random.randint(k_src, (B, S), 1, INPUT_DIM, dtype=jnp.int32)
    trg = jax.random.randint(k_trg, (B, T), 1, OUTPUT_DIM, dtype=jnp.int32)
    # put a pad token at the end of each sequence to exercise the masks
    src = src.at[:, -1].set(SRC_PAD_IDX)
    trg = trg.at[:, -1].set(TRG_PAD_IDX)

    fwd = jax.jit(functools.partial(seq2seq_transformer_forward,
                                    src_pad_idx=SRC_PAD_IDX,
                                    trg_pad_idx=TRG_PAD_IDX,
                                    n_heads=N_HEADS))
    output, attention = fwd(params, src, trg)
    jax.block_until_ready((output, attention))

    assert output.shape == (B, T, OUTPUT_DIM)
    assert attention.shape == (B, N_HEADS, T, S)
    assert bool(jnp.all(jnp.isfinite(output))) and bool(jnp.all(jnp.isfinite(attention)))
    print("KERNEL_OK")
</pallas_src>

<mosaic_0001>
module attributes {stable_mosaic.version = 11 : i64} {
  func.func @kernel(%arg0: i32, %arg1: memref<1x8x32xf32, #tpu.memory_space<vmem>>, %arg2: memref<1x8x32xf32, #tpu.memory_space<vmem>>, %arg3: memref<1x8x32xf32, #tpu.memory_space<vmem>>, %arg4: memref<1x1x8xf32, #tpu.memory_space<vmem>>, %arg5: memref<1x8x32xf32, #tpu.memory_space<vmem>>) attributes {dimension_semantics = [#tpu.dimension_semantics<parallel>], iteration_bounds = array<i64: 2>, scalar_prefetch = 0 : i64, scratch_operands = 0 : i64, tpu.core_type = #tpu.core_type<tc>, window_params = [{transform_indices = @transform_0, window_bounds = array<i64: 1, 8, 32>}, {transform_indices = @transform_1, window_bounds = array<i64: 1, 8, 32>}, {transform_indices = @transform_2, window_bounds = array<i64: 1, 8, 32>}, {transform_indices = @transform_3, window_bounds = array<i64: 1, 1, 8>}, {transform_indices = @transform_4, window_bounds = array<i64: 1, 8, 32>}]} {
    %c0 = arith.constant 0 : index
    %c0_0 = arith.constant 0 : index
    %c0_1 = arith.constant 0 : index
    %0 = vector.load %arg1[%c0, %c0_0, %c0_1] : memref<1x8x32xf32, #tpu.memory_space<vmem>>, vector<1x8x32xf32>
    %1 = vector.shape_cast %0 : vector<1x8x32xf32> to vector<8x32xf32>
    %cst = arith.constant 0.353553385 : f32
    %2 = vector.broadcast %cst : f32 to vector<8x32xf32>
    %3 = arith.mulf %1, %2 : vector<8x32xf32>
    %c0_2 = arith.constant 0 : index
    %c0_3 = arith.constant 0 : index
    %c0_4 = arith.constant 0 : index
    %4 = vector.load %arg2[%c0_2, %c0_3, %c0_4] : memref<1x8x32xf32, #tpu.memory_space<vmem>>, vector<1x8x32xf32>
    %5 = vector.shape_cast %4 : vector<1x8x32xf32> to vector<8x32xf32>
    %c0_5 = arith.constant 0 : index
    %c0_6 = arith.constant 0 : index
    %c0_7 = arith.constant 0 : index
    %6 = vector.load %arg3[%c0_5, %c0_6, %c0_7] : memref<1x8x32xf32, #tpu.memory_space<vmem>>, vector<1x8x32xf32>
    %7 = vector.shape_cast %6 : vector<1x8x32xf32> to vector<8x32xf32>
    %c0_8 = arith.constant 0 : index
    %c0_9 = arith.constant 0 : index
    %c0_10 = arith.constant 0 : index
    %8 = vector.load %arg4[%c0_8, %c0_9, %c0_10] : memref<1x1x8xf32, #tpu.memory_space<vmem>>, vector<1x1x8xf32>
    %9 = vector.shape_cast %8 : vector<1x1x8xf32> to vector<1x8xf32>
    %cst_11 = arith.constant 0.000000e+00 : f32
    %10 = vector.broadcast %cst_11 : f32 to vector<1x8xf32>
    %11 = arith.cmpf ogt, %9, %10 : vector<1x8xf32>
    %12 = vector.extract_strided_slice %3 {offsets = [0, 0], sizes = [8, 8], strides = [1, 1]} : vector<8x32xf32> to vector<8x8xf32>
    %13 = arith.truncf %12 : vector<8x8xf32> to vector<8x8xbf16>
    %14 = vector.extract_strided_slice %5 {offsets = [0, 0], sizes = [8, 8], strides = [1, 1]} : vector<8x32xf32> to vector<8x8xf32>
    %15 = arith.truncf %14 : vector<8x8xf32> to vector<8x8xbf16>
    %16 = vector.extract_strided_slice %7 {offsets = [0, 0], sizes = [8, 8], strides = [1, 1]} : vector<8x32xf32> to vector<8x8xf32>
    %17 = arith.truncf %16 : vector<8x8xf32> to vector<8x8xbf16>
    %cst_12 = arith.constant dense<0.000000e+00> : vector<8x8xf32>
    %18 = tpu.matmul %13, %15, %cst_12 {dimension_numbers = #tpu.dot_dimension_numbers<[1], [1], [0], [0], [0, 0, 1, 0], [], []>} : vector<8x8xbf16>, vector<8x8xbf16>, vector<8x8xf32> -> vector<8x8xf32>
    %cst_13 = arith.constant -1.000000e+10 : f32
    %19 = vector.shape_cast %11 : vector<1x8xi1> to vector<1x8xi1>
    %20 = vector.broadcast %19 : vector<1x8xi1> to vector<8x8xi1>
    %21 = vector.broadcast %cst_13 : f32 to vector<8x8xf32>
    %22 = arith.select %20, %18, %21 : vector<8x8xi1>, vector<8x8xf32>
    %cst_14 = arith.constant dense<0xFF800000> : vector<8xf32>
    %23 = vector.multi_reduction <maximumf>, %22, %cst_14 [1] : vector<8x8xf32> to vector<8xf32>
    %24 = vector.shape_cast %23 : vector<8xf32> to vector<8x1xf32>
    %25 = vector.broadcast %24 : vector<8x1xf32> to vector<8x8xf32>
    %26 = arith.subf %22, %25 : vector<8x8xf32>
    %27 = math.exp %26 : vector<8x8xf32>
    %cst_15 = arith.constant dense<0.000000e+00> : vector<8xf32>
    %28 = vector.multi_reduction <add>, %27, %cst_15 [1] : vector<8x8xf32> to vector<8xf32>
    %29 = vector.shape_cast %28 : vector<8xf32> to vector<8x1xf32>
    %30 = tpu.reciprocal %29 {approx = true} : vector<8x1xf32> -> vector<8x1xf32>
    %31 = vector.broadcast %30 : vector<8x1xf32> to vector<8x8xf32>
    %32 = arith.mulf %27, %31 : vector<8x8xf32>
    %33 = arith.truncf %32 : vector<8x8xf32> to vector<8x8xbf16>
    %cst_16 = arith.constant dense<0.000000e+00> : vector<8x8xf32>
    %34 = tpu.matmul %33, %17, %cst_16 {dimension_numbers = #tpu.dot_dimension_numbers<[1], [0], [0], [1], [0, 0, 1, 1], [], []>} : vector<8x8xbf16>, vector<8x8xbf16>, vector<8x8xf32> -> vector<8x8xf32>
    %35 = vector.extract_strided_slice %3 {offsets = [0, 8], sizes = [8, 8], strides = [1, 1]} : vector<8x32xf32> to vector<8x8xf32>
    %36 = arith.truncf %35 : vector<8x8xf32> to vector<8x8xbf16>
    %37 = vector.extract_strided_slice %5 {offsets = [0, 8], sizes = [8, 8], strides = [1, 1]} : vector<8x32xf32> to vector<8x8xf32>
    %38 = arith.truncf %37 : vector<8x8xf32> to vector<8x8xbf16>
    %39 = vector.extract_strided_slice %7 {offsets = [0, 8], sizes = [8, 8], strides = [1, 1]} : vector<8x32xf32> to vector<8x8xf32>
    %40 = arith.truncf %39 : vector<8x8xf32> to vector<8x8xbf16>
    %cst_17 = arith.constant dense<0.000000e+00> : vector<8x8xf32>
    %41 = tpu.matmul %36, %38, %cst_17 {dimension_numbers = #tpu.dot_dimension_numbers<[1], [1], [0], [0], [0, 0, 1, 0], [], []>} : vector<8x8xbf16>, vector<8x8xbf16>, vector<8x8xf32> -> vector<8x8xf32>
    %cst_18 = arith.constant -1.000000e+10 : f32
    %42 = vector.shape_cast %11 : vector<1x8xi1> to vector<1x8xi1>
    %43 = vector.broadcast %42 : vector<1x8xi1> to vector<8x8xi1>
    %44 = vector.broadcast %cst_18 : f32 to vector<8x8xf32>
    %45 = arith.select %43, %41, %44 : vector<8x8xi1>, vector<8x8xf32>
    %cst_19 = arith.constant dense<0xFF800000> : vector<8xf32>
    %46 = vector.multi_reduction <maximumf>, %45, %cst_19 [1] : vector<8x8xf32> to vector<8xf32>
    %47 = vector.shape_cast %46 : vector<8xf32> to vector<8x1xf32>
    %48 = vector.broadcast %47 : vector<8x1xf32> to vector<8x8xf32>
    %49 = arith.subf %45, %48 : vector<8x8xf32>
    %50 = math.exp %49 : vector<8x8xf32>
    %cst_20 = arith.constant dense<0.000000e+00> : vector<8xf32>
    %51 = vector.multi_reduction <add>, %50, %cst_20 [1] : vector<8x8xf32> to vector<8xf32>
    %52 = vector.shape_cast %51 : vector<8xf32> to vector<8x1xf32>
    %53 = tpu.reciprocal %52 {approx = true} : vector<8x1xf32> -> vector<8x1xf32>
    %54 = vector.broadcast %53 : vector<8x1xf32> to vector<8x8xf32>
    %55 = arith.mulf %50, %54 : vector<8x8xf32>
    %56 = arith.truncf %55 : vector<8x8xf32> to vector<8x8xbf16>
    %cst_21 = arith.constant dense<0.000000e+00> : vector<8x8xf32>
    %57 = tpu.matmul %56, %40, %cst_21 {dimension_numbers = #tpu.dot_dimension_numbers<[1], [0], [0], [1], [0, 0, 1, 1], [], []>} : vector<8x8xbf16>, vector<8x8xbf16>, vector<8x8xf32> -> vector<8x8xf32>
    %58 = vector.extract_strided_slice %3 {offsets = [0, 16], sizes = [8, 8], strides = [1, 1]} : vector<8x32xf32> to vector<8x8xf32>
    %59 = arith.truncf %58 : vector<8x8xf32> to vector<8x8xbf16>
    %60 = vector.extract_strided_slice %5 {offsets = [0, 16], sizes = [8, 8], strides = [1, 1]} : vector<8x32xf32> to vector<8x8xf32>
    %61 = arith.truncf %60 : vector<8x8xf32> to vector<8x8xbf16>
    %62 = vector.extract_strided_slice %7 {offsets = [0, 16], sizes = [8, 8], strides = [1, 1]} : vector<8x32xf32> to vector<8x8xf32>
    %63 = arith.truncf %62 : vector<8x8xf32> to vector<8x8xbf16>
    %cst_22 = arith.constant dense<0.000000e+00> : vector<8x8xf32>
    %64 = tpu.matmul %59, %61, %cst_22 {dimension_numbers = #tpu.dot_dimension_numbers<[1], [1], [0], [0], [0, 0, 1, 0], [], []>} : vector<8x8xbf16>, vector<8x8xbf16>, vector<8x8xf32> -> vector<8x8xf32>
    %cst_23 = arith.constant -1.000000e+10 : f32
    %65 = vector.shape_cast %11 : vector<1x8xi1> to vector<1x8xi1>
    %66 = vector.broadcast %65 : vector<1x8xi1> to vector<8x8xi1>
    %67 = vector.broadcast %cst_23 : f32 to vector<8x8xf32>
    %68 = arith.select %66, %64, %67 : vector<8x8xi1>, vector<8x8xf32>
    %cst_24 = arith.constant dense<0xFF800000> : vector<8xf32>
    %69 = vector.multi_reduction <maximumf>, %68, %cst_24 [1] : vector<8x8xf32> to vector<8xf32>
    %70 = vector.shape_cast %69 : vector<8xf32> to vector<8x1xf32>
    %71 = vector.broadcast %70 : vector<8x1xf32> to vector<8x8xf32>
    %72 = arith.subf %68, %71 : vector<8x8xf32>
    %73 = math.exp %72 : vector<8x8xf32>
    %cst_25 = arith.constant dense<0.000000e+00> : vector<8xf32>
    %74 = vector.multi_reduction <add>, %73, %cst_25 [1] : vector<8x8xf32> to vector<8xf32>
    %75 = vector.shape_cast %74 : vector<8xf32> to vector<8x1xf32>
    %76 = tpu.reciprocal %75 {approx = true} : vector<8x1xf32> -> vector<8x1xf32>
    %77 = vector.broadcast %76 : vector<8x1xf32> to vector<8x8xf32>
    %78 = arith.mulf %73, %77 : vector<8x8xf32>
    %79 = arith.truncf %78 : vector<8x8xf32> to vector<8x8xbf16>
    %cst_26 = arith.constant dense<0.000000e+00> : vector<8x8xf32>
    %80 = tpu.matmul %79, %63, %cst_26 {dimension_numbers = #tpu.dot_dimension_numbers<[1], [0], [0], [1], [0, 0, 1, 1], [], []>} : vector<8x8xbf16>, vector<8x8xbf16>, vector<8x8xf32> -> vector<8x8xf32>
    %81 = vector.extract_strided_slice %3 {offsets = [0, 24], sizes = [8, 8], strides = [1, 1]} : vector<8x32xf32> to vector<8x8xf32>
    %82 = arith.truncf %81 : vector<8x8xf32> to vector<8x8xbf16>
    %83 = vector.extract_strided_slice %5 {offsets = [0, 24], sizes = [8, 8], strides = [1, 1]} : vector<8x32xf32> to vector<8x8xf32>
    %84 = arith.truncf %83 : vector<8x8xf32> to vector<8x8xbf16>
    %85 = vector.extract_strided_slice %7 {offsets = [0, 24], sizes = [8, 8], strides = [1, 1]} : vector<8x32xf32> to vector<8x8xf32>
    %86 = arith.truncf %85 : vector<8x8xf32> to vector<8x8xbf16>
    %cst_27 = arith.constant dense<0.000000e+00> : vector<8x8xf32>
    %87 = tpu.matmul %82, %84, %cst_27 {dimension_numbers = #tpu.dot_dimension_numbers<[1], [1], [0], [0], [0, 0, 1, 0], [], []>} : vector<8x8xbf16>, vector<8x8xbf16>, vector<8x8xf32> -> vector<8x8xf32>
    %cst_28 = arith.constant -1.000000e+10 : f32
    %88 = vector.shape_cast %11 : vector<1x8xi1> to vector<1x8xi1>
    %89 = vector.broadcast %88 : vector<1x8xi1> to vector<8x8xi1>
    %90 = vector.broadcast %cst_28 : f32 to vector<8x8xf32>
    %91 = arith.select %89, %87, %90 : vector<8x8xi1>, vector<8x8xf32>
    %cst_29 = arith.constant dense<0xFF800000> : vector<8xf32>
    %92 = vector.multi_reduction <maximumf>, %91, %cst_29 [1] : vector<8x8xf32> to vector<8xf32>
    %93 = vector.shape_cast %92 : vector<8xf32> to vector<8x1xf32>
    %94 = vector.broadcast %93 : vector<8x1xf32> to vector<8x8xf32>
    %95 = arith.subf %91, %94 : vector<8x8xf32>
    %96 = math.exp %95 : vector<8x8xf32>
    %cst_30 = arith.constant dense<0.000000e+00> : vector<8xf32>
    %97 = vector.multi_reduction <add>, %96, %cst_30 [1] : vector<8x8xf32> to vector<8xf32>
    %98 = vector.shape_cast %97 : vector<8xf32> to vector<8x1xf32>
    %99 = tpu.reciprocal %98 {approx = true} : vector<8x1xf32> -> vector<8x1xf32>
    %100 = vector.broadcast %99 : vector<8x1xf32> to vector<8x8xf32>
    %101 = arith.mulf %96, %100 : vector<8x8xf32>
    %102 = arith.truncf %101 : vector<8x8xf32> to vector<8x8xbf16>
    %cst_31 = arith.constant dense<0.000000e+00> : vector<8x8xf32>
    %103 = tpu.matmul %102, %86, %cst_31 {dimension_numbers = #tpu.dot_dimension_numbers<[1], [0], [0], [1], [0, 0, 1, 1], [], []>} : vector<8x8xbf16>, vector<8x8xbf16>, vector<8x8xf32> -> vector<8x8xf32>
    %104 = tpu.concatenate %34, %57, %80, %103 in 1 : vector<8x8xf32>, vector<8x8xf32>, vector<8x8xf32>, vector<8x8xf32> -> vector<8x32xf32>
    %c0_32 = arith.constant 0 : index
    %c0_33 = arith.constant 0 : index
    %c0_34 = arith.constant 0 : index
    %105 = vector.load %arg5[%c0_32, %c0_33, %c0_34] : memref<1x8x32xf32, #tpu.memory_space<vmem>>, vector<1x8x32xf32>
    %106 = vector.shape_cast %105 : vector<1x8x32xf32> to vector<8x32xf32>
    %107 = vector.shape_cast %104 : vector<8x32xf32> to vector<1x8x32xf32>
    tpu.vector_store %arg5[%c0_32, %c0_33, %c0_34], %107 {strides = array<i32>} : memref<1x8x32xf32, #tpu.memory_space<vmem>>, vector<1x8x32xf32>,
    return
  }
  func.func @transform_0(%arg0: i32) -> (i32, i32, i32) {
    %c0_i32 = arith.constant 0 : i32
    %c0_i32_0 = arith.constant 0 : i32
    %c0_i32_1 = arith.constant 0 : i32
    return %arg0, %c0_i32, %c0_i32_0 : i32, i32, i32
  }
  func.func @transform_1(%arg0: i32) -> (i32, i32, i32) {
    %c0_i32 = arith.constant 0 : i32
    %c0_i32_0 = arith.constant 0 : i32
    %c0_i32_1 = arith.constant 0 : i32
    return %arg0, %c0_i32, %c0_i32_0 : i32, i32, i32
  }
  func.func @transform_2(%arg0: i32) -> (i32, i32, i32) {
    %c0_i32 = arith.constant 0 : i32
    %c0_i32_0 = arith.constant 0 : i32
    %c0_i32_1 = arith.constant 0 : i32
    return %arg0, %c0_i32, %c0_i32_0 : i32, i32, i32
  }
  func.func @transform_3(%arg0: i32) -> (i32, i32, i32) {
    %c0_i32 = arith.constant 0 : i32
    %c0_i32_0 = arith.constant 0 : i32
    %c0_i32_1 = arith.constant 0 : i32
    return %arg0, %c0_i32, %c0_i32_0 : i32, i32, i32
  }
  func.func @transform_4(%arg0: i32) -> (i32, i32, i32) {
    %c0_i32 = arith.constant 0 : i32
    %c0_i32_0 = arith.constant 0 : i32
    %c0_i32_1 = arith.constant 0 : i32
    return %arg0, %c0_i32, %c0_i32_0 : i32, i32, i32
  }
}

module attributes {stable_mosaic.version = 11 : i64} {
  func.func @_linear_single_k_kernel(%arg0: i32, %arg1: i32, %arg2: memref<16x32xf32, #tpu.memory_space<vmem>>, %arg3: memref<32x96xbf16, #tpu.memory_space<vmem>>, %arg4: memref<1x96xf32, #tpu.memory_space<vmem>>, %arg5: memref<16x96xf32, #tpu.memory_space<vmem>>) attributes {dimension_semantics = [#tpu.dimension_semantics<parallel>, #tpu.dimension_semantics<parallel>], iteration_bounds = array<i64: 1, 1>, scalar_prefetch = 0 : i64, scratch_operands = 0 : i64, tpu.core_type = #tpu.core_type<tc>, window_params = [{transform_indices = @transform_0, window_bounds = array<i64: 16, 32>}, {transform_indices = @transform_1, window_bounds = array<i64: 32, 96>}, {transform_indices = @transform_2, window_bounds = array<i64: 1, 96>}, {transform_indices = @transform_3, window_bounds = array<i64: 16, 96>}]} {
    %c0 = arith.constant 0 : index
    %c0_0 = arith.constant 0 : index
    %0 = vector.load %arg2[%c0, %c0_0] : memref<16x32xf32, #tpu.memory_space<vmem>>, vector<16x32xf32>
    %1 = arith.truncf %0 : vector<16x32xf32> to vector<16x32xbf16>
    %c0_1 = arith.constant 0 : index
    %c0_2 = arith.constant 0 : index
    %2 = vector.load %arg3[%c0_1, %c0_2] : memref<32x96xbf16, #tpu.memory_space<vmem>>, vector<32x96xbf16>
    %cst = arith.constant dense<0.000000e+00> : vector<16x96xf32>
    %3 = tpu.matmul %1, %2, %cst {dimension_numbers = #tpu.dot_dimension_numbers<[1], [0], [0], [1], [0, 0, 1, 1], [], []>} : vector<16x32xbf16>, vector<32x96xbf16>, vector<16x96xf32> -> vector<16x96xf32>
    %c0_3 = arith.constant 0 : index
    %c0_4 = arith.constant 0 : index
    %4 = vector.load %arg4[%c0_3, %c0_4] : memref<1x96xf32, #tpu.memory_space<vmem>>, vector<1x96xf32>
    %5 = vector.broadcast %4 : vector<1x96xf32> to vector<16x96xf32>
    %6 = arith.addf %3, %5 : vector<16x96xf32>
    %c0_5 = arith.constant 0 : index
    %c0_6 = arith.constant 0 : index
    %7 = vector.load %arg5[%c0_5, %c0_6] : memref<16x96xf32, #tpu.memory_space<vmem>>, vector<16x96xf32>
    tpu.vector_store %arg5[%c0_5, %c0_6], %6 {strides = array<i32>} : memref<16x96xf32, #tpu.memory_space<vmem>>, vector<16x96xf32>,
    return
  }
  func.func @transform_0(%arg0: i32, %arg1: i32) -> (i32, i32) {
    %c0_i32 = arith.constant 0 : i32
    %c0_i32_0 = arith.constant 0 : i32
    return %arg0, %c0_i32 : i32, i32
  }
  func.func @transform_1(%arg0: i32, %arg1: i32) -> (i32, i32) {
    %c0_i32 = arith.constant 0 : i32
    %c0_i32_0 = arith.constant 0 : i32
    return %c0_i32, %arg1 : i32, i32
  }
  func.func @transform_2(%arg0: i32, %arg1: i32) -> (i32, i32) {
    %c0_i32 = arith.constant 0 : i32
    %c0_i32_0 = arith.constant 0 : i32
    return %c0_i32, %arg1 : i32, i32
  }
  func.func @transform_3(%arg0: i32, %arg1: i32) -> (i32, i32) {
    %c0_i32 = arith.constant 0 : i32
    return %arg0, %arg1 : i32, i32
  }
}

module attributes {stable_mosaic.version = 11 : i64} {
  func.func @_linear_ln_kernel(%arg0: i32, %arg1: memref<16x32xf32, #tpu.memory_space<vmem>>, %arg2: memref<32x32xbf16, #tpu.memory_space<vmem>>, %arg3: memref<1x32xf32, #tpu.memory_space<vmem>>, %arg4: memref<16x32xf32, #tpu.memory_space<vmem>>, %arg5: memref<1x32xf32, #tpu.memory_space<vmem>>, %arg6: memref<1x32xf32, #tpu.memory_space<vmem>>, %arg7: memref<16x32xf32, #tpu.memory_space<vmem>>) attributes {dimension_semantics = [#tpu.dimension_semantics<parallel>], iteration_bounds = array<i64: 1>, scalar_prefetch = 0 : i64, scratch_operands = 0 : i64, tpu.core_type = #tpu.core_type<tc>, window_params = [{transform_indices = @transform_0, window_bounds = array<i64: 16, 32>}, {pipeline_mode = #tpu.pipeline_mode<synchronous>, transform_indices = @transform_1, window_bounds = array<i64: 32, 32>}, {pipeline_mode = #tpu.pipeline_mode<synchronous>, transform_indices = @transform_2, window_bounds = array<i64: 1, 32>}, {transform_indices = @transform_3, window_bounds = array<i64: 16, 32>}, {pipeline_mode = #tpu.pipeline_mode<synchronous>, transform_indices = @transform_4, window_bounds = array<i64: 1, 32>}, {pipeline_mode = #tpu.pipeline_mode<synchronous>, transform_indices = @transform_5, window_bounds = array<i64: 1, 32>}, {transform_indices = @transform_6, window_bounds = array<i64: 16, 32>}]} {
    %c0 = arith.constant 0 : index
    %c0_0 = arith.constant 0 : index
    %0 = vector.load %arg1[%c0, %c0_0] : memref<16x32xf32, #tpu.memory_space<vmem>>, vector<16x32xf32>
    %1 = arith.truncf %0 : vector<16x32xf32> to vector<16x32xbf16>
    %c0_1 = arith.constant 0 : index
    %c0_2 = arith.constant 0 : index
    %2 = vector.load %arg2[%c0_1, %c0_2] : memref<32x32xbf16, #tpu.memory_space<vmem>>, vector<32x32xbf16>
    %cst = arith.constant dense<0.000000e+00> : vector<16x32xf32>
    %3 = tpu.matmul %1, %2, %cst {dimension_numbers = #tpu.dot_dimension_numbers<[1], [0], [0], [1], [0, 0, 1, 1], [], []>} : vector<16x32xbf16>, vector<32x32xbf16>, vector<16x32xf32> -> vector<16x32xf32>
    %c0_3 = arith.constant 0 : index
    %c0_4 = arith.constant 0 : index
    %4 = vector.load %arg3[%c0_3, %c0_4] : memref<1x32xf32, #tpu.memory_space<vmem>>, vector<1x32xf32>
    %5 = vector.broadcast %4 : vector<1x32xf32> to vector<16x32xf32>
    %6 = arith.addf %3, %5 : vector<16x32xf32>
    %c0_5 = arith.constant 0 : index
    %c0_6 = arith.constant 0 : index
    %7 = vector.load %arg4[%c0_5, %c0_6] : memref<16x32xf32, #tpu.memory_space<vmem>>, vector<16x32xf32>
    %8 = arith.addf %6, %7 : vector<16x32xf32>
    %cst_7 = arith.constant dense<0.000000e+00> : vector<16xf32>
    %9 = vector.multi_reduction <add>, %8, %cst_7 [1] : vector<16x32xf32> to vector<16xf32>
    %10 = vector.shape_cast %9 : vector<16xf32> to vector<16x1xf32>
    %cst_8 = arith.constant 3.200000e+01 : f32
    %11 = vector.broadcast %cst_8 : f32 to vector<16x1xf32>
    %12 = arith.divf %10, %11 : vector<16x1xf32>
    %13 = vector.broadcast %12 : vector<16x1xf32> to vector<16x32xf32>
    %14 = arith.subf %8, %13 : vector<16x32xf32>
    %15 = arith.mulf %14, %14 : vector<16x32xf32>
    %cst_9 = arith.constant dense<0.000000e+00> : vector<16xf32>
    %16 = vector.multi_reduction <add>, %15, %cst_9 [1] : vector<16x32xf32> to vector<16xf32>
    %17 = vector.shape_cast %16 : vector<16xf32> to vector<16x1xf32>
    %cst_10 = arith.constant 3.200000e+01 : f32
    %18 = vector.broadcast %cst_10 : f32 to vector<16x1xf32>
    %19 = arith.divf %17, %18 : vector<16x1xf32>
    %cst_11 = arith.constant 9.99999974E-6 : f32
    %20 = vector.broadcast %cst_11 : f32 to vector<16x1xf32>
    %21 = arith.addf %19, %20 : vector<16x1xf32>
    %22 = math.rsqrt %21 : vector<16x1xf32>
    %23 = vector.broadcast %12 : vector<16x1xf32> to vector<16x32xf32>
    %24 = arith.subf %8, %23 : vector<16x32xf32>
    %25 = vector.broadcast %22 : vector<16x1xf32> to vector<16x32xf32>
    %26 = arith.mulf %24, %25 : vector<16x32xf32>
    %c0_12 = arith.constant 0 : index
    %c0_13 = arith.constant 0 : index
    %27 = vector.load %arg5[%c0_12, %c0_13] : memref<1x32xf32, #tpu.memory_space<vmem>>, vector<1x32xf32>
    %28 = vector.broadcast %27 : vector<1x32xf32> to vector<16x32xf32>
    %29 = arith.mulf %26, %28 : vector<16x32xf32>
    %c0_14 = arith.constant 0 : index
    %c0_15 = arith.constant 0 : index
    %30 = vector.load %arg6[%c0_14, %c0_15] : memref<1x32xf32, #tpu.memory_space<vmem>>, vector<1x32xf32>
    %31 = vector.broadcast %30 : vector<1x32xf32> to vector<16x32xf32>
    %32 = arith.addf %29, %31 : vector<16x32xf32>
    %c0_16 = arith.constant 0 : index
    %c0_17 = arith.constant 0 : index
    %33 = vector.load %arg7[%c0_16, %c0_17] : memref<16x32xf32, #tpu.memory_space<vmem>>, vector<16x32xf32>
    tpu.vector_store %arg7[%c0_16, %c0_17], %32 {strides = array<i32>} : memref<16x32xf32, #tpu.memory_space<vmem>>, vector<16x32xf32>,
    return
  }
  func.func @transform_0(%arg0: i32) -> (i32, i32) {
    %c0_i32 = arith.constant 0 : i32
    %c0_i32_0 = arith.constant 0 : i32
    return %arg0, %c0_i32 : i32, i32
  }
  func.func @transform_1(%arg0: i32) -> (i32, i32) {
    %c0_i32 = arith.constant 0 : i32
    %c0_i32_0 = arith.constant 0 : i32
    %c0_i32_1 = arith.constant 0 : i32
    return %c0_i32, %c0_i32_0 : i32, i32
  }
  func.func @transform_2(%arg0: i32) -> (i32, i32) {
    %c0_i32 = arith.constant 0 : i32
    %c0_i32_0 = arith.constant 0 : i32
    %c0_i32_1 = arith.constant 0 : i32
    return %c0_i32, %c0_i32_0 : i32, i32
  }
  func.func @transform_3(%arg0: i32) -> (i32, i32) {
    %c0_i32 = arith.constant 0 : i32
    %c0_i32_0 = arith.constant 0 : i32
    return %arg0, %c0_i32 : i32, i32
  }
  func.func @transform_4(%arg0: i32) -> (i32, i32) {
    %c0_i32 = arith.constant 0 : i32
    %c0_i32_0 = arith.constant 0 : i32
    %c0_i32_1 = arith.constant 0 : i32
    return %c0_i32, %c0_i32_0 : i32, i32
  }
  func.func @transform_5(%arg0: i32) -> (i32, i32) {
    %c0_i32 = arith.constant 0 : i32
    %c0_i32_0 = arith.constant 0 : i32
    %c0_i32_1 = arith.constant 0 : i32
    return %c0_i32, %c0_i32_0 : i32, i32
  }
  func.func @transform_6(%arg0: i32) -> (i32, i32) {
    %c0_i32 = arith.constant 0 : i32
    %c0_i32_0 = arith.constant 0 : i32
    return %arg0, %c0_i32 : i32, i32
  }
}

module attributes {stable_mosaic.version = 11 : i64} {
  func.func @_ffn_ln_kernel(%arg0: i32, %arg1: memref<16x32xf32, #tpu.memory_space<vmem>>, %arg2: memref<32x64xbf16, #tpu.memory_space<vmem>>, %arg3: memref<1x64xf32, #tpu.memory_space<vmem>>, %arg4: memref<64x32xbf16, #tpu.memory_space<vmem>>, %arg5: memref<1x32xf32, #tpu.memory_space<vmem>>, %arg6: memref<1x32xf32, #tpu.memory_space<vmem>>, %arg7: memref<1x32xf32, #tpu.memory_space<vmem>>, %arg8: memref<16x32xf32, #tpu.memory_space<vmem>>) attributes {dimension_semantics = [#tpu.dimension_semantics<parallel>], iteration_bounds = array<i64: 1>, scalar_prefetch = 0 : i64, scratch_operands = 0 : i64, tpu.core_type = #tpu.core_type<tc>, window_params = [{transform_indices = @transform_0, window_bounds = array<i64: 16, 32>}, {pipeline_mode = #tpu.pipeline_mode<synchronous>, transform_indices = @transform_1, window_bounds = array<i64: 32, 64>}, {pipeline_mode = #tpu.pipeline_mode<synchronous>, transform_indices = @transform_2, window_bounds = array<i64: 1, 64>}, {pipeline_mode = #tpu.pipeline_mode<synchronous>, transform_indices = @transform_3, window_bounds = array<i64: 64, 32>}, {pipeline_mode = #tpu.pipeline_mode<synchronous>, transform_indices = @transform_4, window_bounds = array<i64: 1, 32>}, {pipeline_mode = #tpu.pipeline_mode<synchronous>, transform_indices = @transform_5, window_bounds = array<i64: 1, 32>}, {pipeline_mode = #tpu.pipeline_mode<synchronous>, transform_indices = @transform_6, window_bounds = array<i64: 1, 32>}, {transform_indices = @transform_7, window_bounds = array<i64: 16, 32>}]} {
    %c0 = arith.constant 0 : index
    %c0_0 = arith.constant 0 : index
    %0 = vector.load %arg1[%c0, %c0_0] : memref<16x32xf32, #tpu.memory_space<vmem>>, vector<16x32xf32>
    %1 = arith.truncf %0 : vector<16x32xf32> to vector<16x32xbf16>
    %c0_1 = arith.constant 0 : index
    %c0_2 = arith.constant 0 : index
    %2 = vector.load %arg2[%c0_1, %c0_2] : memref<32x64xbf16, #tpu.memory_space<vmem>>, vector<32x64xbf16>
    %cst = arith.constant dense<0.000000e+00> : vector<16x64xf32>
    %3 = tpu.matmul %1, %2, %cst {dimension_numbers = #tpu.dot_dimension_numbers<[1], [0], [0], [1], [0, 0, 1, 1], [], []>} : vector<16x32xbf16>, vector<32x64xbf16>, vector<16x64xf32> -> vector<16x64xf32>
    %c0_3 = arith.constant 0 : index
    %c0_4 = arith.constant 0 : index
    %4 = vector.load %arg3[%c0_3, %c0_4] : memref<1x64xf32, #tpu.memory_space<vmem>>, vector<1x64xf32>
    %5 = vector.broadcast %4 : vector<1x64xf32> to vector<16x64xf32>
    %6 = arith.addf %3, %5 : vector<16x64xf32>
    %cst_5 = arith.constant 0.000000e+00 : f32
    %7 = vector.broadcast %cst_5 : f32 to vector<16x64xf32>
    %8 = arith.maximumf %6, %7 : vector<16x64xf32>
    %9 = arith.truncf %8 : vector<16x64xf32> to vector<16x64xbf16>
    %c0_6 = arith.constant 0 : index
    %c0_7 = arith.constant 0 : index
    %10 = vector.load %arg4[%c0_6, %c0_7] : memref<64x32xbf16, #tpu.memory_space<vmem>>, vector<64x32xbf16>
    %cst_8 = arith.constant dense<0.000000e+00> : vector<16x32xf32>
    %11 = tpu.matmul %9, %10, %cst_8 {dimension_numbers = #tpu.dot_dimension_numbers<[1], [0], [0], [1], [0, 0, 1, 1], [], []>} : vector<16x64xbf16>, vector<64x32xbf16>, vector<16x32xf32> -> vector<16x32xf32>
    %c0_9 = arith.constant 0 : index
    %c0_10 = arith.constant 0 : index
    %12 = vector.load %arg5[%c0_9, %c0_10] : memref<1x32xf32, #tpu.memory_space<vmem>>, vector<1x32xf32>
    %13 = vector.broadcast %12 : vector<1x32xf32> to vector<16x32xf32>
    %14 = arith.addf %11, %13 : vector<16x32xf32>
    %15 = arith.addf %14, %0 : vector<16x32xf32>
    %cst_11 = arith.constant dense<0.000000e+00> : vector<16xf32>
    %16 = vector.multi_reduction <add>, %15, %cst_11 [1] : vector<16x32xf32> to vector<16xf32>
    %17 = vector.shape_cast %16 : vector<16xf32> to vector<16x1xf32>
    %cst_12 = arith.constant 3.200000e+01 : f32
    %18 = vector.broadcast %cst_12 : f32 to vector<16x1xf32>
    %19 = arith.divf %17, %18 : vector<16x1xf32>
    %20 = vector.broadcast %19 : vector<16x1xf32> to vector<16x32xf32>
    %21 = arith.subf %15, %20 : vector<16x32xf32>
    %22 = arith.mulf %21, %21 : vector<16x32xf32>
    %cst_13 = arith.constant dense<0.000000e+00> : vector<16xf32>
    %23 = vector.multi_reduction <add>, %22, %cst_13 [1] : vector<16x32xf32> to vector<16xf32>
    %24 = vector.shape_cast %23 : vector<16xf32> to vector<16x1xf32>
    %cst_14 = arith.constant 3.200000e+01 : f32
    %25 = vector.broadcast %cst_14 : f32 to vector<16x1xf32>
    %26 = arith.divf %24, %25 : vector<16x1xf32>
    %cst_15 = arith.constant 9.99999974E-6 : f32
    %27 = vector.broadcast %cst_15 : f32 to vector<16x1xf32>
    %28 = arith.addf %26, %27 : vector<16x1xf32>
    %29 = math.rsqrt %28 : vector<16x1xf32>
    %30 = vector.broadcast %19 : vector<16x1xf32> to vector<16x32xf32>
    %31 = arith.subf %15, %30 : vector<16x32xf32>
    %32 = vector.broadcast %29 : vector<16x1xf32> to vector<16x32xf32>
    %33 = arith.mulf %31, %32 : vector<16x32xf32>
    %c0_16 = arith.constant 0 : index
    %c0_17 = arith.constant 0 : index
    %34 = vector.load %arg6[%c0_16, %c0_17] : memref<1x32xf32, #tpu.memory_space<vmem>>, vector<1x32xf32>
    %35 = vector.broadcast %34 : vector<1x32xf32> to vector<16x32xf32>
    %36 = arith.mulf %33, %35 : vector<16x32xf32>
    %c0_18 = arith.constant 0 : index
    %c0_19 = arith.constant 0 : index
    %37 = vector.load %arg7[%c0_18, %c0_19] : memref<1x32xf32, #tpu.memory_space<vmem>>, vector<1x32xf32>
    %38 = vector.broadcast %37 : vector<1x32xf32> to vector<16x32xf32>
    %39 = arith.addf %36, %38 : vector<16x32xf32>
    %c0_20 = arith.constant 0 : index
    %c0_21 = arith.constant 0 : index
    %40 = vector.load %arg8[%c0_20, %c0_21] : memref<16x32xf32, #tpu.memory_space<vmem>>, vector<16x32xf32>
    tpu.vector_store %arg8[%c0_20, %c0_21], %39 {strides = array<i32>} : memref<16x32xf32, #tpu.memory_space<vmem>>, vector<16x32xf32>,
    return
  }
  func.func @transform_0(%arg0: i32) -> (i32, i32) {
    %c0_i32 = arith.constant 0 : i32
    %c0_i32_0 = arith.constant 0 : i32
    return %arg0, %c0_i32 : i32, i32
  }
  func.func @transform_1(%arg0: i32) -> (i32, i32) {
    %c0_i32 = arith.constant 0 : i32
    %c0_i32_0 = arith.constant 0 : i32
    %c0_i32_1 = arith.constant 0 : i32
    return %c0_i32, %c0_i32_0 : i32, i32
  }
  func.func @transform_2(%arg0: i32) -> (i32, i32) {
    %c0_i32 = arith.constant 0 : i32
    %c0_i32_0 = arith.constant 0 : i32
    %c0_i32_1 = arith.constant 0 : i32
    return %c0_i32, %c0_i32_0 : i32, i32
  }
  func.func @transform_3(%arg0: i32) -> (i32, i32) {
    %c0_i32 = arith.constant 0 : i32
    %c0_i32_0 = arith.constant 0 : i32
    %c0_i32_1 = arith.constant 0 : i32
    return %c0_i32, %c0_i32_0 : i32, i32
  }
  func.func @transform_4(%arg0: i32) -> (i32, i32) {
    %c0_i32 = arith.constant 0 : i32
    %c0_i32_0 = arith.constant 0 : i32
    %c0_i32_1 = arith.constant 0 : i32
    return %c0_i32, %c0_i32_0 : i32, i32
  }
  func.func @transform_5(%arg0: i32) -> (i32, i32) {
    %c0_i32 = arith.constant 0 : i32
    %c0_i32_0 = arith.constant 0 : i32
    %c0_i32_1 = arith.constant 0 : i32
    return %c0_i32, %c0_i32_0 : i32, i32
  }
  func.func @transform_6(%arg0: i32) -> (i32, i32) {
    %c0_i32 = arith.constant 0 : i32
    %c0_i32_0 = arith.constant 0 : i32
    %c0_i32_1 = arith.constant 0 : i32
    return %c0_i32, %c0_i32_0 : i32, i32
  }
  func.func @transform_7(%arg0: i32) -> (i32, i32) {
    %c0_i32 = arith.constant 0 : i32
    %c0_i32_0 = arith.constant 0 : i32
    return %arg0, %c0_i32 : i32, i32
  }
}

module attributes {stable_mosaic.version = 11 : i64} {
  func.func @_linear_single_k_kernel(%arg0: i32, %arg1: i32, %arg2: memref<16x32xf32, #tpu.memory_space<vmem>>, %arg3: memref<32x64xbf16, #tpu.memory_space<vmem>>, %arg4: memref<1x64xf32, #tpu.memory_space<vmem>>, %arg5: memref<16x64xf32, #tpu.memory_space<vmem>>) attributes {dimension_semantics = [#tpu.dimension_semantics<parallel>, #tpu.dimension_semantics<parallel>], iteration_bounds = array<i64: 1, 1>, scalar_prefetch = 0 : i64, scratch_operands = 0 : i64, tpu.core_type = #tpu.core_type<tc>, window_params = [{transform_indices = @transform_0, window_bounds = array<i64: 16, 32>}, {transform_indices = @transform_1, window_bounds = array<i64: 32, 64>}, {transform_indices = @transform_2, window_bounds = array<i64: 1, 64>}, {transform_indices = @transform_3, window_bounds = array<i64: 16, 64>}]} {
    %c0 = arith.constant 0 : index
    %c0_0 = arith.constant 0 : index
    %0 = vector.load %arg2[%c0, %c0_0] : memref<16x32xf32, #tpu.memory_space<vmem>>, vector<16x32xf32>
    %1 = arith.truncf %0 : vector<16x32xf32> to vector<16x32xbf16>
    %c0_1 = arith.constant 0 : index
    %c0_2 = arith.constant 0 : index
    %2 = vector.load %arg3[%c0_1, %c0_2] : memref<32x64xbf16, #tpu.memory_space<vmem>>, vector<32x64xbf16>
    %cst = arith.constant dense<0.000000e+00> : vector<16x64xf32>
    %3 = tpu.matmul %1, %2, %cst {dimension_numbers = #tpu.dot_dimension_numbers<[1], [0], [0], [1], [0, 0, 1, 1], [], []>} : vector<16x32xbf16>, vector<32x64xbf16>, vector<16x64xf32> -> vector<16x64xf32>
    %c0_3 = arith.constant 0 : index
    %c0_4 = arith.constant 0 : index
    %4 = vector.load %arg4[%c0_3, %c0_4] : memref<1x64xf32, #tpu.memory_space<vmem>>, vector<1x64xf32>
    %5 = vector.broadcast %4 : vector<1x64xf32> to vector<16x64xf32>
    %6 = arith.addf %3, %5 : vector<16x64xf32>
    %c0_5 = arith.constant 0 : index
    %c0_6 = arith.constant 0 : index
    %7 = vector.load %arg5[%c0_5, %c0_6] : memref<16x64xf32, #tpu.memory_space<vmem>>, vector<16x64xf32>
    tpu.vector_store %arg5[%c0_5, %c0_6], %6 {strides = array<i32>} : memref<16x64xf32, #tpu.memory_space<vmem>>, vector<16x64xf32>,
    return
  }
  func.func @transform_0(%arg0: i32, %arg1: i32) -> (i32, i32) {
    %c0_i32 = arith.constant 0 : i32
    %c0_i32_0 = arith.constant 0 : i32
    return %arg0, %c0_i32 : i32, i32
  }
  func.func @transform_1(%arg0: i32, %arg1: i32) -> (i32, i32) {
    %c0_i32 = arith.constant 0 : i32
    %c0_i32_0 = arith.constant 0 : i32
    return %c0_i32, %arg1 : i32, i32
  }
  func.func @transform_2(%arg0: i32, %arg1: i32) -> (i32, i32) {
    %c0_i32 = arith.constant 0 : i32
    %c0_i32_0 = arith.constant 0 : i32
    return %c0_i32, %arg1 : i32, i32
  }
  func.func @transform_3(%arg0: i32, %arg1: i32) -> (i32, i32) {
    %c0_i32 = arith.constant 0 : i32
    return %arg0, %arg1 : i32, i32
  }
}

module attributes {stable_mosaic.version = 11 : i64} {
  func.func @kernel(%arg0: i32, %arg1: memref<1x8x32xf32, #tpu.memory_space<vmem>>, %arg2: memref<1x8x32xf32, #tpu.memory_space<vmem>>, %arg3: memref<1x8x32xf32, #tpu.memory_space<vmem>>, %arg4: memref<1x8x8xf32, #tpu.memory_space<vmem>>, %arg5: memref<1x8x32xf32, #tpu.memory_space<vmem>>) attributes {dimension_semantics = [#tpu.dimension_semantics<parallel>], iteration_bounds = array<i64: 2>, scalar_prefetch = 0 : i64, scratch_operands = 0 : i64, tpu.core_type = #tpu.core_type<tc>, window_params = [{transform_indices = @transform_0, window_bounds = array<i64: 1, 8, 32>}, {transform_indices = @transform_1, window_bounds = array<i64: 1, 8, 32>}, {transform_indices = @transform_2, window_bounds = array<i64: 1, 8, 32>}, {transform_indices = @transform_3, window_bounds = array<i64: 1, 8, 8>}, {transform_indices = @transform_4, window_bounds = array<i64: 1, 8, 32>}]} {
    %c0 = arith.constant 0 : index
    %c0_0 = arith.constant 0 : index
    %c0_1 = arith.constant 0 : index
    %0 = vector.load %arg1[%c0, %c0_0, %c0_1] : memref<1x8x32xf32, #tpu.memory_space<vmem>>, vector<1x8x32xf32>
    %1 = vector.shape_cast %0 : vector<1x8x32xf32> to vector<8x32xf32>
    %cst = arith.constant 0.353553385 : f32
    %2 = vector.broadcast %cst : f32 to vector<8x32xf32>
    %3 = arith.mulf %1, %2 : vector<8x32xf32>
    %c0_2 = arith.constant 0 : index
    %c0_3 = arith.constant 0 : index
    %c0_4 = arith.constant 0 : index
    %4 = vector.load %arg2[%c0_2, %c0_3, %c0_4] : memref<1x8x32xf32, #tpu.memory_space<vmem>>, vector<1x8x32xf32>
    %5 = vector.shape_cast %4 : vector<1x8x32xf32> to vector<8x32xf32>
    %c0_5 = arith.constant 0 : index
    %c0_6 = arith.constant 0 : index
    %c0_7 = arith.constant 0 : index
    %6 = vector.load %arg3[%c0_5, %c0_6, %c0_7] : memref<1x8x32xf32, #tpu.memory_space<vmem>>, vector<1x8x32xf32>
    %7 = vector.shape_cast %6 : vector<1x8x32xf32> to vector<8x32xf32>
    %c0_8 = arith.constant 0 : index
    %c0_9 = arith.constant 0 : index
    %c0_10 = arith.constant 0 : index
    %8 = vector.load %arg4[%c0_8, %c0_9, %c0_10] : memref<1x8x8xf32, #tpu.memory_space<vmem>>, vector<1x8x8xf32>
    %9 = vector.shape_cast %8 : vector<1x8x8xf32> to vector<8x8xf32>
    %cst_11 = arith.constant 0.000000e+00 : f32
    %10 = vector.broadcast %cst_11 : f32 to vector<8x8xf32>
    %11 = arith.cmpf ogt, %9, %10 : vector<8x8xf32>
    %12 = vector.extract_strided_slice %3 {offsets = [0, 0], sizes = [8, 8], strides = [1, 1]} : vector<8x32xf32> to vector<8x8xf32>
    %13 = arith.truncf %12 : vector<8x8xf32> to vector<8x8xbf16>
    %14 = vector.extract_strided_slice %5 {offsets = [0, 0], sizes = [8, 8], strides = [1, 1]} : vector<8x32xf32> to vector<8x8xf32>
    %15 = arith.truncf %14 : vector<8x8xf32> to vector<8x8xbf16>
    %16 = vector.extract_strided_slice %7 {offsets = [0, 0], sizes = [8, 8], strides = [1, 1]} : vector<8x32xf32> to vector<8x8xf32>
    %17 = arith.truncf %16 : vector<8x8xf32> to vector<8x8xbf16>
    %cst_12 = arith.constant dense<0.000000e+00> : vector<8x8xf32>
    %18 = tpu.matmul %13, %15, %cst_12 {dimension_numbers = #tpu.dot_dimension_numbers<[1], [1], [0], [0], [0, 0, 1, 0], [], []>} : vector<8x8xbf16>, vector<8x8xbf16>, vector<8x8xf32> -> vector<8x8xf32>
    %cst_13 = arith.constant -1.000000e+10 : f32
    %19 = vector.broadcast %cst_13 : f32 to vector<8x8xf32>
    %20 = arith.select %11, %18, %19 : vector<8x8xi1>, vector<8x8xf32>
    %cst_14 = arith.constant dense<0xFF800000> : vector<8xf32>
    %21 = vector.multi_reduction <maximumf>, %20, %cst_14 [1] : vector<8x8xf32> to vector<8xf32>
    %22 = vector.shape_cast %21 : vector<8xf32> to vector<8x1xf32>
    %23 = vector.broadcast %22 : vector<8x1xf32> to vector<8x8xf32>
    %24 = arith.subf %20, %23 : vector<8x8xf32>
    %25 = math.exp %24 : vector<8x8xf32>
    %cst_15 = arith.constant dense<0.000000e+00> : vector<8xf32>
    %26 = vector.multi_reduction <add>, %25, %cst_15 [1] : vector<8x8xf32> to vector<8xf32>
    %27 = vector.shape_cast %26 : vector<8xf32> to vector<8x1xf32>
    %28 = tpu.reciprocal %27 {approx = true} : vector<8x1xf32> -> vector<8x1xf32>
    %29 = vector.broadcast %28 : vector<8x1xf32> to vector<8x8xf32>
    %30 = arith.mulf %25, %29 : vector<8x8xf32>
    %31 = arith.truncf %30 : vector<8x8xf32> to vector<8x8xbf16>
    %cst_16 = arith.constant dense<0.000000e+00> : vector<8x8xf32>
    %32 = tpu.matmul %31, %17, %cst_16 {dimension_numbers = #tpu.dot_dimension_numbers<[1], [0], [0], [1], [0, 0, 1, 1], [], []>} : vector<8x8xbf16>, vector<8x8xbf16>, vector<8x8xf32> -> vector<8x8xf32>
    %33 = vector.extract_strided_slice %3 {offsets = [0, 8], sizes = [8, 8], strides = [1, 1]} : vector<8x32xf32> to vector<8x8xf32>
    %34 = arith.truncf %33 : vector<8x8xf32> to vector<8x8xbf16>
    %35 = vector.extract_strided_slice %5 {offsets = [0, 8], sizes = [8, 8], strides = [1, 1]} : vector<8x32xf32> to vector<8x8xf32>
    %36 = arith.truncf %35 : vector<8x8xf32> to vector<8x8xbf16>
    %37 = vector.extract_strided_slice %7 {offsets = [0, 8], sizes = [8, 8], strides = [1, 1]} : vector<8x32xf32> to vector<8x8xf32>
    %38 = arith.truncf %37 : vector<8x8xf32> to vector<8x8xbf16>
    %cst_17 = arith.constant dense<0.000000e+00> : vector<8x8xf32>
    %39 = tpu.matmul %34, %36, %cst_17 {dimension_numbers = #tpu.dot_dimension_numbers<[1], [1], [0], [0], [0, 0, 1, 0], [], []>} : vector<8x8xbf16>, vector<8x8xbf16>, vector<8x8xf32> -> vector<8x8xf32>
    %cst_18 = arith.constant -1.000000e+10 : f32
    %40 = vector.broadcast %cst_18 : f32 to vector<8x8xf32>
    %41 = arith.select %11, %39, %40 : vector<8x8xi1>, vector<8x8xf32>
    %cst_19 = arith.constant dense<0xFF800000> : vector<8xf32>
    %42 = vector.multi_reduction <maximumf>, %41, %cst_19 [1] : vector<8x8xf32> to vector<8xf32>
    %43 = vector.shape_cast %42 : vector<8xf32> to vector<8x1xf32>
    %44 = vector.broadcast %43 : vector<8x1xf32> to vector<8x8xf32>
    %45 = arith.subf %41, %44 : vector<8x8xf32>
    %46 = math.exp %45 : vector<8x8xf32>
    %cst_20 = arith.constant dense<0.000000e+00> : vector<8xf32>
    %47 = vector.multi_reduction <add>, %46, %cst_20 [1] : vector<8x8xf32> to vector<8xf32>
    %48 = vector.shape_cast %47 : vector<8xf32> to vector<8x1xf32>
    %49 = tpu.reciprocal %48 {approx = true} : vector<8x1xf32> -> vector<8x1xf32>
    %50 = vector.broadcast %49 : vector<8x1xf32> to vector<8x8xf32>
    %51 = arith.mulf %46, %50 : vector<8x8xf32>
    %52 = arith.truncf %51 : vector<8x8xf32> to vector<8x8xbf16>
    %cst_21 = arith.constant dense<0.000000e+00> : vector<8x8xf32>
    %53 = tpu.matmul %52, %38, %cst_21 {dimension_numbers = #tpu.dot_dimension_numbers<[1], [0], [0], [1], [0, 0, 1, 1], [], []>} : vector<8x8xbf16>, vector<8x8xbf16>, vector<8x8xf32> -> vector<8x8xf32>
    %54 = vector.extract_strided_slice %3 {offsets = [0, 16], sizes = [8, 8], strides = [1, 1]} : vector<8x32xf32> to vector<8x8xf32>
    %55 = arith.truncf %54 : vector<8x8xf32> to vector<8x8xbf16>
    %56 = vector.extract_strided_slice %5 {offsets = [0, 16], sizes = [8, 8], strides = [1, 1]} : vector<8x32xf32> to vector<8x8xf32>
    %57 = arith.truncf %56 : vector<8x8xf32> to vector<8x8xbf16>
    %58 = vector.extract_strided_slice %7 {offsets = [0, 16], sizes = [8, 8], strides = [1, 1]} : vector<8x32xf32> to vector<8x8xf32>
    %59 = arith.truncf %58 : vector<8x8xf32> to vector<8x8xbf16>
    %cst_22 = arith.constant dense<0.000000e+00> : vector<8x8xf32>
    %60 = tpu.matmul %55, %57, %cst_22 {dimension_numbers = #tpu.dot_dimension_numbers<[1], [1], [0], [0], [0, 0, 1, 0], [], []>} : vector<8x8xbf16>, vector<8x8xbf16>, vector<8x8xf32> -> vector<8x8xf32>
    %cst_23 = arith.constant -1.000000e+10 : f32
    %61 = vector.broadcast %cst_23 : f32 to vector<8x8xf32>
    %62 = arith.select %11, %60, %61 : vector<8x8xi1>, vector<8x8xf32>
    %cst_24 = arith.constant dense<0xFF800000> : vector<8xf32>
    %63 = vector.multi_reduction <maximumf>, %62, %cst_24 [1] : vector<8x8xf32> to vector<8xf32>
    %64 = vector.shape_cast %63 : vector<8xf32> to vector<8x1xf32>
    %65 = vector.broadcast %64 : vector<8x1xf32> to vector<8x8xf32>
    %66 = arith.subf %62, %65 : vector<8x8xf32>
    %67 = math.exp %66 : vector<8x8xf32>
    %cst_25 = arith.constant dense<0.000000e+00> : vector<8xf32>
    %68 = vector.multi_reduction <add>, %67, %cst_25 [1] : vector<8x8xf32> to vector<8xf32>
    %69 = vector.shape_cast %68 : vector<8xf32> to vector<8x1xf32>
    %70 = tpu.reciprocal %69 {approx = true} : vector<8x1xf32> -> vector<8x1xf32>
    %71 = vector.broadcast %70 : vector<8x1xf32> to vector<8x8xf32>
    %72 = arith.mulf %67, %71 : vector<8x8xf32>
    %73 = arith.truncf %72 : vector<8x8xf32> to vector<8x8xbf16>
    %cst_26 = arith.constant dense<0.000000e+00> : vector<8x8xf32>
    %74 = tpu.matmul %73, %59, %cst_26 {dimension_numbers = #tpu.dot_dimension_numbers<[1], [0], [0], [1], [0, 0, 1, 1], [], []>} : vector<8x8xbf16>, vector<8x8xbf16>, vector<8x8xf32> -> vector<8x8xf32>
    %75 = vector.extract_strided_slice %3 {offsets = [0, 24], sizes = [8, 8], strides = [1, 1]} : vector<8x32xf32> to vector<8x8xf32>
    %76 = arith.truncf %75 : vector<8x8xf32> to vector<8x8xbf16>
    %77 = vector.extract_strided_slice %5 {offsets = [0, 24], sizes = [8, 8], strides = [1, 1]} : vector<8x32xf32> to vector<8x8xf32>
    %78 = arith.truncf %77 : vector<8x8xf32> to vector<8x8xbf16>
    %79 = vector.extract_strided_slice %7 {offsets = [0, 24], sizes = [8, 8], strides = [1, 1]} : vector<8x32xf32> to vector<8x8xf32>
    %80 = arith.truncf %79 : vector<8x8xf32> to vector<8x8xbf16>
    %cst_27 = arith.constant dense<0.000000e+00> : vector<8x8xf32>
    %81 = tpu.matmul %76, %78, %cst_27 {dimension_numbers = #tpu.dot_dimension_numbers<[1], [1], [0], [0], [0, 0, 1, 0], [], []>} : vector<8x8xbf16>, vector<8x8xbf16>, vector<8x8xf32> -> vector<8x8xf32>
    %cst_28 = arith.constant -1.000000e+10 : f32
    %82 = vector.broadcast %cst_28 : f32 to vector<8x8xf32>
    %83 = arith.select %11, %81, %82 : vector<8x8xi1>, vector<8x8xf32>
    %cst_29 = arith.constant dense<0xFF800000> : vector<8xf32>
    %84 = vector.multi_reduction <maximumf>, %83, %cst_29 [1] : vector<8x8xf32> to vector<8xf32>
    %85 = vector.shape_cast %84 : vector<8xf32> to vector<8x1xf32>
    %86 = vector.broadcast %85 : vector<8x1xf32> to vector<8x8xf32>
    %87 = arith.subf %83, %86 : vector<8x8xf32>
    %88 = math.exp %87 : vector<8x8xf32>
    %cst_30 = arith.constant dense<0.000000e+00> : vector<8xf32>
    %89 = vector.multi_reduction <add>, %88, %cst_30 [1] : vector<8x8xf32> to vector<8xf32>
    %90 = vector.shape_cast %89 : vector<8xf32> to vector<8x1xf32>
    %91 = tpu.reciprocal %90 {approx = true} : vector<8x1xf32> -> vector<8x1xf32>
    %92 = vector.broadcast %91 : vector<8x1xf32> to vector<8x8xf32>
    %93 = arith.mulf %88, %92 : vector<8x8xf32>
    %94 = arith.truncf %93 : vector<8x8xf32> to vector<8x8xbf16>
    %cst_31 = arith.constant dense<0.000000e+00> : vector<8x8xf32>
    %95 = tpu.matmul %94, %80, %cst_31 {dimension_numbers = #tpu.dot_dimension_numbers<[1], [0], [0], [1], [0, 0, 1, 1], [], []>} : vector<8x8xbf16>, vector<8x8xbf16>, vector<8x8xf32> -> vector<8x8xf32>
    %96 = tpu.concatenate %32, %53, %74, %95 in 1 : vector<8x8xf32>, vector<8x8xf32>, vector<8x8xf32>, vector<8x8xf32> -> vector<8x32xf32>
    %c0_32 = arith.constant 0 : index
    %c0_33 = arith.constant 0 : index
    %c0_34 = arith.constant 0 : index
    %97 = vector.load %arg5[%c0_32, %c0_33, %c0_34] : memref<1x8x32xf32, #tpu.memory_space<vmem>>, vector<1x8x32xf32>
    %98 = vector.shape_cast %97 : vector<1x8x32xf32> to vector<8x32xf32>
    %99 = vector.shape_cast %96 : vector<8x32xf32> to vector<1x8x32xf32>
    tpu.vector_store %arg5[%c0_32, %c0_33, %c0_34], %99 {strides = array<i32>} : memref<1x8x32xf32, #tpu.memory_space<vmem>>, vector<1x8x32xf32>,
    return
  }
  func.func @transform_0(%arg0: i32) -> (i32, i32, i32) {
    %c0_i32 = arith.constant 0 : i32
    %c0_i32_0 = arith.constant 0 : i32
    %c0_i32_1 = arith.constant 0 : i32
    return %arg0, %c0_i32, %c0_i32_0 : i32, i32, i32
  }
  func.func @transform_1(%arg0: i32) -> (i32, i32, i32) {
    %c0_i32 = arith.constant 0 : i32
    %c0_i32_0 = arith.constant 0 : i32
    %c0_i32_1 = arith.constant 0 : i32
    return %arg0, %c0_i32, %c0_i32_0 : i32, i32, i32
  }
  func.func @transform_2(%arg0: i32) -> (i32, i32, i32) {
    %c0_i32 = arith.constant 0 : i32
    %c0_i32_0 = arith.constant 0 : i32
    %c0_i32_1 = arith.constant 0 : i32
    return %arg0, %c0_i32, %c0_i32_0 : i32, i32, i32
  }
  func.func @transform_3(%arg0: i32) -> (i32, i32, i32) {
    %c0_i32 = arith.constant 0 : i32
    %c0_i32_0 = arith.constant 0 : i32
    %c0_i32_1 = arith.constant 0 : i32
    return %arg0, %c0_i32, %c0_i32_0 : i32, i32, i32
  }
  func.func @transform_4(%arg0: i32) -> (i32, i32, i32) {
    %c0_i32 = arith.constant 0 : i32
    %c0_i32_0 = arith.constant 0 : i32
    %c0_i32_1 = arith.constant 0 : i32
    return %arg0, %c0_i32, %c0_i32_0 : i32, i32, i32
  }
}

module attributes {stable_mosaic.version = 11 : i64} {
  func.func @_linear_single_k_kernel(%arg0: i32, %arg1: i32, %arg2: memref<16x32xf32, #tpu.memory_space<vmem>>, %arg3: memref<32x32xbf16, #tpu.memory_space<vmem>>, %arg4: memref<1x32xf32, #tpu.memory_space<vmem>>, %arg5: memref<16x32xf32, #tpu.memory_space<vmem>>) attributes {dimension_semantics = [#tpu.dimension_semantics<parallel>, #tpu.dimension_semantics<parallel>], iteration_bounds = array<i64: 1, 1>, scalar_prefetch = 0 : i64, scratch_operands = 0 : i64, tpu.core_type = #tpu.core_type<tc>, window_params = [{transform_indices = @transform_0, window_bounds = array<i64: 16, 32>}, {transform_indices = @transform_1, window_bounds = array<i64: 32, 32>}, {transform_indices = @transform_2, window_bounds = array<i64: 1, 32>}, {transform_indices = @transform_3, window_bounds = array<i64: 16, 32>}]} {
    %c0 = arith.constant 0 : index
    %c0_0 = arith.constant 0 : index
    %0 = vector.load %arg2[%c0, %c0_0] : memref<16x32xf32, #tpu.memory_space<vmem>>, vector<16x32xf32>
    %1 = arith.truncf %0 : vector<16x32xf32> to vector<16x32xbf16>
    %c0_1 = arith.constant 0 : index
    %c0_2 = arith.constant 0 : index
    %2 = vector.load %arg3[%c0_1, %c0_2] : memref<32x32xbf16, #tpu.memory_space<vmem>>, vector<32x32xbf16>
    %cst = arith.constant dense<0.000000e+00> : vector<16x32xf32>
    %3 = tpu.matmul %1, %2, %cst {dimension_numbers = #tpu.dot_dimension_numbers<[1], [0], [0], [1], [0, 0, 1, 1], [], []>} : vector<16x32xbf16>, vector<32x32xbf16>, vector<16x32xf32> -> vector<16x32xf32>
    %c0_3 = arith.constant 0 : index
    %c0_4 = arith.constant 0 : index
    %4 = vector.load %arg4[%c0_3, %c0_4] : memref<1x32xf32, #tpu.memory_space<vmem>>, vector<1x32xf32>
    %5 = vector.broadcast %4 : vector<1x32xf32> to vector<16x32xf32>
    %6 = arith.addf %3, %5 : vector<16x32xf32>
    %c0_5 = arith.constant 0 : index
    %c0_6 = arith.constant 0 : index
    %7 = vector.load %arg5[%c0_5, %c0_6] : memref<16x32xf32, #tpu.memory_space<vmem>>, vector<16x32xf32>
    tpu.vector_store %arg5[%c0_5, %c0_6], %6 {strides = array<i32>} : memref<16x32xf32, #tpu.memory_space<vmem>>, vector<16x32xf32>,
    return
  }
  func.func @transform_0(%arg0: i32, %arg1: i32) -> (i32, i32) {
    %c0_i32 = arith.constant 0 : i32
    %c0_i32_0 = arith.constant 0 : i32
    return %arg0, %c0_i32 : i32, i32
  }
  func.func @transform_1(%arg0: i32, %arg1: i32) -> (i32, i32) {
    %c0_i32 = arith.constant 0 : i32
    %c0_i32_0 = arith.constant 0 : i32
    return %c0_i32, %arg1 : i32, i32
  }
  func.func @transform_2(%arg0: i32, %arg1: i32) -> (i32, i32) {
    %c0_i32 = arith.constant 0 : i32
    %c0_i32_0 = arith.constant 0 : i32
    return %c0_i32, %arg1 : i32, i32
  }
  func.func @transform_3(%arg0: i32, %arg1: i32) -> (i32, i32) {
    %c0_i32 = arith.constant 0 : i32
    return %arg0, %arg1 : i32, i32
  }
}

module attributes {stable_mosaic.version = 11 : i64} {
  func.func @_linear_single_k_kernel(%arg0: i32, %arg1: i32, %arg2: memref<16x32xf32, #tpu.memory_space<vmem>>, %arg3: memref<32x16xbf16, #tpu.memory_space<vmem>>, %arg4: memref<1x16xf32, #tpu.memory_space<vmem>>, %arg5: memref<16x16xf32, #tpu.memory_space<vmem>>) attributes {dimension_semantics = [#tpu.dimension_semantics<parallel>, #tpu.dimension_semantics<parallel>], iteration_bounds = array<i64: 1, 1>, scalar_prefetch = 0 : i64, scratch_operands = 0 : i64, tpu.core_type = #tpu.core_type<tc>, window_params = [{transform_indices = @transform_0, window_bounds = array<i64: 16, 32>}, {transform_indices = @transform_1, window_bounds = array<i64: 32, 16>}, {transform_indices = @transform_2, window_bounds = array<i64: 1, 16>}, {transform_indices = @transform_3, window_bounds = array<i64: 16, 16>}]} {
    %c0 = arith.constant 0 : index
    %c0_0 = arith.constant 0 : index
    %0 = vector.load %arg2[%c0, %c0_0] : memref<16x32xf32, #tpu.memory_space<vmem>>, vector<16x32xf32>
    %1 = arith.truncf %0 : vector<16x32xf32> to vector<16x32xbf16>
    %c0_1 = arith.constant 0 : index
    %c0_2 = arith.constant 0 : index
    %2 = vector.load %arg3[%c0_1, %c0_2] : memref<32x16xbf16, #tpu.memory_space<vmem>>, vector<32x16xbf16>
    %cst = arith.constant dense<0.000000e+00> : vector<16x16xf32>
    %3 = tpu.matmul %1, %2, %cst {dimension_numbers = #tpu.dot_dimension_numbers<[1], [0], [0], [1], [0, 0, 1, 1], [], []>} : vector<16x32xbf16>, vector<32x16xbf16>, vector<16x16xf32> -> vector<16x16xf32>
    %c0_3 = arith.constant 0 : index
    %c0_4 = arith.constant 0 : index
    %4 = vector.load %arg4[%c0_3, %c0_4] : memref<1x16xf32, #tpu.memory_space<vmem>>, vector<1x16xf32>
    %5 = vector.broadcast %4 : vector<1x16xf32> to vector<16x16xf32>
    %6 = arith.addf %3, %5 : vector<16x16xf32>
    %c0_5 = arith.constant 0 : index
    %c0_6 = arith.constant 0 : index
    %7 = vector.load %arg5[%c0_5, %c0_6] : memref<16x16xf32, #tpu.memory_space<vmem>>, vector<16x16xf32>
    tpu.vector_store %arg5[%c0_5, %c0_6], %6 {strides = array<i32>} : memref<16x16xf32, #tpu.memory_space<vmem>>, vector<16x16xf32>,
    return
  }
  func.func @transform_0(%arg0: i32, %arg1: i32) -> (i32, i32) {
    %c0_i32 = arith.constant 0 : i32
    %c0_i32_0 = arith.constant 0 : i32
    return %arg0, %c0_i32 : i32, i32
  }
  func.func @transform_1(%arg0: i32, %arg1: i32) -> (i32, i32) {
    %c0_i32 = arith.constant 0 : i32
    %c0_i32_0 = arith.constant 0 : i32
    return %c0_i32, %arg1 : i32, i32
  }
  func.func @transform_2(%arg0: i32, %arg1: i32) -> (i32, i32) {
    %c0_i32 = arith.constant 0 : i32
    %c0_i32_0 = arith.constant 0 : i32
    return %c0_i32, %arg1 : i32, i32
  }
  func.func @transform_3(%arg0: i32, %arg1: i32) -> (i32, i32) {
    %c0_i32 = arith.constant 0 : i32
    return %arg0, %arg1 : i32, i32
  }
}

module attributes {stable_mosaic.version = 11 : i64} {
  func.func @kernel(%arg0: i32, %arg1: memref<1x8x32xf32, #tpu.memory_space<vmem>>, %arg2: memref<1x8x32xf32, #tpu.memory_space<vmem>>, %arg3: memref<1x8x32xf32, #tpu.memory_space<vmem>>, %arg4: memref<1x1x8xf32, #tpu.memory_space<vmem>>, %arg5: memref<1x8x32xf32, #tpu.memory_space<vmem>>, %arg6: memref<1x4x8x8xf32, #tpu.memory_space<vmem>>) attributes {dimension_semantics = [#tpu.dimension_semantics<parallel>], iteration_bounds = array<i64: 2>, scalar_prefetch = 0 : i64, scratch_operands = 0 : i64, tpu.core_type = #tpu.core_type<tc>, window_params = [{transform_indices = @transform_0, window_bounds = array<i64: 1, 8, 32>}, {transform_indices = @transform_1, window_bounds = array<i64: 1, 8, 32>}, {transform_indices = @transform_2, window_bounds = array<i64: 1, 8, 32>}, {transform_indices = @transform_3, window_bounds = array<i64: 1, 1, 8>}, {transform_indices = @transform_4, window_bounds = array<i64: 1, 8, 32>}, {transform_indices = @transform_5, window_bounds = array<i64: 1, 4, 8, 8>}]} {
    %c0 = arith.constant 0 : index
    %c0_0 = arith.constant 0 : index
    %c0_1 = arith.constant 0 : index
    %0 = vector.load %arg1[%c0, %c0_0, %c0_1] : memref<1x8x32xf32, #tpu.memory_space<vmem>>, vector<1x8x32xf32>
    %1 = vector.shape_cast %0 : vector<1x8x32xf32> to vector<8x32xf32>
    %cst = arith.constant 0.353553385 : f32
    %2 = vector.broadcast %cst : f32 to vector<8x32xf32>
    %3 = arith.mulf %1, %2 : vector<8x32xf32>
    %c0_2 = arith.constant 0 : index
    %c0_3 = arith.constant 0 : index
    %c0_4 = arith.constant 0 : index
    %4 = vector.load %arg2[%c0_2, %c0_3, %c0_4] : memref<1x8x32xf32, #tpu.memory_space<vmem>>, vector<1x8x32xf32>
    %5 = vector.shape_cast %4 : vector<1x8x32xf32> to vector<8x32xf32>
    %c0_5 = arith.constant 0 : index
    %c0_6 = arith.constant 0 : index
    %c0_7 = arith.constant 0 : index
    %6 = vector.load %arg3[%c0_5, %c0_6, %c0_7] : memref<1x8x32xf32, #tpu.memory_space<vmem>>, vector<1x8x32xf32>
    %7 = vector.shape_cast %6 : vector<1x8x32xf32> to vector<8x32xf32>
    %c0_8 = arith.constant 0 : index
    %c0_9 = arith.constant 0 : index
    %c0_10 = arith.constant 0 : index
    %8 = vector.load %arg4[%c0_8, %c0_9, %c0_10] : memref<1x1x8xf32, #tpu.memory_space<vmem>>, vector<1x1x8xf32>
    %9 = vector.shape_cast %8 : vector<1x1x8xf32> to vector<1x8xf32>
    %cst_11 = arith.constant 0.000000e+00 : f32
    %10 = vector.broadcast %cst_11 : f32 to vector<1x8xf32>
    %11 = arith.cmpf ogt, %9, %10 : vector<1x8xf32>
    %12 = vector.extract_strided_slice %3 {offsets = [0, 0], sizes = [8, 8], strides = [1, 1]} : vector<8x32xf32> to vector<8x8xf32>
    %13 = arith.truncf %12 : vector<8x8xf32> to vector<8x8xbf16>
    %14 = vector.extract_strided_slice %5 {offsets = [0, 0], sizes = [8, 8], strides = [1, 1]} : vector<8x32xf32> to vector<8x8xf32>
    %15 = arith.truncf %14 : vector<8x8xf32> to vector<8x8xbf16>
    %16 = vector.extract_strided_slice %7 {offsets = [0, 0], sizes = [8, 8], strides = [1, 1]} : vector<8x32xf32> to vector<8x8xf32>
    %17 = arith.truncf %16 : vector<8x8xf32> to vector<8x8xbf16>
    %cst_12 = arith.constant dense<0.000000e+00> : vector<8x8xf32>
    %18 = tpu.matmul %13, %15, %cst_12 {dimension_numbers = #tpu.dot_dimension_numbers<[1], [1], [0], [0], [0, 0, 1, 0], [], []>} : vector<8x8xbf16>, vector<8x8xbf16>, vector<8x8xf32> -> vector<8x8xf32>
    %cst_13 = arith.constant -1.000000e+10 : f32
    %19 = vector.shape_cast %11 : vector<1x8xi1> to vector<1x8xi1>
    %20 = vector.broadcast %19 : vector<1x8xi1> to vector<8x8xi1>
    %21 = vector.broadcast %cst_13 : f32 to vector<8x8xf32>
    %22 = arith.select %20, %18, %21 : vector<8x8xi1>, vector<8x8xf32>
    %cst_14 = arith.constant dense<0xFF800000> : vector<8xf32>
    %23 = vector.multi_reduction <maximumf>, %22, %cst_14 [1] : vector<8x8xf32> to vector<8xf32>
    %24 = vector.shape_cast %23 : vector<8xf32> to vector<8x1xf32>
    %25 = vector.broadcast %24 : vector<8x1xf32> to vector<8x8xf32>
    %26 = arith.subf %22, %25 : vector<8x8xf32>
    %27 = math.exp %26 : vector<8x8xf32>
    %cst_15 = arith.constant dense<0.000000e+00> : vector<8xf32>
    %28 = vector.multi_reduction <add>, %27, %cst_15 [1] : vector<8x8xf32> to vector<8xf32>
    %29 = vector.shape_cast %28 : vector<8xf32> to vector<8x1xf32>
    %30 = tpu.reciprocal %29 {approx = true} : vector<8x1xf32> -> vector<8x1xf32>
    %31 = vector.broadcast %30 : vector<8x1xf32> to vector<8x8xf32>
    %32 = arith.mulf %27, %31 : vector<8x8xf32>
    %c0_16 = arith.constant 0 : index
    %c0_17 = arith.constant 0 : index
    %c0_18 = arith.constant 0 : index
    %c0_19 = arith.constant 0 : index
    %33 = vector.load %arg6[%c0_16, %c0_17, %c0_18, %c0_19] : memref<1x4x8x8xf32, #tpu.memory_space<vmem>>, vector<1x1x8x8xf32>
    %34 = vector.shape_cast %33 : vector<1x1x8x8xf32> to vector<8x8xf32>
    %35 = vector.shape_cast %32 : vector<8x8xf32> to vector<1x1x8x8xf32>
    tpu.vector_store %arg6[%c0_16, %c0_17, %c0_18, %c0_19], %35 {strides = array<i32>} : memref<1x4x8x8xf32, #tpu.memory_space<vmem>>, vector<1x1x8x8xf32>,
    %36 = arith.truncf %32 : vector<8x8xf32> to vector<8x8xbf16>
    %cst_20 = arith.constant dense<0.000000e+00> : vector<8x8xf32>
    %37 = tpu.matmul %36, %17, %cst_20 {dimension_numbers = #tpu.dot_dimension_numbers<[1], [0], [0], [1], [0, 0, 1, 1], [], []>} : vector<8x8xbf16>, vector<8x8xbf16>, vector<8x8xf32> -> vector<8x8xf32>
    %38 = vector.extract_strided_slice %3 {offsets = [0, 8], sizes = [8, 8], strides = [1, 1]} : vector<8x32xf32> to vector<8x8xf32>
    %39 = arith.truncf %38 : vector<8x8xf32> to vector<8x8xbf16>
    %40 = vector.extract_strided_slice %5 {offsets = [0, 8], sizes = [8, 8], strides = [1, 1]} : vector<8x32xf32> to vector<8x8xf32>
    %41 = arith.truncf %40 : vector<8x8xf32> to vector<8x8xbf16>
    %42 = vector.extract_strided_slice %7 {offsets = [0, 8], sizes = [8, 8], strides = [1, 1]} : vector<8x32xf32> to vector<8x8xf32>
    %43 = arith.truncf %42 : vector<8x8xf32> to vector<8x8xbf16>
    %cst_21 = arith.constant dense<0.000000e+00> : vector<8x8xf32>
    %44 = tpu.matmul %39, %41, %cst_21 {dimension_numbers = #tpu.dot_dimension_numbers<[1], [1], [0], [0], [0, 0, 1, 0], [], []>} : vector<8x8xbf16>, vector<8x8xbf16>, vector<8x8xf32> -> vector<8x8xf32>
    %cst_22 = arith.constant -1.000000e+10 : f32
    %45 = vector.shape_cast %11 : vector<1x8xi1> to vector<1x8xi1>
    %46 = vector.broadcast %45 : vector<1x8xi1> to vector<8x8xi1>
    %47 = vector.broadcast %cst_22 : f32 to vector<8x8xf32>
    %48 = arith.select %46, %44, %47 : vector<8x8xi1>, vector<8x8xf32>
    %cst_23 = arith.constant dense<0xFF800000> : vector<8xf32>
    %49 = vector.multi_reduction <maximumf>, %48, %cst_23 [1] : vector<8x8xf32> to vector<8xf32>
    %50 = vector.shape_cast %49 : vector<8xf32> to vector<8x1xf32>
    %51 = vector.broadcast %50 : vector<8x1xf32> to vector<8x8xf32>
    %52 = arith.subf %48, %51 : vector<8x8xf32>
    %53 = math.exp %52 : vector<8x8xf32>
    %cst_24 = arith.constant dense<0.000000e+00> : vector<8xf32>
    %54 = vector.multi_reduction <add>, %53, %cst_24 [1] : vector<8x8xf32> to vector<8xf32>
    %55 = vector.shape_cast %54 : vector<8xf32> to vector<8x1xf32>
    %56 = tpu.reciprocal %55 {approx = true} : vector<8x1xf32> -> vector<8x1xf32>
    %57 = vector.broadcast %56 : vector<8x1xf32> to vector<8x8xf32>
    %58 = arith.mulf %53, %57 : vector<8x8xf32>
    %c0_25 = arith.constant 0 : index
    %c1 = arith.constant 1 : index
    %c0_26 = arith.constant 0 : index
    %c0_27 = arith.constant 0 : index
    %59 = vector.load %arg6[%c0_25, %c1, %c0_26, %c0_27] : memref<1x4x8x8xf32, #tpu.memory_space<vmem>>, vector<1x1x8x8xf32>
    %60 = vector.shape_cast %59 : vector<1x1x8x8xf32> to vector<8x8xf32>
    %61 = vector.shape_cast %58 : vector<8x8xf32> to vector<1x1x8x8xf32>
    tpu.vector_store %arg6[%c0_25, %c1, %c0_26, %c0_27], %61 {strides = array<i32>} : memref<1x4x8x8xf32, #tpu.memory_space<vmem>>, vector<1x1x8x8xf32>,
    %62 = arith.truncf %58 : vector<8x8xf32> to vector<8x8xbf16>
    %cst_28 = arith.constant dense<0.000000e+00> : vector<8x8xf32>
    %63 = tpu.matmul %62, %43, %cst_28 {dimension_numbers = #tpu.dot_dimension_numbers<[1], [0], [0], [1], [0, 0, 1, 1], [], []>} : vector<8x8xbf16>, vector<8x8xbf16>, vector<8x8xf32> -> vector<8x8xf32>
    %64 = vector.extract_strided_slice %3 {offsets = [0, 16], sizes = [8, 8], strides = [1, 1]} : vector<8x32xf32> to vector<8x8xf32>
    %65 = arith.truncf %64 : vector<8x8xf32> to vector<8x8xbf16>
    %66 = vector.extract_strided_slice %5 {offsets = [0, 16], sizes = [8, 8], strides = [1, 1]} : vector<8x32xf32> to vector<8x8xf32>
    %67 = arith.truncf %66 : vector<8x8xf32> to vector<8x8xbf16>
    %68 = vector.extract_strided_slice %7 {offsets = [0, 16], sizes = [8, 8], strides = [1, 1]} : vector<8x32xf32> to vector<8x8xf32>
    %69 = arith.truncf %68 : vector<8x8xf32> to vector<8x8xbf16>
    %cst_29 = arith.constant dense<0.000000e+00> : vector<8x8xf32>
    %70 = tpu.matmul %65, %67, %cst_29 {dimension_numbers = #tpu.dot_dimension_numbers<[1], [1], [0], [0], [0, 0, 1, 0], [], []>} : vector<8x8xbf16>, vector<8x8xbf16>, vector<8x8xf32> -> vector<8x8xf32>
    %cst_30 = arith.constant -1.000000e+10 : f32
    %71 = vector.shape_cast %11 : vector<1x8xi1> to vector<1x8xi1>
    %72 = vector.broadcast %71 : vector<1x8xi1> to vector<8x8xi1>
    %73 = vector.broadcast %cst_30 : f32 to vector<8x8xf32>
    %74 = arith.select %72, %70, %73 : vector<8x8xi1>, vector<8x8xf32>
    %cst_31 = arith.constant dense<0xFF800000> : vector<8xf32>
    %75 = vector.multi_reduction <maximumf>, %74, %cst_31 [1] : vector<8x8xf32> to vector<8xf32>
    %76 = vector.shape_cast %75 : vector<8xf32> to vector<8x1xf32>
    %77 = vector.broadcast %76 : vector<8x1xf32> to vector<8x8xf32>
    %78 = arith.subf %74, %77 : vector<8x8xf32>
    %79 = math.exp %78 : vector<8x8xf32>
    %cst_32 = arith.constant dense<0.000000e+00> : vector<8xf32>
    %80 = vector.multi_reduction <add>, %79, %cst_32 [1] : vector<8x8xf32> to vector<8xf32>
    %81 = vector.shape_cast %80 : vector<8xf32> to vector<8x1xf32>
    %82 = tpu.reciprocal %81 {approx = true} : vector<8x1xf32> -> vector<8x1xf32>
    %83 = vector.broadcast %82 : vector<8x1xf32> to vector<8x8xf32>
    %84 = arith.mulf %79, %83 : vector<8x8xf32>
    %c0_33 = arith.constant 0 : index
    %c2 = arith.constant 2 : index
    %c0_34 = arith.constant 0 : index
    %c0_35 = arith.constant 0 : index
    %85 = vector.load %arg6[%c0_33, %c2, %c0_34, %c0_35] : memref<1x4x8x8xf32, #tpu.memory_space<vmem>>, vector<1x1x8x8xf32>
    %86 = vector.shape_cast %85 : vector<1x1x8x8xf32> to vector<8x8xf32>
    %87 = vector.shape_cast %84 : vector<8x8xf32> to vector<1x1x8x8xf32>
    tpu.vector_store %arg6[%c0_33, %c2, %c0_34, %c0_35], %87 {strides = array<i32>} : memref<1x4x8x8xf32, #tpu.memory_space<vmem>>, vector<1x1x8x8xf32>,
    %88 = arith.truncf %84 : vector<8x8xf32> to vector<8x8xbf16>
    %cst_36 = arith.constant dense<0.000000e+00> : vector<8x8xf32>
    %89 = tpu.matmul %88, %69, %cst_36 {dimension_numbers = #tpu.dot_dimension_numbers<[1], [0], [0], [1], [0, 0, 1, 1], [], []>} : vector<8x8xbf16>, vector<8x8xbf16>, vector<8x8xf32> -> vector<8x8xf32>
    %90 = vector.extract_strided_slice %3 {offsets = [0, 24], sizes = [8, 8], strides = [1, 1]} : vector<8x32xf32> to vector<8x8xf32>
    %91 = arith.truncf %90 : vector<8x8xf32> to vector<8x8xbf16>
    %92 = vector.extract_strided_slice %5 {offsets = [0, 24], sizes = [8, 8], strides = [1, 1]} : vector<8x32xf32> to vector<8x8xf32>
    %93 = arith.truncf %92 : vector<8x8xf32> to vector<8x8xbf16>
    %94 = vector.extract_strided_slice %7 {offsets = [0, 24], sizes = [8, 8], strides = [1, 1]} : vector<8x32xf32> to vector<8x8xf32>
    %95 = arith.truncf %94 : vector<8x8xf32> to vector<8x8xbf16>
    %cst_37 = arith.constant dense<0.000000e+00> : vector<8x8xf32>
    %96 = tpu.matmul %91, %93, %cst_37 {dimension_numbers = #tpu.dot_dimension_numbers<[1], [1], [0], [0], [0, 0, 1, 0], [], []>} : vector<8x8xbf16>, vector<8x8xbf16>, vector<8x8xf32> -> vector<8x8xf32>
    %cst_38 = arith.constant -1.000000e+10 : f32
    %97 = vector.shape_cast %11 : vector<1x8xi1> to vector<1x8xi1>
    %98 = vector.broadcast %97 : vector<1x8xi1> to vector<8x8xi1>
    %99 = vector.broadcast %cst_38 : f32 to vector<8x8xf32>
    %100 = arith.select %98, %96, %99 : vector<8x8xi1>, vector<8x8xf32>
    %cst_39 = arith.constant dense<0xFF800000> : vector<8xf32>
    %101 = vector.multi_reduction <maximumf>, %100, %cst_39 [1] : vector<8x8xf32> to vector<8xf32>
    %102 = vector.shape_cast %101 : vector<8xf32> to vector<8x1xf32>
    %103 = vector.broadcast %102 : vector<8x1xf32> to vector<8x8xf32>
    %104 = arith.subf %100, %103 : vector<8x8xf32>
    %105 = math.exp %104 : vector<8x8xf32>
    %cst_40 = arith.constant dense<0.000000e+00> : vector<8xf32>
    %106 = vector.multi_reduction <add>, %105, %cst_40 [1] : vector<8x8xf32> to vector<8xf32>
    %107 = vector.shape_cast %106 : vector<8xf32> to vector<8x1xf32>
    %108 = tpu.reciprocal %107 {approx = true} : vector<8x1xf32> -> vector<8x1xf32>
    %109 = vector.broadcast %108 : vector<8x1xf32> to vector<8x8xf32>
    %110 = arith.mulf %105, %109 : vector<8x8xf32>
    %c0_41 = arith.constant 0 : index
    %c3 = arith.constant 3 : index
    %c0_42 = arith.constant 0 : index
    %c0_43 = arith.constant 0 : index
    %111 = vector.load %arg6[%c0_41, %c3, %c0_42, %c0_43] : memref<1x4x8x8xf32, #tpu.memory_space<vmem>>, vector<1x1x8x8xf32>
    %112 = vector.shape_cast %111 : vector<1x1x8x8xf32> to vector<8x8xf32>
    %113 = vector.shape_cast %110 : vector<8x8xf32> to vector<1x1x8x8xf32>
    tpu.vector_store %arg6[%c0_41, %c3, %c0_42, %c0_43], %113 {strides = array<i32>} : memref<1x4x8x8xf32, #tpu.memory_space<vmem>>, vector<1x1x8x8xf32>,
    %114 = arith.truncf %110 : vector<8x8xf32> to vector<8x8xbf16>
    %cst_44 = arith.constant dense<0.000000e+00> : vector<8x8xf32>
    %115 = tpu.matmul %114, %95, %cst_44 {dimension_numbers = #tpu.dot_dimension_numbers<[1], [0], [0], [1], [0, 0, 1, 1], [], []>} : vector<8x8xbf16>, vector<8x8xbf16>, vector<8x8xf32> -> vector<8x8xf32>
    %116 = tpu.concatenate %37, %63, %89, %115 in 1 : vector<8x8xf32>, vector<8x8xf32>, vector<8x8xf32>, vector<8x8xf32> -> vector<8x32xf32>
    %c0_45 = arith.constant 0 : index
    %c0_46 = arith.constant 0 : index
    %c0_47 = arith.constant 0 : index
    %117 = vector.load %arg5[%c0_45, %c0_46, %c0_47] : memref<1x8x32xf32, #tpu.memory_space<vmem>>, vector<1x8x32xf32>
    %118 = vector.shape_cast %117 : vector<1x8x32xf32> to vector<8x32xf32>
    %119 = vector.shape_cast %116 : vector<8x32xf32> to vector<1x8x32xf32>
    tpu.vector_store %arg5[%c0_45, %c0_46, %c0_47], %119 {strides = array<i32>} : memref<1x8x32xf32, #tpu.memory_space<vmem>>, vector<1x8x32xf32>,
    return
  }
  func.func @transform_0(%arg0: i32) -> (i32, i32, i32) {
    %c0_i32 = arith.constant 0 : i32
    %c0_i32_0 = arith.constant 0 : i32
    %c0_i32_1 = arith.constant 0 : i32
    return %arg0, %c0_i32, %c0_i32_0 : i32, i32, i32
  }
  func.func @transform_1(%arg0: i32) -> (i32, i32, i32) {
    %c0_i32 = arith.constant 0 : i32
    %c0_i32_0 = arith.constant 0 : i32
    %c0_i32_1 = arith.constant 0 : i32
    return %arg0, %c0_i32, %c0_i32_0 : i32, i32, i32
  }
  func.func @transform_2(%arg0: i32) -> (i32, i32, i32) {
    %c0_i32 = arith.constant 0 : i32
    %c0_i32_0 = arith.constant 0 : i32
    %c0_i32_1 = arith.constant 0 : i32
    return %arg0, %c0_i32, %c0_i32_0 : i32, i32, i32
  }
  func.func @transform_3(%arg0: i32) -> (i32, i32, i32) {
    %c0_i32 = arith.constant 0 : i32
    %c0_i32_0 = arith.constant 0 : i32
    %c0_i32_1 = arith.constant 0 : i32
    return %arg0, %c0_i32, %c0_i32_0 : i32, i32, i32
  }
  func.func @transform_4(%arg0: i32) -> (i32, i32, i32) {
    %c0_i32 = arith.constant 0 : i32
    %c0_i32_0 = arith.constant 0 : i32
    %c0_i32_1 = arith.constant 0 : i32
    return %arg0, %c0_i32, %c0_i32_0 : i32, i32, i32
  }
  func.func @transform_5(%arg0: i32) -> (i32, i32, i32, i32) {
    %c0_i32 = arith.constant 0 : i32
    %c0_i32_0 = arith.constant 0 : i32
    %c0_i32_1 = arith.constant 0 : i32
    %c0_i32_2 = arith.constant 0 : i32
    return %arg0, %c0_i32, %c0_i32_0, %c0_i32_1 : i32, i32, i32, i32
  }
}

</mosaic_0001>

<llo_original>
// kernel: seq2seq_transformer_forward.25
$region0: #{seq2seq_transformer_forward.25}
  #allocation0 [shape = 'u32[]', space=smem, size = 0x4, offset = 0x4, fixed_abs, tag = 'smem constant byte address 0x4 - core index']
  #allocation1 [shape = 'u32[144,128]{1,0:T(1,128)}', space=vmem, size = 0x12000, scoped, tag = 'internal scratch']
  %s0 = inlined_call_operand.vmem [shape: f32[16,32], index: 0, kind: input, shape index: {}]
  %s1 = inlined_call_operand.vmem [shape: bf16[32,96], index: 1, kind: input, shape index: {}]
  %s2 = inlined_call_operand.vmem [shape: f32[1,96], index: 2, kind: input, shape index: {}]
  %s3 = inlined_call_operand.vmem [shape: f32[16,96], index: 3, kind: output, shape index: {}]
  %s4 = sld [smem:[#allocation0]]
  $region22: #{seq2seq_transformer_forward.25} parent=0
    _
  %s6 = ssub.s32 1, %s4
  %s7 = scalar_select 0, %s6, %s4
  // Predicated region
  $region2: #{seq2seq_transformer_forward.25} parent=0 // pred_check
    _
  $region3: #{seq2seq_transformer_forward.25} parent=0 // pred_check_branch
    %9 = sbr.rel (0) target = $region5
  $region4: #{seq2seq_transformer_forward.25} parent=0 // pred_region
    _
  $region5: #{seq2seq_transformer_forward.25} parent=0 // pred_fallthru
    _
  // Predicated region
  $region6: #{seq2seq_transformer_forward.25} parent=0 // pred_check
    _
  $region7: #{seq2seq_transformer_forward.25} parent=0 // pred_check_branch
    %11 = sbr.rel (0) target = $region9
  $region8: #{seq2seq_transformer_forward.25} parent=0 // pred_region
    _
  $region9: #{seq2seq_transformer_forward.25} parent=0 // pred_fallthru
    _
  // Predicated region
  $region10: #{seq2seq_transformer_forward.25} parent=0 // pred_check
    _
  $region11: #{seq2seq_transformer_forward.25} parent=0 // pred_check_branch
    %13 = sbr.rel (0) target = $region13
  $region12: #{seq2seq_transformer_forward.25} parent=0 // pred_region
    _
  $region13: #{seq2seq_transformer_forward.25} parent=0 // pred_fallthru
    _
  %v15 = vld [vmem:[%s0] sm:$0xff]
  %v16 = vld [vmem:[%s0 + $0x8] sm:$0xff]
  %v17 = vpack.c.bf16 %v16, %v15
  %v18 = vld [vmem:[%s1] sm:$0xf]
  %v19 = vld [vmem:[%s1 + $0x4] sm:$0xf]
  %v20 = vld [vmem:[%s1 + $0x8] sm:$0xf]
  %v21 = vld [vmem:[%s1 + $0xc] sm:$0xf]
  %v22 = vld [vmem:[%s2] sm:$0x1]
  %v24 = vlaneseq
  %v25 = vshrl.u32 %v24, 7
  %v26 = vsub.s32 0, %v25
  %v27 = vrot.slane %v22, %v26
  %v33 = vunpack.c.l.b16 %v18
  %v34 = vunpack.c.l.b16 %v19
  %v35 = vunpack.c.l.b16 %v20
  %v36 = vunpack.c.l.b16 %v21
  %v37 = vpack.c.b16 %v34, %v33
  %v38 = vpack.c.b16 %v36, %v35
  %vm41 = vcmask 261120
  %v43 = vsel %vm41, %v17, 0
  %45 = vmatprep.subr.bf16.mxu0 0
  %46 = vmatpush1.bf16.msra.mxu0 %v37
  %47 = vmatprep.subr.bf16.mxu0 0
  %48 = vmatpush1.bf16.msra.mxu0 %v38
  %49 = vmatprep.subr.bf16.mxu0 0
  %50 = vmatpush1.bf16.msra.mxu0 0
  %51 = vmatprep.subr.bf16.mxu0 0
  %52 = vmatpush1.bf16.msra.mxu0 0
  %53 = vmatprep.subr.bf16.mxu0 0
  %54 = vmatpush1.bf16.msra.mxu0 0
  %55 = vmatprep.subr.bf16.mxu0 0
  %56 = vmatpush1.bf16.msra.mxu0 0
  %57 = vmatprep.subr.bf16.mxu0 0
  %58 = vmatpush1.bf16.msra.mxu0 0
  %59 = vmatprep.subr.bf16.mxu0 0
  %60 = vmatpush1.bf16.msra.mxu0 0
  %61 = vmatprep.subr.bf16.mxu0 0
  %62 = vmatpush1.bf16.msra.mxu0 0
  %63 = vmatprep.subr.bf16.mxu0 0
  %64 = vmatpush1.bf16.msra.mxu0 0
  %65 = vmatprep.subr.bf16.mxu0 0
  %66 = vmatpush1.bf16.msra.mxu0 0
  %67 = vmatprep.subr.bf16.mxu0 0
  %68 = vmatpush1.bf16.msra.mxu0 0
  %69 = vmatprep.subr.bf16.mxu0 0
  %70 = vmatpush1.bf16.msra.mxu0 0
  %71 = vmatprep.subr.bf16.mxu0 0
  %72 = vmatpush1.bf16.msra.mxu0 0
  %73 = vmatprep.subr.bf16.mxu0 0
  %74 = vmatpush1.bf16.msra.mxu0 0
  %75 = vmatprep.subr.bf16.mxu0 0
  %76 = vmatpush1.bf16.msra.mxu0 0
  %77 = vmatprep.mubr.bf16.mxu0 0
  %78 = vmatmul.mubr.bf16.gmra.mrb[0].mxu0 %v43
  %v79 = vpop.f32.mrb[0].mxu0
  %v80 = vadd.f32 %v27, %v79
  %v81 = vpop.f32.mrb[0].mxu0
  %v82 = vpop.f32.mrb[0].mxu0
  %v83 = vadd.f32 %v27, %v82
  %v84 = vpop.f32.mrb[0].mxu0
  %85 = vdwg.mxu0
  %vm86 = vcmask 785408
  %87 = vst.msk [vmem:[%s3] sm:$0xff] %vm86, %v80
  %88 = vst.msk [vmem:[%s3 + $0x8] sm:$0xff] %vm86, %v83
  // Predicated region
  $region14: #{seq2seq_transformer_forward.25} parent=0 // pred_check
    _
  $region15: #{seq2seq_transformer_forward.25} parent=0 // pred_check_branch
    %90 = sbr.rel (0) target = $region17
  $region16: #{seq2seq_transformer_forward.25} parent=0 // pred_region
    _
  $region17: #{seq2seq_transformer_forward.25} parent=0 // pred_fallthru
    _
  // Predicated region
  $region18: #{seq2seq_transformer_forward.25} parent=0 // pred_check
    _
  $region19: #{seq2seq_transformer_forward.25} parent=0 // pred_check_branch
    %92 = sbr.rel (0) target = $region21
  $region20: #{seq2seq_transformer_forward.25} parent=0 // pred_region
    _
  $region21: #{seq2seq_transformer_forward.25} parent=0 // pred_fallthru
    _

// kernel: seq2seq_transformer_forward.26
$region0: #{seq2seq_transformer_forward.26}
  #allocation0 [shape = 'u32[]', space=smem, size = 0x4, offset = 0x4, fixed_abs, tag = 'smem constant byte address 0x4 - core index']
  #allocation1 [shape = 'u32[144,128]{1,0:T(1,128)}', space=vmem, size = 0x12000, scoped, tag = 'internal scratch']
  %s0 = inlined_call_operand.vmem [shape: f32[2,8,32], index: 0, kind: input, shape index: {}]
  %s1 = inlined_call_operand.vmem [shape: f32[2,8,32], index: 1, kind: input, shape index: {}]
  %s2 = inlined_call_operand.vmem [shape: f32[2,8,32], index: 2, kind: input, shape index: {}]
  %s3 = inlined_call_operand.vmem [shape: f32[2,1,8], index: 3, kind: input, shape index: {}]
  %s4 = inlined_call_operand.vmem [shape: f32[2,8,32], index: 4, kind: output, shape index: {}]
  %s5 = sld [smem:[#allocation0]]
  $region49: #{seq2seq_transformer_forward.26} parent=0
    _
  %s7 = ssub.s32 1, %s5
  %s8 = scalar_select 0, %s7, %s5
  loop: start=0, step=1, limit=4
  $region2: #{seq2seq_transformer_forward.26} parent=0 // loop_pre_header
    _
  $region3: #{seq2seq_transformer_forward.26} parent=0 // loop_header
    %s10 = sphi 0, %s14
    %p11 = scmp.ge.s32.totalorder %s10, 4
    %s20 = sphi 0, %s22
    %s23 = sphi 0, %s20
    %s24 = sphi 0, %s23
    %s40 = sphi 0, %s24
    %s46 = sphi 0, %s48
    %s49 = sphi 0, %s46
    %s50 = sphi 0, %s49
    %s66 = sphi 0, %s50
    %s72 = sphi 0, %s74
    %s75 = sphi 0, %s72
    %s76 = sphi 0, %s75
    %s92 = sphi 0, %s76
    %s98 = sphi 0, %s100
    %s101 = sphi 0, %s98
    %s102 = sphi 0, %s101
    %s118 = sphi 0, %s102
    %s124 = sphi 0, %s126
    %s127 = sphi 0, %s124
    %s128 = sphi 0, %s127
    %s144 = sphi 0, %s128
  $region4: #{seq2seq_transformer_forward.26} parent=0 // loop_header_branch
    %13 = sbr.rel (%p11) target = $region8
  $region5: #{seq2seq_transformer_forward.26} parent=0 // loop_body
    %s15 = ssub.s32 %s10, 1
    %s16 = ssub.s32 %s10, 2
    %s17 = sadd.s32 %s10, 1
    %s18 = ssub.s32 %s10, %s17
    %p19 = scmp.eq.s32.totalorder %s18, 0
    %s21 = sadd.s32 %s20, 1
    %s22 = scalar_select %p19, %s20, %s21
    %p25 = pneg %p19
    %p26 = scmp.eq.s32.totalorder %s10, 1
    %p27 = por %p25, %p26
    %p28 = scmp.ne.s32.totalorder %s20, %s23
    %p29 = scmp.eq.s32.totalorder %s10, 0
    %p30 = por %p28, %p29
    %p31 = scmp.ne.s32.totalorder %s20, %s23
    %p32 = scmp.eq.s32.totalorder %s15, 1
    %p33 = por %p31, %p32
    %p34 = scmp.ne.s32.totalorder %s23, %s24
    %p35 = scmp.eq.s32.totalorder %s15, 0
    %p36 = por %p34, %p35
    %p37 = scmp.ne.s32.totalorder %s23, %s24
    %p38 = scmp.eq.s32.totalorder %s16, 1
    %p39 = por %p37, %p38
    %p41 = scmp.ne.s32.totalorder %s24, %s40
    %p42 = scmp.eq.s32.totalorder %s16, 0
    %p43 = por %p41, %p42
    %s44 = ssub.s32 %s10, %s17
    %p45 = scmp.eq.s32.totalorder %s44, 0
    %s47 = sadd.s32 %s46, 1
    %s48 = scalar_select %p45, %s46, %s47
    %p51 = pneg %p45
    %p52 = scmp.eq.s32.totalorder %s10, 1
    %p53 = por %p51, %p52
    %p54 = scmp.ne.s32.totalorder %s46, %s49
    %p55 = scmp.eq.s32.totalorder %s10, 0
    %p56 = por %p54, %p55
    %p57 = scmp.ne.s32.totalorder %s46, %s49
    %p58 = scmp.eq.s32.totalorder %s15, 1
    %p59 = por %p57, %p58
    %p60 = scmp.ne.s32.totalorder %s49, %s50
    %p61 = scmp.eq.s32.totalorder %s15, 0
    %p62 = por %p60, %p61
    %p63 = scmp.ne.s32.totalorder %s49, %s50
    %p64 = scmp.eq.s32.totalorder %s16, 1
    %p65 = por %p63, %p64
    %p67 = scmp.ne.s32.totalorder %s50, %s66
    %p68 = scmp.eq.s32.totalorder %s16, 0
    %p69 = por %p67, %p68
    %s70 = ssub.s32 %s10, %s17
    %p71 = scmp.eq.s32.totalorder %s70, 0
    %s73 = sadd.s32 %s72, 1
    %s74 = scalar_select %p71, %s72, %s73
    %p77 = pneg %p71
    %p78 = scmp.eq.s32.totalorder %s10, 1
    %p79 = por %p77, %p78
    %p80 = scmp.ne.s32.totalorder %s72, %s75
    %p81 = scmp.eq.s32.totalorder %s10, 0
    %p82 = por %p80, %p81
    %p83 = scmp.ne.s32.totalorder %s72, %s75
    %p84 = scmp.eq.s32.totalorder %s15, 1
    %p85 = por %p83, %p84
    %p86 = scmp.ne.s32.totalorder %s75, %s76
    %p87 = scmp.eq.s32.totalorder %s15, 0
    %p88 = por %p86, %p87
    %p89 = scmp.ne.s32.totalorder %s75, %s76
    %p90 = scmp.eq.s32.totalorder %s16, 1
    %p91 = por %p89, %p90
    %p93 = scmp.ne.s32.totalorder %s76, %s92
    %p94 = scmp.eq.s32.totalorder %s16, 0
    %p95 = por %p93, %p94
    %s96 = ssub.s32 %s10, %s17
    %p97 = scmp.eq.s32.totalorder %s96, 0
    %s99 = sadd.s32 %s98, 1
    %s100 = scalar_select %p97, %s98, %s99
    %p103 = pneg %p97
    %p104 = scmp.eq.s32.totalorder %s10, 1
    %p105 = por %p103, %p104
    %p106 = scmp.ne.s32.totalorder %s98, %s101
    %p107 = scmp.eq.s32.totalorder %s10, 0
    %p108 = por %p106, %p107
    %p109 = scmp.ne.s32.totalorder %s98, %s101
    %p110 = scmp.eq.s32.totalorder %s15, 1
    %p111 = por %p109, %p110
    %p112 = scmp.ne.s32.totalorder %s101, %s102
    %p113 = scmp.eq.s32.totalorder %s15, 0
    %p114 = por %p112, %p113
    %p115 = scmp.ne.s32.totalorder %s101, %s102
    %p116 = scmp.eq.s32.totalorder %s16, 1
    %p117 = por %p115, %p116
    %p119 = scmp.ne.s32.totalorder %s102, %s118
    %p120 = scmp.eq.s32.totalorder %s16, 0
    %p121 = por %p119, %p120
    %s122 = ssub.s32 %s10, %s17
    %p123 = scmp.eq.s32.totalorder %s122, 0
    %s125 = sadd.s32 %s124, 1
    %s126 = scalar_select %p123, %s124, %s125
    %p129 = pneg %p123
    %p130 = scmp.eq.s32.totalorder %s10, 1
    %p131 = por %p129, %p130
    %p132 = scmp.ne.s32.totalorder %s124, %s127
    %p133 = scmp.eq.s32.totalorder %s10, 0
    %p134 = por %p132, %p133
    %p135 = scmp.ne.s32.totalorder %s124, %s127
    %p136 = scmp.eq.s32.totalorder %s15, 1
    %p137 = por %p135, %p136
    %p138 = scmp.ne.s32.totalorder %s127, %s128
    %p139 = scmp.eq.s32.totalorder %s15, 0
    %p140 = por %p138, %p139
    %p141 = scmp.ne.s32.totalorder %s127, %s128
    %p142 = scmp.eq.s32.totalorder %s16, 1
    %p143 = por %p141, %p142
    %p145 = scmp.ne.s32.totalorder %s128, %s144
    %p146 = scmp.eq.s32.totalorder %s16, 0
    %p147 = por %p145, %p146
    %p148 = scmp.le.s32.totalorder 1, %s10
    %p149 = scmp.lt.s32.totalorder %s10, 3
    %p150 = pnand %p148, %p149
    %p151 = pneg %p150
    // Predicated region
    $region9: #{seq2seq_transformer_forward.26} parent=5 // pred_check
      _
    $region10: #{seq2seq_transformer_forward.26} parent=5 // pred_check_branch
      %153 = sbr.rel (%p150) target = $region12
    $region11: #{seq2seq_transformer_forward.26} parent=5 // pred_region
      %s154 = ssub.s32 %s10, 1
    $region12: #{seq2seq_transformer_forward.26} parent=5 // pred_fallthru
      _
    %p155 = scmp.lt.s32.totalorder %s10, 2
    // Predicated region
    $region13: #{seq2seq_transformer_forward.26} parent=5 // pred_check
      %p156 = pneg %p155
    $region14: #{seq2seq_transformer_forward.26} parent=5 // pred_check_branch
      %158 = sbr.rel (%p156) target = $region16
    $region15: #{seq2seq_transformer_forward.26} parent=5 // pred_region
      // Predicated region
      $region17: #{seq2seq_transformer_forward.26} parent=15 // pred_check
        %p159 = pneg %p30
      $region18: #{seq2seq_transformer_forward.26} parent=15 // pred_check_branch
        %161 = sbr.rel (%p159) target = $region20
      $region19: #{seq2seq_transformer_forward.26} parent=15 // pred_region
        %p162 = scmp.lt.s32.totalorder %s10, 1
        %s163 = scalar_select %p162, %s10, 1
        %s164 = smul.addr %s163, 8
        %s165 = scalar_lea.vmem %s0, %s164
      $region20: #{seq2seq_transformer_forward.26} parent=15 // pred_fallthru
        _
      // Predicated region
      $region21: #{seq2seq_transformer_forward.26} parent=15 // pred_check
        %p166 = pneg %p56
      $region22: #{seq2seq_transformer_forward.26} parent=15 // pred_check_branch
        %168 = sbr.rel (%p166) target = $region24
      $region23: #{seq2seq_transformer_forward.26} parent=15 // pred_region
        %p169 = scmp.lt.s32.totalorder %s10, 1
        %s170 = scalar_select %p169, %s10, 1
        %s171 = smul.addr %s170, 8
        %s172 = scalar_lea.vmem %s1, %s171
      $region24: #{seq2seq_transformer_forward.26} parent=15 // pred_fallthru
        _
      // Predicated region
      $region25: #{seq2seq_transformer_forward.26} parent=15 // pred_check
        %p173 = pneg %p82
      $region26: #{seq2seq_transformer_forward.26} parent=15 // pred_check_branch
        %175 = sbr.rel (%p173) target = $region28
      $region27: #{seq2seq_transformer_forward.26} parent=15 // pred_region
        %p176 = scmp.lt.s32.totalorder %s10, 1
        %s177 = scalar_select %p176, %s10, 1
        %s178 = smul.addr %s177, 8
        %s179 = scalar_lea.vmem %s2, %s178
      $region28: #{seq2seq_transformer_forward.26} parent=15 // pred_fallthru
        _
      // Predicated region
      $region29: #{seq2seq_transformer_forward.26} parent=15 // pred_check
        %p180 = pneg %p108
      $region30: #{seq2seq_transformer_forward.26} parent=15 // pred_check_branch
        %182 = sbr.rel (%p180) target = $region32
      $region31: #{seq2seq_transformer_forward.26} parent=15 // pred_region
        %p183 = scmp.lt.s32.totalorder %s10, 1
        %s184 = scalar_select %p183, %s10, 1
        %s185 = scalar_lea.vmem %s3, %s184
      $region32: #{seq2seq_transformer_forward.26} parent=15 // pred_fallthru
        _
    $region16: #{seq2seq_transformer_forward.26} parent=5 // pred_fallthru
      _
    %p186 = scmp.le.s32.totalorder 1, %s10
    %p187 = scmp.lt.s32.totalorder %s10, 3
    %p188 = pnand %p186, %p187
    %p189 = pneg %p188
    // Predicated region
    $region33: #{seq2seq_transformer_forward.26} parent=5 // pred_check
      _
    $region34: #{seq2seq_transformer_forward.26} parent=5 // pred_check_branch
      %191 = sbr.rel (%p188) target = $region36
    $region35: #{seq2seq_transformer_forward.26} parent=5 // pred_region
      %s192 = ssub.s32 %s10, 1
      %p193 = scmp.lt.s32.totalorder %s15, 1
      %s194 = scalar_select %p193, %s15, 1
      %s195 = smul.addr %s194, 8
      %s196 = scalar_lea.vmem %s0, %s195
      %p197 = pneg %p36
      %p198 = pneg %p33
      %p199 = scmp.lt.s32.totalorder %s15, 1
      %s200 = scalar_select %p199, %s15, 1
      %s201 = smul.addr %s200, 8
      %s202 = scalar_lea.vmem %s1, %s201
      %p203 = pneg %p62
      %p204 = pneg %p59
      %p205 = scmp.lt.s32.totalorder %s15, 1
      %s206 = scalar_select %p205, %s15, 1
      %s207 = smul.addr %s206, 8
      %s208 = scalar_lea.vmem %s2, %s207
      %p209 = pneg %p88
      %p210 = pneg %p85
      %p211 = scmp.lt.s32.totalorder %s15, 1
      %s212 = scalar_select %p211, %s15, 1
      %s213 = scalar_lea.vmem %s3, %s212
      %p214 = pneg %p114
      %p215 = pneg %p111
      %p216 = pneg %p140
      %p217 = pneg %p137
      %p218 = scmp.lt.s32.totalorder %s15, 1
      %s219 = scalar_select %p218, %s15, 1
      %s220 = smul.addr %s219, 8
      %s221 = scalar_lea.vmem %s4, %s220
      %p222 = scmp.lt.s32.totalorder %s15, 1
      %s223 = scalar_select %p222, %s15, 1
      %s224 = smul.addr %s223, 8
      %s225 = scalar_lea.vmem %s0, %s224
      %p226 = scmp.lt.s32.totalorder %s15, 1
      %s227 = scalar_select %p226, %s15, 1
      %s228 = smul.addr %s227, 8
      %s229 = scalar_lea.vmem %s1, %s228
      %p230 = scmp.lt.s32.totalorder %s15, 1
      %s231 = scalar_select %p230, %s15, 1
      %s232 = smul.addr %s231, 8
      %s233 = scalar_lea.vmem %s2, %s232
      %p234 = scmp.lt.s32.totalorder %s15, 1
      %s235 = scalar_select %p234, %s15, 1
      %s236 = scalar_lea.vmem %s3, %s235
      %p237 = scmp.lt.s32.totalorder %s15, 1
      %s238 = scalar_select %p237, %s15, 1
      %s239 = smul.addr %s238, 8
      %s240 = scalar_lea.vmem %s4, %s239
      %v242 = vld [vmem:[%s225] sm:$0xff]
      %v243 = vmul.f32 %v242, 0.35355338
      %v244 = vld [vmem:[%s229] sm:$0xff]
      %v245 = vld [vmem:[%s233] sm:$0xff]
      %v246 = vld [vmem:[%s236] sm:$0x1]
      %vm247 = vcmp.gt.f32.partialorder %v246, 0.0
      %v248 = vpack.c.bf16 %v243, %v243
      %v249 = vpack.c.bf16 %v244, %v244
      %v250 = vpack.c.bf16 %v245, %v245
      %vm251 = vcmask 64512
      %v253 = vsel %vm251, %v248, 0
      %v256 = vsel %vm251, %v249, 0
      %258 = vmatprep.subr.bf16.mxu0 0
      %259 = vmatpush1.bf16.xpose.msra.mxu0 %v256
      %260 = vmatprep.subr.bf16.mxu0 0
      %261 = vmatpush1.bf16.xpose.msra.mxu0 0
      %262 = vmatprep.subr.bf16.mxu0 0
      %263 = vmatpush1.bf16.xpose.msra.mxu0 0
      %264 = vmatprep.subr.bf16.mxu0 0
      %265 = vmatpush1.bf16.xpose.msra.mxu0 0
      %266 = vmatprep.subr.bf16.mxu0 0
      %267 = vmatpush1.bf16.xpose.msra.mxu0 0
      %268 = vmatprep.subr.bf16.mxu0 0
      %269 = vmatpush1.bf16.xpose.msra.mxu0 0
      %270 = vmatprep.subr.bf16.mxu0 0
      %271 = vmatpush1.bf16.xpose.msra.mxu0 0
      %272 = vmatprep.subr.bf16.mxu0 0
      %273 = vmatpush1.bf16.xpose.msra.mxu0 0
      %274 = vmatprep.subr.bf16.mxu0 0
      %275 = vmatpush1.bf16.xpose.msra.mxu0 0
      %276 = vmatprep.subr.bf16.mxu0 0
      %277 = vmatpush1.bf16.xpose.msra.mxu0 0
      %278 = vmatprep.subr.bf16.mxu0 0
      %279 = vmatpush1.bf16.xpose.msra.mxu0 0
      %280 = vmatprep.subr.bf16.mxu0 0
      %281 = vmatpush1.bf16.xpose.msra.mxu0 0
      %282 = vmatprep.subr.bf16.mxu0 0
      %283 = vmatpush1.bf16.xpose.msra.mxu0 0
      %284 = vmatprep.subr.bf16.mxu0 0
      %285 = vmatpush1.bf16.xpose.msra.mxu0 0
      %286 = vmatprep.subr.bf16.mxu0 0
      %287 = vmatpush1.bf16.xpose.msra.mxu0 0
      %288 = vmatprep.subr.bf16.mxu0 0
      %289 = vmatpush1.bf16.xpose.msra.mxu0 0
      %290 = vmatprep.mubr.bf16.mxu0 0
      %291 = vmatmul.mubr.bf16.gmra.mrb[0].mxu0 %v253
      %v292 = vpop.f32.mrb[0].mxu0
      %v293 = vadd.f32 0.0, %v292
      %v294 = vpop.f32.mrb[0].mxu0
      %v295 = vpop.f32.mrb[0].mxu0
      %v296 = vpop.f32.mrb[0].mxu0
      %297 = vdwg.mxu0
      %v298 = vsel %vm247, 1, 0
      %v299 = vlaneseq
      %v300 = vshrl.u32 %v299, 7
      %v301 = vsub.s32 0, %v300
      %v302 = vrot.slane %v298, %v301
      %vm303 = vcmp.eq.s32.totalorder %v302, 1
      %v304 = vsel %vm303, %v293, -1e+10
      %v305 = vsel %vm251, %v304, -inf
      %306 = vmax.xlane.f32.xlu0 %v305
      %v307 = vpop.xlane.xlu0 %306
      %v308 = vsub.f32 %v304, %v307
      %v309 = vmul.f32 %v308, 1.442695
      %v310 = vpow.pop %v309
      %v311 = vsel %vm251, %v310, 0.0
      %312 = vadd.xlane.f32.xlu0 %v311
      %v313 = vpop.xlane.xlu0 %312
      %v314 = vrcp.pop %v313
      %v315 = vmul.f32 %v310, %v314
      %v316 = vpack.c.bf16 %v315, %v315
      %v318 = vsel %vm251, %v316, 0
      %vm320 = vcmask 1043456
      %v322 = vsel %vm320, %v250, 0
      %324 = vmatprep.subr.bf16.mxu0 0
      %325 = vmatpush1.bf16.msra.mxu0 %v322
      %326 = vmatprep.subr.bf16.mxu0 0
      %327 = vmatpush1.bf16.msra.mxu0 0
      %328 = vmatprep.subr.bf16.mxu0 0
      %329 = vmatpush1.bf16.msra.mxu0 0
      %330 = vmatprep.subr.bf16.mxu0 0
      %331 = vmatpush1.bf16.msra.mxu0 0
      %332 = vmatprep.subr.bf16.mxu0 0
      %333 = vmatpush1.bf16.msra.mxu0 0
      %334 = vmatprep.subr.bf16.mxu0 0
      %335 = vmatpush1.bf16.msra.mxu0 0
      %336 = vmatprep.subr.bf16.mxu0 0
      %337 = vmatpush1.bf16.msra.mxu0 0
      %338 = vmatprep.subr.bf16.mxu0 0
      %339 = vmatpush1.bf16.msra.mxu0 0
      %340 = vmatprep.subr.bf16.mxu0 0
      %341 = vmatpush1.bf16.msra.mxu0 0
      %342 = vmatprep.subr.bf16.mxu0 0
      %343 = vmatpush1.bf16.msra.mxu0 0
      %344 = vmatprep.subr.bf16.mxu0 0
      %345 = vmatpush1.bf16.msra.mxu0 0
      %346 = vmatprep.subr.bf16.mxu0 0
      %347 = vmatpush1.bf16.msra.mxu0 0
      %348 = vmatprep.subr.bf16.mxu0 0
      %349 = vmatpush1.bf16.msra.mxu0 0
      %350 = vmatprep.subr.bf16.mxu0 0
      %351 = vmatpush1.bf16.msra.mxu0 0
      %352 = vmatprep.subr.bf16.mxu0 0
      %353 = vmatpush1.bf16.msra.mxu0 0
      %354 = vmatprep.subr.bf16.mxu0 0
      %355 = vmatpush1.bf16.msra.mxu0 0
      %356 = vmatprep.mubr.bf16.mxu0 0
      %357 = vmatmul.mubr.bf16.gmra.mrb[0].mxu0 %v318
      %v358 = vpop.f32.mrb[0].mxu0
      %v359 = vadd.f32 0.0, %v358
      %v360 = vpop.f32.mrb[0].mxu0
      %v361 = vpop.f32.mrb[0].mxu0
      %v362 = vpop.f32.mrb[0].mxu0
      %363 = vdwg.mxu0
      %365 = vrot.lane.b32.xlu0 %v248, 120
      %v366 = vpop.permute.xlu0 %365
      %368 = vrot.lane.b32.xlu0 %v249, 120
      %v369 = vpop.permute.xlu0 %368
      %v371 = vsel %vm251, %v366, 0
      %v374 = vsel %vm251, %v369, 0
      %376 = vmatprep.subr.bf16.mxu0 0
      %377 = vmatpush1.bf16.xpose.msra.mxu0 %v374
      %378 = vmatprep.subr.bf16.mxu0 0
      %379 = vmatpush1.bf16.xpose.msra.mxu0 0
      %380 = vmatprep.subr.bf16.mxu0 0
      %381 = vmatpush1.bf16.xpose.msra.mxu0 0
      %382 = vmatprep.subr.bf16.mxu0 0
      %383 = vmatpush1.bf16.xpose.msra.mxu0 0
      %384 = vmatprep.subr.bf16.mxu0 0
      %385 = vmatpush1.bf16.xpose.msra.mxu0 0
      %386 = vmatprep.subr.bf16.mxu0 0
      %387 = vmatpush1.bf16.xpose.msra.mxu0 0
      %388 = vmatprep.subr.bf16.mxu0 0
      %389 = vmatpush1.bf16.xpose.msra.mxu0 0
      %390 = vmatprep.subr.bf16.mxu0 0
      %391 = vmatpush1.bf16.xpose.msra.mxu0 0
      %392 = vmatprep.subr.bf16.mxu0 0
      %393 = vmatpush1.bf16.xpose.msra.mxu0 0
      %394 = vmatprep.subr.bf16.mxu0 0
      %395 = vmatpush1.bf16.xpose.msra.mxu0 0
      %396 = vmatprep.subr.bf16.mxu0 0
      %397 = vmatpush1.bf16.xpose.msra.mxu0 0
      %398 = vmatprep.subr.bf16.mxu0 0
      %399 = vmatpush1.bf16.xpose.msra.mxu0 0
      %400 = vmatprep.subr.bf16.mxu0 0
      %401 = vmatpush1.bf16.xpose.msra.mxu0 0
      %402 = vmatprep.subr.bf16.mxu0 0
      %403 = vmatpush1.bf16.xpose.msra.mxu0 0
      %404 = vmatprep.subr.bf16.mxu0 0
      %405 = vmatpush1.bf16.xpose.msra.mxu0 0
      %406 = vmatprep.subr.bf16.mxu0 0
      %407 = vmatpush1.bf16.xpose.msra.mxu0 0
      %408 = vmatprep.mubr.bf16.mxu0 0
      %409 = vmatmul.mubr.bf16.gmra.mrb[0].mxu0 %v371
      %v410 = vpop.f32.mrb[0].mxu0
      %v411 = vadd.f32 0.0, %v410
      %v412 = vpop.f32.mrb[0].mxu0
      %v413 = vpop.f32.mrb[0].mxu0
      %v414 = vpop.f32.mrb[0].mxu0
      %415 = vdwg.mxu0
      %v416 = vsel %vm303, %v411, -1e+10
      %v417 = vsel %vm251, %v416, -inf
      %418 = vmax.xlane.f32.xlu0 %v417
      %v419 = vpop.xlane.xlu0 %418
      %v420 = vsub.f32 %v416, %v419
      %v421 = vmul.f32 %v420, 1.442695
      %v422 = vpow.pop %v421
      %v423 = vsel %vm251, %v422, 0.0
      %424 = vadd.xlane.f32.xlu0 %v423
      %v425 = vpop.xlane.xlu0 %424
      %v426 = vrcp.pop %v425
      %v427 = vmul.f32 %v422, %v426
      %v428 = vpack.c.bf16 %v427, %v427
      %430 = vrot.lane.b32.xlu0 %v250, 120
      %v431 = vpop.permute.xlu0 %430
      %v433 = vsel %vm251, %v428, 0
      %v436 = vsel %vm320, %v431, 0
      %438 = vmatprep.subr.bf16.mxu0 0
      %439 = vmatpush1.bf16.msra.mxu0 %v436
      %440 = vmatprep.subr.bf16.mxu0 0
      %441 = vmatpush1.bf16.msra.mxu0 0
      %442 = vmatprep.subr.bf16.mxu0 0
      %443 = vmatpush1.bf16.msra.mxu0 0
      %444 = vmatprep.subr.bf16.mxu0 0
      %445 = vmatpush1.bf16.msra.mxu0 0
      %446 = vmatprep.subr.bf16.mxu0 0
      %447 = vmatpush1.bf16.msra.mxu0 0
      %448 = vmatprep.subr.bf16.mxu0 0
      %449 = vmatpush1.bf16.msra.mxu0 0
      %450 = vmatprep.subr.bf16.mxu0 0
      %451 = vmatpush1.bf16.msra.mxu0 0
      %452 = vmatprep.subr.bf16.mxu0 0
      %453 = vmatpush1.bf16.msra.mxu0 0
      %454 = vmatprep.subr.bf16.mxu0 0
      %455 = vmatpush1.bf16.msra.mxu0 0
      %456 = vmatprep.subr.bf16.mxu0 0
      %457 = vmatpush1.bf16.msra.mxu0 0
      %458 = vmatprep.subr.bf16.mxu0 0
      %459 = vmatpush1.bf16.msra.mxu0 0
      %460 = vmatprep.subr.bf16.mxu0 0
      %461 = vmatpush1.bf16.msra.mxu0 0
      %462 = vmatprep.subr.bf16.mxu0 0
      %463 = vmatpush1.bf16.msra.mxu0 0
      %464 = vmatprep.subr.bf16.mxu0 0
      %465 = vmatpush1.bf16.msra.mxu0 0
      %466 = vmatprep.subr.bf16.mxu0 0
      %467 = vmatpush1.bf16.msra.mxu0 0
      %468 = vmatprep.subr.bf16.mxu0 0
      %469 = vmatpush1.bf16.msra.mxu0 0
      %470 = vmatprep.mubr.bf16.mxu0 0
      %471 = vmatmul.mubr.bf16.gmra.mrb[0].mxu0 %v433
      %v472 = vpop.f32.mrb[0].mxu0
      %v473 = vadd.f32 0.0, %v472
      %v474 = vpop.f32.mrb[0].mxu0
      %v475 = vpop.f32.mrb[0].mxu0
      %v476 = vpop.f32.mrb[0].mxu0
      %477 = vdwg.mxu0
      %478 = vrot.lane.b32.xlu0 %v248, 112
      %v479 = vpop.permute.xlu0 %478
      %480 = vrot.lane.b32.xlu0 %v249, 112
      %v481 = vpop.permute.xlu0 %480
      %v483 = vsel %vm251, %v479, 0
      %v486 = vsel %vm251, %v481, 0
      %488 = vmatprep.subr.bf16.mxu0 0
      %489 = vmatpush1.bf16.xpose.msra.mxu0 %v486
      %490 = vmatprep.subr.bf16.mxu0 0
      %491 = vmatpush1.bf16.xpose.msra.mxu0 0
      %492 = vmatprep.subr.bf16.mxu0 0
      %493 = vmatpush1.bf16.xpose.msra.mxu0 0
      %494 = vmatprep.subr.bf16.mxu0 0
      %495 = vmatpush1.bf16.xpose.msra.mxu0 0
      %496 = vmatprep.subr.bf16.mxu0 0
      %497 = vmatpush1.bf16.xpose.msra.mxu0 0
      %498 = vmatprep.subr.bf16.mxu0 0
      %499 = vmatpush1.bf16.xpose.msra.mxu0 0
      %500 = vmatprep.subr.bf16.mxu0 0
      %501 = vmatpush1.bf16.xpose.msra.mxu0 0
      %502 = vmatprep.subr.bf16.mxu0 0
      %503 = vmatpush1.bf16.xpose.msra.mxu0 0
      %504 = vmatprep.subr.bf16.mxu0 0
      %505 = vmatpush1.bf16.xpose.msra.mxu0 0
      %506 = vmatprep.subr.bf16.mxu0 0
      %507 = vmatpush1.bf16.xpose.msra.mxu0 0
      %508 = vmatprep.subr.bf16.mxu0 0
      %509 = vmatpush1.bf16.xpose.msra.mxu0 0
      %510 = vmatprep.subr.bf16.mxu0 0
      %511 = vmatpush1.bf16.xpose.msra.mxu0 0
      %512 = vmatprep.subr.bf16.mxu0 0
      %513 = vmatpush1.bf16.xpose.msra.mxu0 0
      %514 = vmatprep.subr.bf16.mxu0 0
      %515 = vmatpush1.bf16.xpose.msra.mxu0 0
      %516 = vmatprep.subr.bf16.mxu0 0
      %517 = vmatpush1.bf16.xpose.msra.mxu0 0
      %518 = vmatprep.subr.bf16.mxu0 0
      %519 = vmatpush1.bf16.xpose.msra.mxu0 0
      %520 = vmatprep.mubr.bf16.mxu0 0
      %521 = vmatmul.mubr.bf16.gmra.mrb[0].mxu0 %v483
      %v522 = vpop.f32.mrb[0].mxu0
      %v523 = vadd.f32 0.0, %v522
      %v524 = vpop.f32.mrb[0].mxu0
      %v525 = vpop.f32.mrb[0].mxu0
      %v526 = vpop.f32.mrb[0].mxu0
      %527 = vdwg.mxu0
      %v528 = vsel %vm303, %v523, -1e+10
      %v529 = vsel %vm251, %v528, -inf
      %530 = vmax.xlane.f32.xlu0 %v529
      %v531 = vpop.xlane.xlu0 %530
      %v532 = vsub.f32 %v528, %v531
      %v533 = vmul.f32 %v532, 1.442695
      %v534 = vpow.pop %v533
      %v535 = vsel %vm251, %v534, 0.0
      %536 = vadd.xlane.f32.xlu0 %v535
      %v537 = vpop.xlane.xlu0 %536
      %v538 = vrcp.pop %v537
      %v539 = vmul.f32 %v534, %v538
      %v540 = vpack.c.bf16 %v539, %v539
      %541 = vrot.lane.b32.xlu0 %v250, 112
      %v542 = vpop.permute.xlu0 %541
      %v544 = vsel %vm251, %v540, 0
      %v547 = vsel %vm320, %v542, 0
      %549 = vmatprep.subr.bf16.mxu0 0
      %550 = vmatpush1.bf16.msra.mxu0 %v547
      %551 = vmatprep.subr.bf16.mxu0 0
      %552 = vmatpush1.bf16.msra.mxu0 0
      %553 = vmatprep.subr.bf16.mxu0 0
      %554 = vmatpush1.bf16.msra.mxu0 0
      %555 = vmatprep.subr.bf16.mxu0 0
      %556 = vmatpush1.bf16.msra.mxu0 0
      %557 = vmatprep.subr.bf16.mxu0 0
      %558 = vmatpush1.bf16.msra.mxu0 0
      %559 = vmatprep.subr.bf16.mxu0 0
      %560 = vmatpush1.bf16.msra.mxu0 0
      %561 = vmatprep.subr.bf16.mxu0 0
      %562 = vmatpush1.bf16.msra.mxu0 0
      %563 = vmatprep.subr.bf16.mxu0 0
      %564 = vmatpush1.bf16.msra.mxu0 0
      %565 = vmatprep.subr.bf16.mxu0 0
      %566 = vmatpush1.bf16.msra.mxu0 0
      %567 = vmatprep.subr.bf16.mxu0 0
      %568 = vmatpush1.bf16.msra.mxu0 0
      %569 = vmatprep.subr.bf16.mxu0 0
      %570 = vmatpush1.bf16.msra.mxu0 0
      %571 = vmatprep.subr.bf16.mxu0 0
      %572 = vmatpush1.bf16.msra.mxu0 0
      %573 = vmatprep.subr.bf16.mxu0 0
      %574 = vmatpush1.bf16.msra.mxu0 0
      %575 = vmatprep.subr.bf16.mxu0 0
      %576 = vmatpush1.bf16.msra.mxu0 0
      %577 = vmatprep.subr.bf16.mxu0 0
      %578 = vmatpush1.bf16.msra.mxu0 0
      %579 = vmatprep.subr.bf16.mxu0 0
      %580 = vmatpush1.bf16.msra.mxu0 0
      %581 = vmatprep.mubr.bf16.mxu0 0
      %582 = vmatmul.mubr.bf16.gmra.mrb[0].mxu0 %v544
      %v583 = vpop.f32.mrb[0].mxu0
      %v584 = vadd.f32 0.0, %v583
      %v585 = vpop.f32.mrb[0].mxu0
      %v586 = vpop.f32.mrb[0].mxu0
      %v587 = vpop.f32.mrb[0].mxu0
      %588 = vdwg.mxu0
      %589 = vrot.lane.b32.xlu0 %v248, 104
      %v590 = vpop.permute.xlu0 %589
      %591 = vrot.lane.b32.xlu0 %v249, 104
      %v592 = vpop.permute.xlu0 %591
      %v594 = vsel %vm251, %v590, 0
      %v597 = vsel %vm251, %v592, 0
      %599 = vmatprep.subr.bf16.mxu0 0
      %600 = vmatpush1.bf16.xpose.msra.mxu0 %v597
      %601 = vmatprep.subr.bf16.mxu0 0
      %602 = vmatpush1.bf16.xpose.msra.mxu0 0
      %603 = vmatprep.subr.bf16.mxu0 0
      %604 = vmatpush1.bf16.xpose.msra.mxu0 0
      %605 = vmatprep.subr.bf16.mxu0 0
      %606 = vmatpush1.bf16.xpose.msra.mxu0 0
      %607 = vmatprep.subr.bf16.mxu0 0
      %608 = vmatpush1.bf16.xpose.msra.mxu0 0
      %609 = vmatprep.subr.bf16.mxu0 0
      %610 = vmatpush1.bf16.xpose.msra.mxu0 0
      %611 = vmatprep.subr.bf16.mxu0 0
      %612 = vmatpush1.bf16.xpose.msra.mxu0 0
      %613 = vmatprep.subr.bf16.mxu0 0
      %614 = vmatpush1.bf16.xpose.msra.mxu0 0
      %615 = vmatprep.subr.bf16.mxu0 0
      %616 = vmatpush1.bf16.xpose.msra.mxu0 0
      %617 = vmatprep.subr.bf16.mxu0 0
      %618 = vmatpush1.bf16.xpose.msra.mxu0 0
      %619 = vmatprep.subr.bf16.mxu0 0
      %620 = vmatpush1.bf16.xpose.msra.mxu0 0
      %621 = vmatprep.subr.bf16.mxu0 0
      %622 = vmatpush1.bf16.xpose.msra.mxu0 0
      %623 = vmatprep.subr.bf16.mxu0 0
      %624 = vmatpush1.bf16.xpose.msra.mxu0 0
      %625 = vmatprep.subr.bf16.mxu0 0
      %626 = vmatpush1.bf16.xpose.msra.mxu0 0
      %627 = vmatprep.subr.bf16.mxu0 0
      %628 = vmatpush1.bf16.xpose.msra.mxu0 0
      %629 = vmatprep.subr.bf16.mxu0 0
      %630 = vmatpush1.bf16.xpose.msra.mxu0 0
      %631 = vmatprep.mubr.bf16.mxu0 0
      %632 = vmatmul.mubr.bf16.gmra.mrb[0].mxu0 %v594
      %v633 = vpop.f32.mrb[0].mxu0
      %v634 = vadd.f32 0.0, %v633
      %v635 = vpop.f32.mrb[0].mxu0
      %v636 = vpop.f32.mrb[0].mxu0
      %v637 = vpop.f32.mrb[0].mxu0
      %638 = vdwg.mxu0
      %v639 = vsel %vm303, %v634, -1e+10
      %v640 = vsel %vm251, %v639, -inf
      %641 = vmax.xlane.f32.xlu0 %v640
      %v642 = vpop.xlane.xlu0 %641
      %v643 = vsub.f32 %v639, %v642
      %v644 = vmul.f32 %v643, 1.442695
      %v645 = vpow.pop %v644
      %v646 = vsel %vm251, %v645, 0.0
      %647 = vadd.xlane.f32.xlu0 %v646
      %v648 = vpop.xlane.xlu0 %647
      %v649 = vrcp.pop %v648
      %v650 = vmul.f32 %v645, %v649
      %v651 = vpack.c.bf16 %v650, %v650
      %652 = vrot.lane.b32.xlu0 %v250, 104
      %v653 = vpop.permute.xlu0 %652
      %v655 = vsel %vm251, %v651, 0
      %v658 = vsel %vm320, %v653, 0
      %660 = vmatprep.subr.bf16.mxu0 0
      %661 = vmatpush1.bf16.msra.mxu0 %v658
      %662 = vmatprep.subr.bf16.mxu0 0
      %663 = vmatpush1.bf16.msra.mxu0 0
      %664 = vmatprep.subr.bf16.mxu0 0
      %665 = vmatpush1.bf16.msra.mxu0 0
      %666 = vmatprep.subr.bf16.mxu0 0
      %667 = vmatpush1.bf16.msra.mxu0 0
      %668 = vmatprep.subr.bf16.mxu0 0
      %669 = vmatpush1.bf16.msra.mxu0 0
      %670 = vmatprep.subr.bf16.mxu0 0
      %671 = vmatpush1.bf16.msra.mxu0 0
      %672 = vmatprep.subr.bf16.mxu0 0
      %673 = vmatpush1.bf16.msra.mxu0 0
      %674 = vmatprep.subr.bf16.mxu0 0
      %675 = vmatpush1.bf16.msra.mxu0 0
      %676 = vmatprep.subr.bf16.mxu0 0
      %677 = vmatpush1.bf16.msra.mxu0 0
      %678 = vmatprep.subr.bf16.mxu0 0
      %679 = vmatpush1.bf16.msra.mxu0 0
      %680 = vmatprep.subr.bf16.mxu0 0
      %681 = vmatpush1.bf16.msra.mxu0 0
      %682 = vmatprep.subr.bf16.mxu0 0
      %683 = vmatpush1.bf16.msra.mxu0 0
      %684 = vmatprep.subr.bf16.mxu0 0
      %685 = vmatpush1.bf16.msra.mxu0 0
      %686 = vmatprep.subr.bf16.mxu0 0
      %687 = vmatpush1.bf16.msra.mxu0 0
      %688 = vmatprep.subr.bf16.mxu0 0
      %689 = vmatpush1.bf16.msra.mxu0 0
      %690 = vmatprep.subr.bf16.mxu0 0
      %691 = vmatpush1.bf16.msra.mxu0 0
      %692 = vmatprep.mubr.bf16.mxu0 0
      %693 = vmatmul.mubr.bf16.gmra.mrb[0].mxu0 %v655
      %v694 = vpop.f32.mrb[0].mxu0
      %v695 = vadd.f32 0.0, %v694
      %v696 = vpop.f32.mrb[0].mxu0
      %v697 = vpop.f32.mrb[0].mxu0
      %v698 = vpop.f32.mrb[0].mxu0
      %699 = vdwg.mxu0
      %701 = vrot.lane.b32.xlu0 %v473, 8
      %v702 = vpop.permute.xlu0 %701
      %705 = vrot.lane.b32.xlu0 %v584, 16
      %v706 = vpop.permute.xlu0 %705
      %709 = vrot.lane.b32.xlu0 %v695, 24
      %v710 = vpop.permute.xlu0 %709
      %v712 = vsel %vm251, %v359, %v702
      %vm713 = vcmask 130048
      %v714 = vsel %vm713, %v712, %v706
      %vm715 = vcmask 195584
      %v716 = vsel %vm715, %v714, %v710
      %vm717 = vcmask 261120
      %718 = vst.msk [vmem:[%s240] sm:$0xff] %vm717, %v716
      %p719 = scmp.lt.s32.totalorder %s15, 1
      %s720 = scalar_select %p719, %s15, 1
      %s721 = smul.addr %s720, 8
      %s722 = scalar_lea.vmem %s4, %s721
      // Predicated region
      $region37: #{seq2seq_transformer_forward.26} parent=35 // pred_check
        %p723 = pneg %p137
      $region38: #{seq2seq_transformer_forward.26} parent=35 // pred_check_branch
        %725 = sbr.rel (%p723) target = $region40
      $region39: #{seq2seq_transformer_forward.26} parent=35 // pred_region
        _
      $region40: #{seq2seq_transformer_forward.26} parent=35 // pred_fallthru
        _
    $region36: #{seq2seq_transformer_forward.26} parent=5 // pred_fallthru
      _
    %p726 = scmp.le.s32.totalorder 2, %s10
    // Predicated region
    $region41: #{seq2seq_transformer_forward.26} parent=5 // pred_check
      %p727 = pneg %p726
    $region42: #{seq2seq_transformer_forward.26} parent=5 // pred_check_branch
      %729 = sbr.rel (%p727) target = $region44
    $region43: #{seq2seq_transformer_forward.26} parent=5 // pred_region
      %s730 = ssub.s32 %s10, 2
      // Predicated region
      $region45: #{seq2seq_transformer_forward.26} parent=43 // pred_check
        %p731 = pneg %p143
      $region46: #{seq2seq_transformer_forward.26} parent=43 // pred_check_branch
        %733 = sbr.rel (%p731) target = $region48
      $region47: #{seq2seq_transformer_forward.26} parent=43 // pred_region
        %p734 = scmp.lt.s32.totalorder %s16, 1
        %s735 = scalar_select %p734, %s16, 1
        %s736 = smul.addr %s735, 8
        %s737 = scalar_lea.vmem %s4, %s736
      $region48: #{seq2seq_transformer_forward.26} parent=43 // pred_fallthru
        _
    $region44: #{seq2seq_transformer_forward.26} parent=5 // pred_fallthru
      _
  $region6: #{seq2seq_transformer_forward.26} parent=0 // loop_footer
    %s14 = sadd.s32 1, %s10
  $region7: #{seq2seq_transformer_forward.26} parent=0 // loop_footer_branch
    %9 = sbr.rel target = $region3
  $region8: #{seq2seq_transformer_forward.26} parent=0 // loop_exit
    _

// kernel: seq2seq_transformer_forward.27
$region0: #{seq2seq_transformer_forward.27}
  #allocation0 [shape = 'u32[]', space=smem, size = 0x4, offset = 0x4, fixed_abs, tag = 'smem constant byte address 0x4 - core index']
  #allocation1 [shape = 'u32[144,128]{1,0:T(1,128)}', space=vmem, size = 0x12000, scoped, tag = 'internal scratch']
  %s0 = inlined_call_operand.vmem [shape: f32[16,32], index: 0, kind: input, shape index: {}]
  %s1 = inlined_call_operand.vmem [shape: bf16[32,32], index: 1, kind: input, shape index: {}]
  %s2 = inlined_call_operand.vmem [shape: f32[1,32], index: 2, kind: input, shape index: {}]
  %s3 = inlined_call_operand.vmem [shape: f32[16,32], index: 3, kind: input, shape index: {}]
  %s4 = inlined_call_operand.vmem [shape: f32[1,32], index: 4, kind: input, shape index: {}]
  %s5 = inlined_call_operand.vmem [shape: f32[1,32], index: 5, kind: input, shape index: {}]
  %s6 = inlined_call_operand.vmem [shape: f32[16,32], index: 6, kind: output, shape index: {}]
  %s7 = sld [smem:[#allocation0]]
  $region34: #{seq2seq_transformer_forward.27} parent=0
    _
  %s9 = ssub.s32 1, %s7
  %s10 = scalar_select 0, %s9, %s7
  // Predicated region
  $region2: #{seq2seq_transformer_forward.27} parent=0 // pred_check
    _
  $region3: #{seq2seq_transformer_forward.27} parent=0 // pred_check_branch
    %12 = sbr.rel (0) target = $region5
  $region4: #{seq2seq_transformer_forward.27} parent=0 // pred_region
    _
  $region5: #{seq2seq_transformer_forward.27} parent=0 // pred_fallthru
    _
  // Predicated region
  $region6: #{seq2seq_transformer_forward.27} parent=0 // pred_check
    _
  $region7: #{seq2seq_transformer_forward.27} parent=0 // pred_check_branch
    %14 = sbr.rel (0) target = $region9
  $region8: #{seq2seq_transformer_forward.27} parent=0 // pred_region
    _
  $region9: #{seq2seq_transformer_forward.27} parent=0 // pred_fallthru
    _
  // Predicated region
  $region10: #{seq2seq_transformer_forward.27} parent=0 // pred_check
    _
  $region11: #{seq2seq_transformer_forward.27} parent=0 // pred_check_branch
    %16 = sbr.rel (0) target = $region13
  $region12: #{seq2seq_transformer_forward.27} parent=0 // pred_region
    _
  $region13: #{seq2seq_transformer_forward.27} parent=0 // pred_fallthru
    _
  // Predicated region
  $region14: #{seq2seq_transformer_forward.27} parent=0 // pred_check
    _
  $region15: #{seq2seq_transformer_forward.27} parent=0 // pred_check_branch
    %18 = sbr.rel (0) target = $region17
  $region16: #{seq2seq_transformer_forward.27} parent=0 // pred_region
    _
  $region17: #{seq2seq_transformer_forward.27} parent=0 // pred_fallthru
    _
  // Predicated region
  $region18: #{seq2seq_transformer_forward.27} parent=0 // pred_check
    _
  $region19: #{seq2seq_transformer_forward.27} parent=0 // pred_check_branch
    %20 = sbr.rel (0) target = $region21
  $region20: #{seq2seq_transformer_forward.27} parent=0 // pred_region
    _
  $region21: #{seq2seq_transformer_forward.27} parent=0 // pred_fallthru
    _
  // Predicated region
  $region22: #{seq2seq_transformer_forward.27} parent=0 // pred_check
    _
  $region23: #{seq2seq_transformer_forward.27} parent=0 // pred_check_branch
    %22 = sbr.rel (0) target = $region25
  $region24: #{seq2seq_transformer_forward.27} parent=0 // pred_region
    _
  $region25: #{seq2seq_transformer_forward.27} parent=0 // pred_fallthru
    _
  %v24 = vld [vmem:[%s0] sm:$0xff]
  %v25 = vld [vmem:[%s0 + $0x8] sm:$0xff]
  %v26 = vpack.c.bf16 %v25, %v24
  %v27 = vld [vmem:[%s1] sm:$0xf]
  %v28 = vld [vmem:[%s1 + $0x4] sm:$0xf]
  %v29 = vld [vmem:[%s1 + $0x8] sm:$0xf]
  %v30 = vld [vmem:[%s1 + $0xc] sm:$0xf]
  %v31 = vld [vmem:[%s2] sm:$0x1]
  %v33 = vlaneseq
  %v34 = vshrl.u32 %v33, 7
  %v35 = vsub.s32 0, %v34
  %v36 = vrot.slane %v31, %v35
  %v42 = vunpack.c.l.b16 %v27
  %v43 = vunpack.c.l.b16 %v28
  %v44 = vunpack.c.l.b16 %v29
  %v45 = vunpack.c.l.b16 %v30
  %v46 = vpack.c.b16 %v43, %v42
  %v47 = vpack.c.b16 %v45, %v44
  %vm50 = vcmask 261120
  %v52 = vsel %vm50, %v26, 0
  %54 = vmatprep.subr.bf16.mxu0 0
  %55 = vmatpush1.bf16.msra.mxu0 %v46
  %56 = vmatprep.subr.bf16.mxu0 0
  %57 = vmatpush1.bf16.msra.mxu0 %v47
  %58 = vmatprep.subr.bf16.mxu0 0
  %59 = vmatpush1.bf16.msra.mxu0 0
  %60 = vmatprep.subr.bf16.mxu0 0
  %61 = vmatpush1.bf16.msra.mxu0 0
  %62 = vmatprep.subr.bf16.mxu0 0
  %63 = vmatpush1.bf16.msra.mxu0 0
  %64 = vmatprep.subr.bf16.mxu0 0
  %65 = vmatpush1.bf16.msra.mxu0 0
  %66 = vmatprep.subr.bf16.mxu0 0
  %67 = vmatpush1.bf16.msra.mxu0 0
  %68 = vmatprep.subr.bf16.mxu0 0
  %69 = vmatpush1.bf16.msra.mxu0 0
  %70 = vmatprep.subr.bf16.mxu0 0
  %71 = vmatpush1.bf16.msra.mxu0 0
  %72 = vmatprep.subr.bf16.mxu0 0
  %73 = vmatpush1.bf16.msra.mxu0 0
  %74 = vmatprep.subr.bf16.mxu0 0
  %75 = vmatpush1.bf16.msra.mxu0 0
  %76 = vmatprep.subr.bf16.mxu0 0
  %77 = vmatpush1.bf16.msra.mxu0 0
  %78 = vmatprep.subr.bf16.mxu0 0
  %79 = vmatpush1.bf16.msra.mxu0 0
  %80 = vmatprep.subr.bf16.mxu0 0
  %81 = vmatpush1.bf16.msra.mxu0 0
  %82 = vmatprep.subr.bf16.mxu0 0
  %83 = vmatpush1.bf16.msra.mxu0 0
  %84 = vmatprep.subr.bf16.mxu0 0
  %85 = vmatpush1.bf16.msra.mxu0 0
  %86 = vmatprep.mubr.bf16.mxu0 0
  %87 = vmatmul.mubr.bf16.gmra.mrb[0].mxu0 %v52
  %v88 = vpop.f32.mrb[0].mxu0
  %v89 = vadd.f32 %v36, %v88
  %v90 = vpop.f32.mrb[0].mxu0
  %v91 = vpop.f32.mrb[0].mxu0
  %v92 = vadd.f32 %v36, %v91
  %v93 = vpop.f32.mrb[0].mxu0
  %94 = vdwg.mxu0
  %v95 = vld [vmem:[%s3] sm:$0xff]
  %v96 = vld [vmem:[%s3 + $0x8] sm:$0xff]
  %v97 = vadd.f32 %v89, %v95
  %v98 = vadd.f32 %v92, %v96
  %v99 = vsel %vm50, %v97, 0.0
  %100 = vadd.xlane.f32.xlu0 %v99
  %v101 = vpop.xlane.xlu0 %100
  %v102 = vsel %vm50, %v98, 0.0
  %103 = vadd.xlane.f32.xlu0 %v102
  %v104 = vpop.xlane.xlu0 %103
  %v105 = vrcp.pop 32.0
  %v106 = vmul.f32 %v101, %v105
  %v107 = vmul.f32 %v104, %v105
  %v108 = vsub.f32 %v97, %v106
  %v109 = vsub.f32 %v98, %v107
  %v110 = vmul.f32 %v108, %v108
  %v111 = vmul.f32 %v109, %v109
  %v112 = vsel %vm50, %v110, 0.0
  %113 = vadd.xlane.f32.xlu0 %v112
  %v114 = vpop.xlane.xlu0 %113
  %v115 = vsel %vm50, %v111, 0.0
  %116 = vadd.xlane.f32.xlu0 %v115
  %v117 = vpop.xlane.xlu0 %116
  %v118 = vmul.f32 %v114, %v105
  %v119 = vmul.f32 %v117, %v105
  %v120 = vadd.f32 %v118, 1e-05
  %v121 = vadd.f32 %v119, 1e-05
  %v122 = vrsqrt.pop %v120
  %v123 = vrsqrt.pop %v121
  %v124 = vmul.f32 %v108, %v122
  %v125 = vmul.f32 %v109, %v123
  %v126 = vld [vmem:[%s4] sm:$0x1]
  %v128 = vlaneseq
  %v129 = vshrl.u32 %v128, 7
  %v130 = vsub.s32 0, %v129
  %v131 = vrot.slane %v126, %v130
  %v133 = vmul.f32 %v124, %v131
  %v134 = vmul.f32 %v125, %v131
  %v135 = vld [vmem:[%s5] sm:$0x1]
  %v137 = vlaneseq
  %v138 = vshrl.u32 %v137, 7
  %v139 = vsub.s32 0, %v138
  %v140 = vrot.slane %v135, %v139
  %v142 = vadd.f32 %v133, %v140
  %v143 = vadd.f32 %v134, %v140
  %144 = vst.msk [vmem:[%s6] sm:$0xff] %vm50, %v142
  %145 = vst.msk [vmem:[%s6 + $0x8] sm:$0xff] %vm50, %v143
  // Predicated region
  $region26: #{seq2seq_transformer_forward.27} parent=0 // pred_check
    _
  $region27: #{seq2seq_transformer_forward.27} parent=0 // pred_check_branch
    %147 = sbr.rel (0) target = $region29
  $region28: #{seq2seq_transformer_forward.27} parent=0 // pred_region
    _
  $region29: #{seq2seq_transformer_forward.27} parent=0 // pred_fallthru
    _
  // Predicated region
  $region30: #{seq2seq_transformer_forward.27} parent=0 // pred_check
    _
  $region31: #{seq2seq_transformer_forward.27} parent=0 // pred_check_branch
    %149 = sbr.rel (0) target = $region33
  $region32: #{seq2seq_transformer_forward.27} parent=0 // pred_region
    _
  $region33: #{seq2seq_transformer_forward.27} parent=0 // pred_fallthru
    _

// kernel: seq2seq_transformer_forward.28
$region0: #{seq2seq_transformer_forward.28}
  #allocation0 [shape = 'u32[]', space=smem, size = 0x4, offset = 0x4, fixed_abs, tag = 'smem constant byte address 0x4 - core index']
  #allocation1 [shape = 'u32[144,128]{1,0:T(1,128)}', space=vmem, size = 0x12000, scoped, tag = 'internal scratch']
  %s0 = inlined_call_operand.vmem [shape: f32[16,32], index: 0, kind: input, shape index: {}]
  %s1 = inlined_call_operand.vmem [shape: bf16[32,64], index: 1, kind: input, shape index: {}]
  %s2 = inlined_call_operand.vmem [shape: f32[1,64], index: 2, kind: input, shape index: {}]
  %s3 = inlined_call_operand.vmem [shape: bf16[64,32], index: 3, kind: input, shape index: {}]
  %s4 = inlined_call_operand.vmem [shape: f32[1,32], index: 4, kind: input, shape index: {}]
  %s5 = inlined_call_operand.vmem [shape: f32[1,32], index: 5, kind: input, shape index: {}]
  %s6 = inlined_call_operand.vmem [shape: f32[1,32], index: 6, kind: input, shape index: {}]
  %s7 = inlined_call_operand.vmem [shape: f32[16,32], index: 7, kind: output, shape index: {}]
  %s8 = sld [smem:[#allocation0]]
  $region38: #{seq2seq_transformer_forward.28} parent=0
    _
  %s10 = ssub.s32 1, %s8
  %s11 = scalar_select 0, %s10, %s8
  // Predicated region
  $region2: #{seq2seq_transformer_forward.28} parent=0 // pred_check
    _
  $region3: #{seq2seq_transformer_forward.28} parent=0 // pred_check_branch
    %13 = sbr.rel (0) target = $region5
  $region4: #{seq2seq_transformer_forward.28} parent=0 // pred_region
    _
  $region5: #{seq2seq_transformer_forward.28} parent=0 // pred_fallthru
    _
  // Predicated region
  $region6: #{seq2seq_transformer_forward.28} parent=0 // pred_check
    _
  $region7: #{seq2seq_transformer_forward.28} parent=0 // pred_check_branch
    %15 = sbr.rel (0) target = $region9
  $region8: #{seq2seq_transformer_forward.28} parent=0 // pred_region
    _
  $region9: #{seq2seq_transformer_forward.28} parent=0 // pred_fallthru
    _
  // Predicated region
  $region10: #{seq2seq_transformer_forward.28} parent=0 // pred_check
    _
  $region11: #{seq2seq_transformer_forward.28} parent=0 // pred_check_branch
    %17 = sbr.rel (0) target = $region13
  $region12: #{seq2seq_transformer_forward.28} parent=0 // pred_region
    _
  $region13: #{seq2seq_transformer_forward.28} parent=0 // pred_fallthru
    _
  // Predicated region
  $region14: #{seq2seq_transformer_forward.28} parent=0 // pred_check
    _
  $region15: #{seq2seq_transformer_forward.28} parent=0 // pred_check_branch
    %19 = sbr.rel (0) target = $region17
  $region16: #{seq2seq_transformer_forward.28} parent=0 // pred_region
    _
  $region17: #{seq2seq_transformer_forward.28} parent=0 // pred_fallthru
    _
  // Predicated region
  $region18: #{seq2seq_transformer_forward.28} parent=0 // pred_check
    _
  $region19: #{seq2seq_transformer_forward.28} parent=0 // pred_check_branch
    %21 = sbr.rel (0) target = $region21
  $region20: #{seq2seq_transformer_forward.28} parent=0 // pred_region
    _
  $region21: #{seq2seq_transformer_forward.28} parent=0 // pred_fallthru
    _
  // Predicated region
  $region22: #{seq2seq_transformer_forward.28} parent=0 // pred_check
    _
  $region23: #{seq2seq_transformer_forward.28} parent=0 // pred_check_branch
    %23 = sbr.rel (0) target = $region25
  $region24: #{seq2seq_transformer_forward.28} parent=0 // pred_region
    _
  $region25: #{seq2seq_transformer_forward.28} parent=0 // pred_fallthru
    _
  // Predicated region
  $region26: #{seq2seq_transformer_forward.28} parent=0 // pred_check
    _
  $region27: #{seq2seq_transformer_forward.28} parent=0 // pred_check_branch
    %25 = sbr.rel (0) target = $region29
  $region28: #{seq2seq_transformer_forward.28} parent=0 // pred_region
    _
  $region29: #{seq2seq_transformer_forward.28} parent=0 // pred_fallthru
    _
  %v27 = vld [vmem:[%s0] sm:$0xff]
  %v28 = vld [vmem:[%s0 + $0x8] sm:$0xff]
  %v29 = vpack.c.bf16 %v28, %v27
  %v30 = vld [vmem:[%s1] sm:$0xf]
  %v31 = vld [vmem:[%s1 + $0x4] sm:$0xf]
  %v32 = vld [vmem:[%s1 + $0x8] sm:$0xf]
  %v33 = vld [vmem:[%s1 + $0xc] sm:$0xf]
  %v34 = vld [vmem:[%s2] sm:$0x1]
  %v36 = vlaneseq
  %v37 = vshrl.u32 %v36, 7
  %v38 = vsub.s32 0, %v37
  %v39 = vrot.slane %v34, %v38
  %v45 = vunpack.c.l.b16 %v30
  %v46 = vunpack.c.l.b16 %v31
  %v47 = vunpack.c.l.b16 %v32
  %v48 = vunpack.c.l.b16 %v33
  %v49 = vpack.c.b16 %v46, %v45
  %v50 = vpack.c.b16 %v48, %v47
  %vm53 = vcmask 261120
  %v55 = vsel %vm53, %v29, 0
  %57 = vmatprep.subr.bf16.mxu0 0
  %58 = vmatpush1.bf16.msra.mxu0 %v49
  %59 = vmatprep.subr.bf16.mxu0 0
  %60 = vmatpush1.bf16.msra.mxu0 %v50
  %61 = vmatprep.subr.bf16.mxu0 0
  %62 = vmatpush1.bf16.msra.mxu0 0
  %63 = vmatprep.subr.bf16.mxu0 0
  %64 = vmatpush1.bf16.msra.mxu0 0
  %65 = vmatprep.subr.bf16.mxu0 0
  %66 = vmatpush1.bf16.msra.mxu0 0
  %67 = vmatprep.subr.bf16.mxu0 0
  %68 = vmatpush1.bf16.msra.mxu0 0
  %69 = vmatprep.subr.bf16.mxu0 0
  %70 = vmatpush1.bf16.msra.mxu0 0
  %71 = vmatprep.subr.bf16.mxu0 0
  %72 = vmatpush1.bf16.msra.mxu0 0
  %73 = vmatprep.subr.bf16.mxu0 0
  %74 = vmatpush1.bf16.msra.mxu0 0
  %75 = vmatprep.subr.bf16.mxu0 0
  %76 = vmatpush1.bf16.msra.mxu0 0
  %77 = vmatprep.subr.bf16.mxu0 0
  %78 = vmatpush1.bf16.msra.mxu0 0
  %79 = vmatprep.subr.bf16.mxu0 0
  %80 = vmatpush1.bf16.msra.mxu0 0
  %81 = vmatprep.subr.bf16.mxu0 0
  %82 = vmatpush1.bf16.msra.mxu0 0
  %83 = vmatprep.subr.bf16.mxu0 0
  %84 = vmatpush1.bf16.msra.mxu0 0
  %85 = vmatprep.subr.bf16.mxu0 0
  %86 = vmatpush1.bf16.msra.mxu0 0
  %87 = vmatprep.subr.bf16.mxu0 0
  %88 = vmatpush1.bf16.msra.mxu0 0
  %89 = vmatprep.mubr.bf16.mxu0 0
  %90 = vmatmul.mubr.bf16.gmra.mrb[0].mxu0 %v55
  %v91 = vpop.f32.mrb[0].mxu0
  %v92 = vadd.f32 %v39, %v91
  %v93 = vpop.f32.mrb[0].mxu0
  %v94 = vpop.f32.mrb[0].mxu0
  %v95 = vadd.f32 %v39, %v94
  %v96 = vpop.f32.mrb[0].mxu0
  %97 = vdwg.mxu0
  %v98 = vmax.f32 %v92, 0.0
  %v99 = vmax.f32 %v95, 0.0
  %v100 = vpack.c.bf16 %v99, %v98
  %v101 = vld [vmem:[%s3] sm:$0xf]
  %v102 = vld [vmem:[%s3 + $0x4] sm:$0xf]
  %v103 = vld [vmem:[%s3 + $0x8] sm:$0xf]
  %v104 = vld [vmem:[%s3 + $0xc] sm:$0xf]
  %v105 = vld [vmem:[%s3 + $0x10] sm:$0xf]
  %v106 = vld [vmem:[%s3 + $0x14] sm:$0xf]
  %v107 = vld [vmem:[%s3 + $0x18] sm:$0xf]
  %v108 = vld [vmem:[%s3 + $0x1c] sm:$0xf]
  %v109 = vld [vmem:[%s4] sm:$0x1]
  %v111 = vlaneseq
  %v112 = vshrl.u32 %v111, 7
  %v113 = vsub.s32 0, %v112
  %v114 = vrot.slane %v109, %v113
  %v124 = vunpack.c.l.b16 %v101
  %v125 = vunpack.c.l.b16 %v102
  %v126 = vunpack.c.l.b16 %v103
  %v127 = vunpack.c.l.b16 %v104
  %v128 = vunpack.c.l.b16 %v105
  %v129 = vunpack.c.l.b16 %v106
  %v130 = vunpack.c.l.b16 %v107
  %v131 = vunpack.c.l.b16 %v108
  %v132 = vpack.c.b16 %v125, %v124
  %v133 = vpack.c.b16 %v127, %v126
  %v134 = vpack.c.b16 %v129, %v128
  %v135 = vpack.c.b16 %v131, %v130
  %vm140 = vcmask 523264
  %v142 = vsel %vm140, %v100, 0
  %144 = vmatprep.subr.bf16.mxu0 0
  %145 = vmatpush1.bf16.msra.mxu0 %v132
  %146 = vmatprep.subr.bf16.mxu0 0
  %147 = vmatpush1.bf16.msra.mxu0 %v133
  %148 = vmatprep.subr.bf16.mxu0 0
  %149 = vmatpush1.bf16.msra.mxu0 %v134
  %150 = vmatprep.subr.bf16.mxu0 0
  %151 = vmatpush1.bf16.msra.mxu0 %v135
  %152 = vmatprep.subr.bf16.mxu0 0
  %153 = vmatpush1.bf16.msra.mxu0 0
  %154 = vmatprep.subr.bf16.mxu0 0
  %155 = vmatpush1.bf16.msra.mxu0 0
  %156 = vmatprep.subr.bf16.mxu0 0
  %157 = vmatpush1.bf16.msra.mxu0 0
  %158 = vmatprep.subr.bf16.mxu0 0
  %159 = vmatpush1.bf16.msra.mxu0 0
  %160 = vmatprep.subr.bf16.mxu0 0
  %161 = vmatpush1.bf16.msra.mxu0 0
  %162 = vmatprep.subr.bf16.mxu0 0
  %163 = vmatpush1.bf16.msra.mxu0 0
  %164 = vmatprep.subr.bf16.mxu0 0
  %165 = vmatpush1.bf16.msra.mxu0 0
  %166 = vmatprep.subr.bf16.mxu0 0
  %167 = vmatpush1.bf16.msra.mxu0 0
  %168 = vmatprep.subr.bf16.mxu0 0
  %169 = vmatpush1.bf16.msra.mxu0 0
  %170 = vmatprep.subr.bf16.mxu0 0
  %171 = vmatpush1.bf16.msra.mxu0 0
  %172 = vmatprep.subr.bf16.mxu0 0
  %173 = vmatpush1.bf16.msra.mxu0 0
  %174 = vmatprep.subr.bf16.mxu0 0
  %175 = vmatpush1.bf16.msra.mxu0 0
  %176 = vmatprep.mubr.bf16.mxu0 0
  %177 = vmatmul.mubr.bf16.gmra.mrb[0].mxu0 %v142
  %v178 = vpop.f32.mrb[0].mxu0
  %v179 = vadd.f32 %v114, %v178
  %v180 = vpop.f32.mrb[0].mxu0
  %v181 = vpop.f32.mrb[0].mxu0
  %v182 = vadd.f32 %v114, %v181
  %v183 = vpop.f32.mrb[0].mxu0
  %184 = vdwg.mxu0
  %v185 = vadd.f32 %v179, %v27
  %v186 = vadd.f32 %v182, %v28
  %v187 = vsel %vm53, %v185, 0.0
  %188 = vadd.xlane.f32.xlu0 %v187
  %v189 = vpop.xlane.xlu0 %188
  %v190 = vsel %vm53, %v186, 0.0
  %191 = vadd.xlane.f32.xlu0 %v190
  %v192 = vpop.xlane.xlu0 %191
  %v193 = vrcp.pop 32.0
  %v194 = vmul.f32 %v189, %v193
  %v195 = vmul.f32 %v192, %v193
  %v196 = vsub.f32 %v185, %v194
  %v197 = vsub.f32 %v186, %v195
  %v198 = vmul.f32 %v196, %v196
  %v199 = vmul.f32 %v197, %v197
  %v200 = vsel %vm53, %v198, 0.0
  %201 = vadd.xlane.f32.xlu0 %v200
  %v202 = vpop.xlane.xlu0 %201
  %v203 = vsel %vm53, %v199, 0.0
  %204 = vadd.xlane.f32.xlu0 %v203
  %v205 = vpop.xlane.xlu0 %204
  %v206 = vmul.f32 %v202, %v193
  %v207 = vmul.f32 %v205, %v193
  %v208 = vadd.f32 %v206, 1e-05
  %v209 = vadd.f32 %v207, 1e-05
  %v210 = vrsqrt.pop %v208
  %v211 = vrsqrt.pop %v209
  %v212 = vmul.f32 %v196, %v210
  %v213 = vmul.f32 %v197, %v211
  %v214 = vld [vmem:[%s5] sm:$0x1]
  %v216 = vlaneseq
  %v217 = vshrl.u32 %v216, 7
  %v218 = vsub.s32 0, %v217
  %v219 = vrot.slane %v214, %v218
  %v221 = vmul.f32 %v212, %v219
  %v222 = vmul.f32 %v213, %v219
  %v223 = vld [vmem:[%s6] sm:$0x1]
  %v225 = vlaneseq
  %v226 = vshrl.u32 %v225, 7
  %v227 = vsub.s32 0, %v226
  %v228 = vrot.slane %v223, %v227
  %v230 = vadd.f32 %v221, %v228
  %v231 = vadd.f32 %v222, %v228
  %232 = vst.msk [vmem:[%s7] sm:$0xff] %vm53, %v230
  %233 = vst.msk [vmem:[%s7 + $0x8] sm:$0xff] %vm53, %v231
  // Predicated region
  $region30: #{seq2seq_transformer_forward.28} parent=0 // pred_check
    _
  $region31: #{seq2seq_transformer_forward.28} parent=0 // pred_check_branch
    %235 = sbr.rel (0) target = $region33
  $region32: #{seq2seq_transformer_forward.28} parent=0 // pred_region
    _
  $region33: #{seq2seq_transformer_forward.28} parent=0 // pred_fallthru
    _
  // Predicated region
  $region34: #{seq2seq_transformer_forward.28} parent=0 // pred_check
    _
  $region35: #{seq2seq_transformer_forward.28} parent=0 // pred_check_branch
    %237 = sbr.rel (0) target = $region37
  $region36: #{seq2seq_transformer_forward.28} parent=0 // pred_region
    _
  $region37: #{seq2seq_transformer_forward.28} parent=0 // pred_fallthru
    _

// kernel: seq2seq_transformer_forward.37
$region0: #{seq2seq_transformer_forward.37}
  #allocation0 [shape = 'u32[]', space=smem, size = 0x4, offset = 0x4, fixed_abs, tag = 'smem constant byte address 0x4 - core index']
  #allocation1 [shape = 'u32[144,128]{1,0:T(1,128)}', space=vmem, size = 0x12000, scoped, tag = 'internal scratch']
  %s0 = inlined_call_operand.vmem [shape: f32[16,32], index: 0, kind: input, shape index: {}]
  %s1 = inlined_call_operand.vmem [shape: bf16[32,64], index: 1, kind: input, shape index: {}]
  %s2 = inlined_call_operand.vmem [shape: f32[1,64], index: 2, kind: input, shape index: {}]
  %s3 = inlined_call_operand.vmem [shape: f32[16,64], index: 3, kind: output, shape index: {}]
  %s4 = sld [smem:[#allocation0]]
  $region22: #{seq2seq_transformer_forward.37} parent=0
    _
  %s6 = ssub.s32 1, %s4
  %s7 = scalar_select 0, %s6, %s4
  // Predicated region
  $region2: #{seq2seq_transformer_forward.37} parent=0 // pred_check
    _
  $region3: #{seq2seq_transformer_forward.37} parent=0 // pred_check_branch
    %9 = sbr.rel (0) target = $region5
  $region4: #{seq2seq_transformer_forward.37} parent=0 // pred_region
    _
  $region5: #{seq2seq_transformer_forward.37} parent=0 // pred_fallthru
    _
  // Predicated region
  $region6: #{seq2seq_transformer_forward.37} parent=0 // pred_check
    _
  $region7: #{seq2seq_transformer_forward.37} parent=0 // pred_check_branch
    %11 = sbr.rel (0) target = $region9
  $region8: #{seq2seq_transformer_forward.37} parent=0 // pred_region
    _
  $region9: #{seq2seq_transformer_forward.37} parent=0 // pred_fallthru
    _
  // Predicated region
  $region10: #{seq2seq_transformer_forward.37} parent=0 // pred_check
    _
  $region11: #{seq2seq_transformer_forward.37} parent=0 // pred_check_branch
    %13 = sbr.rel (0) target = $region13
  $region12: #{seq2seq_transformer_forward.37} parent=0 // pred_region
    _
  $region13: #{seq2seq_transformer_forward.37} parent=0 // pred_fallthru
    _
  %v15 = vld [vmem:[%s0] sm:$0xff]
  %v16 = vld [vmem:[%s0 + $0x8] sm:$0xff]
  %v17 = vpack.c.bf16 %v16, %v15
  %v18 = vld [vmem:[%s1] sm:$0xf]
  %v19 = vld [vmem:[%s1 + $0x4] sm:$0xf]
  %v20 = vld [vmem:[%s1 + $0x8] sm:$0xf]
  %v21 = vld [vmem:[%s1 + $0xc] sm:$0xf]
  %v22 = vld [vmem:[%s2] sm:$0x1]
  %v24 = vlaneseq
  %v25 = vshrl.u32 %v24, 7
  %v26 = vsub.s32 0, %v25
  %v27 = vrot.slane %v22, %v26
  %v33 = vunpack.c.l.b16 %v18
  %v34 = vunpack.c.l.b16 %v19
  %v35 = vunpack.c.l.b16 %v20
  %v36 = vunpack.c.l.b16 %v21
  %v37 = vpack.c.b16 %v34, %v33
  %v38 = vpack.c.b16 %v36, %v35
  %vm41 = vcmask 261120
  %v43 = vsel %vm41, %v17, 0
  %45 = vmatprep.subr.bf16.mxu0 0
  %46 = vmatpush1.bf16.msra.mxu0 %v37
  %47 = vmatprep.subr.bf16.mxu0 0
  %48 = vmatpush1.bf16.msra.mxu0 %v38
  %49 = vmatprep.subr.bf16.mxu0 0
  %50 = vmatpush1.bf16.msra.mxu0 0
  %51 = vmatprep.subr.bf16.mxu0 0
  %52 = vmatpush1.bf16.msra.mxu0 0
  %53 = vmatprep.subr.bf16.mxu0 0
  %54 = vmatpush1.bf16.msra.mxu0 0
  %55 = vmatprep.subr.bf16.mxu0 0
  %56 = vmatpush1.bf16.msra.mxu0 0
  %57 = vmatprep.subr.bf16.mxu0 0
  %58 = vmatpush1.bf16.msra.mxu0 0
  %59 = vmatprep.subr.bf16.mxu0 0
  %60 = vmatpush1.bf16.msra.mxu0 0
  %61 = vmatprep.subr.bf16.mxu0 0
  %62 = vmatpush1.bf16.msra.mxu0 0
  %63 = vmatprep.subr.bf16.mxu0 0
  %64 = vmatpush1.bf16.msra.mxu0 0
  %65 = vmatprep.subr.bf16.mxu0 0
  %66 = vmatpush1.bf16.msra.mxu0 0
  %67 = vmatprep.subr.bf16.mxu0 0
  %68 = vmatpush1.bf16.msra.mxu0 0
  %69 = vmatprep.subr.bf16.mxu0 0
  %70 = vmatpush1.bf16.msra.mxu0 0
  %71 = vmatprep.subr.bf16.mxu0 0
  %72 = vmatpush1.bf16.msra.mxu0 0
  %73 = vmatprep.subr.bf16.mxu0 0
  %74 = vmatpush1.bf16.msra.mxu0 0
  %75 = vmatprep.subr.bf16.mxu0 0
  %76 = vmatpush1.bf16.msra.mxu0 0
  %77 = vmatprep.mubr.bf16.mxu0 0
  %78 = vmatmul.mubr.bf16.gmra.mrb[0].mxu0 %v43
  %v79 = vpop.f32.mrb[0].mxu0
  %v80 = vadd.f32 %v27, %v79
  %v81 = vpop.f32.mrb[0].mxu0
  %v82 = vpop.f32.mrb[0].mxu0
  %v83 = vadd.f32 %v27, %v82
  %v84 = vpop.f32.mrb[0].mxu0
  %85 = vdwg.mxu0
  %vm86 = vcmask 523264
  %87 = vst.msk [vmem:[%s3] sm:$0xff] %vm86, %v80
  %88 = vst.msk [vmem:[%s3 + $0x8] sm:$0xff] %vm86, %v83
  // Predicated region
  $region14: #{seq2seq_transformer_forward.37} parent=0 // pred_check
    _
  $region15: #{seq2seq_transformer_forward.37} parent=0 // pred_check_branch
    %90 = sbr.rel (0) target = $region17
  $region16: #{seq2seq_transformer_forward.37} parent=0 // pred_region
    _
  $region17: #{seq2seq_transformer_forward.37} parent=0 // pred_fallthru
    _
  // Predicated region
  $region18: #{seq2seq_transformer_forward.37} parent=0 // pred_check
    _
  $region19: #{seq2seq_transformer_forward.37} parent=0 // pred_check_branch
    %92 = sbr.rel (0) target = $region21
  $region20: #{seq2seq_transformer_forward.37} parent=0 // pred_region
    _
  $region21: #{seq2seq_transformer_forward.37} parent=0 // pred_fallthru
    _

// kernel: seq2seq_transformer_forward.36
$region0: #{seq2seq_transformer_forward.36}
  #allocation0 [shape = 'u32[]', space=smem, size = 0x4, offset = 0x4, fixed_abs, tag = 'smem constant byte address 0x4 - core index']
  #allocation1 [shape = 'u32[144,128]{1,0:T(1,128)}', space=vmem, size = 0x12000, scoped, tag = 'internal scratch']
  %s0 = inlined_call_operand.vmem [shape: f32[16,32], index: 0, kind: input, shape index: {}]
  %s1 = inlined_call_operand.vmem [shape: bf16[32,32], index: 1, kind: input, shape index: {}]
  %s2 = inlined_call_operand.vmem [shape: f32[1,32], index: 2, kind: input, shape index: {}]
  %s3 = inlined_call_operand.vmem [shape: f32[16,32], index: 3, kind: output, shape index: {}]
  %s4 = sld [smem:[#allocation0]]
  $region22: #{seq2seq_transformer_forward.36} parent=0
    _
  %s6 = ssub.s32 1, %s4
  %s7 = scalar_select 0, %s6, %s4
  // Predicated region
  $region2: #{seq2seq_transformer_forward.36} parent=0 // pred_check
    _
  $region3: #{seq2seq_transformer_forward.36} parent=0 // pred_check_branch
    %9 = sbr.rel (0) target = $region5
  $region4: #{seq2seq_transformer_forward.36} parent=0 // pred_region
    _
  $region5: #{seq2seq_transformer_forward.36} parent=0 // pred_fallthru
    _
  // Predicated region
  $region6: #{seq2seq_transformer_forward.36} parent=0 // pred_check
    _
  $region7: #{seq2seq_transformer_forward.36} parent=0 // pred_check_branch
    %11 = sbr.rel (0) target = $region9
  $region8: #{seq2seq_transformer_forward.36} parent=0 // pred_region
    _
  $region9: #{seq2seq_transformer_forward.36} parent=0 // pred_fallthru
    _
  // Predicated region
  $region10: #{seq2seq_transformer_forward.36} parent=0 // pred_check
    _
  $region11: #{seq2seq_transformer_forward.36} parent=0 // pred_check_branch
    %13 = sbr.rel (0) target = $region13
  $region12: #{seq2seq_transformer_forward.36} parent=0 // pred_region
    _
  $region13: #{seq2seq_transformer_forward.36} parent=0 // pred_fallthru
    _
  %v15 = vld [vmem:[%s0] sm:$0xff]
  %v16 = vld [vmem:[%s0 + $0x8] sm:$0xff]
  %v17 = vpack.c.bf16 %v16, %v15
  %v18 = vld [vmem:[%s1] sm:$0xf]
  %v19 = vld [vmem:[%s1 + $0x4] sm:$0xf]
  %v20 = vld [vmem:[%s1 + $0x8] sm:$0xf]
  %v21 = vld [vmem:[%s1 + $0xc] sm:$0xf]
  %v22 = vld [vmem:[%s2] sm:$0x1]
  %v24 = vlaneseq
  %v25 = vshrl.u32 %v24, 7
  %v26 = vsub.s32 0, %v25
  %v27 = vrot.slane %v22, %v26
  %v33 = vunpack.c.l.b16 %v18
  %v34 = vunpack.c.l.b16 %v19
  %v35 = vunpack.c.l.b16 %v20
  %v36 = vunpack.c.l.b16 %v21
  %v37 = vpack.c.b16 %v34, %v33
  %v38 = vpack.c.b16 %v36, %v35
  %vm41 = vcmask 261120
  %v43 = vsel %vm41, %v17, 0
  %45 = vmatprep.subr.bf16.mxu0 0
  %46 = vmatpush1.bf16.msra.mxu0 %v37
  %47 = vmatprep.subr.bf16.mxu0 0
  %48 = vmatpush1.bf16.msra.mxu0 %v38
  %49 = vmatprep.subr.bf16.mxu0 0
  %50 = vmatpush1.bf16.msra.mxu0 0
  %51 = vmatprep.subr.bf16.mxu0 0
  %52 = vmatpush1.bf16.msra.mxu0 0
  %53 = vmatprep.subr.bf16.mxu0 0
  %54 = vmatpush1.bf16.msra.mxu0 0
  %55 = vmatprep.subr.bf16.mxu0 0
  %56 = vmatpush1.bf16.msra.mxu0 0
  %57 = vmatprep.subr.bf16.mxu0 0
  %58 = vmatpush1.bf16.msra.mxu0 0
  %59 = vmatprep.subr.bf16.mxu0 0
  %60 = vmatpush1.bf16.msra.mxu0 0
  %61 = vmatprep.subr.bf16.mxu0 0
  %62 = vmatpush1.bf16.msra.mxu0 0
  %63 = vmatprep.subr.bf16.mxu0 0
  %64 = vmatpush1.bf16.msra.mxu0 0
  %65 = vmatprep.subr.bf16.mxu0 0
  %66 = vmatpush1.bf16.msra.mxu0 0
  %67 = vmatprep.subr.bf16.mxu0 0
  %68 = vmatpush1.bf16.msra.mxu0 0
  %69 = vmatprep.subr.bf16.mxu0 0
  %70 = vmatpush1.bf16.msra.mxu0 0
  %71 = vmatprep.subr.bf16.mxu0 0
  %72 = vmatpush1.bf16.msra.mxu0 0
  %73 = vmatprep.subr.bf16.mxu0 0
  %74 = vmatpush1.bf16.msra.mxu0 0
  %75 = vmatprep.subr.bf16.mxu0 0
  %76 = vmatpush1.bf16.msra.mxu0 0
  %77 = vmatprep.mubr.bf16.mxu0 0
  %78 = vmatmul.mubr.bf16.gmra.mrb[0].mxu0 %v43
  %v79 = vpop.f32.mrb[0].mxu0
  %v80 = vadd.f32 %v27, %v79
  %v81 = vpop.f32.mrb[0].mxu0
  %v82 = vpop.f32.mrb[0].mxu0
  %v83 = vadd.f32 %v27, %v82
  %v84 = vpop.f32.mrb[0].mxu0
  %85 = vdwg.mxu0
  %86 = vst.msk [vmem:[%s3] sm:$0xff] %vm41, %v80
  %87 = vst.msk [vmem:[%s3 + $0x8] sm:$0xff] %vm41, %v83
  // Predicated region
  $region14: #{seq2seq_transformer_forward.36} parent=0 // pred_check
    _
  $region15: #{seq2seq_transformer_forward.36} parent=0 // pred_check_branch
    %89 = sbr.rel (0) target = $region17
  $region16: #{seq2seq_transformer_forward.36} parent=0 // pred_region
    _
  $region17: #{seq2seq_transformer_forward.36} parent=0 // pred_fallthru
    _
  // Predicated region
  $region18: #{seq2seq_transformer_forward.36} parent=0 // pred_check
    _
  $region19: #{seq2seq_transformer_forward.36} parent=0 // pred_check_branch
    %91 = sbr.rel (0) target = $region21
  $region20: #{seq2seq_transformer_forward.36} parent=0 // pred_region
    _
  $region21: #{seq2seq_transformer_forward.36} parent=0 // pred_fallthru
    _

// kernel: seq2seq_transformer_forward.34
$region0: #{seq2seq_transformer_forward.34}
  #allocation0 [shape = 'u32[]', space=smem, size = 0x4, offset = 0x4, fixed_abs, tag = 'smem constant byte address 0x4 - core index']
  #allocation1 [shape = 'u32[144,128]{1,0:T(1,128)}', space=vmem, size = 0x12000, scoped, tag = 'internal scratch']
  %s0 = inlined_call_operand.vmem [shape: f32[2,8,32], index: 0, kind: input, shape index: {}]
  %s1 = inlined_call_operand.vmem [shape: f32[2,8,32], index: 1, kind: input, shape index: {}]
  %s2 = inlined_call_operand.vmem [shape: f32[2,8,32], index: 2, kind: input, shape index: {}]
  %s3 = inlined_call_operand.vmem [shape: f32[2,8,8], index: 3, kind: input, shape index: {}]
  %s4 = inlined_call_operand.vmem [shape: f32[2,8,32], index: 4, kind: output, shape index: {}]
  %s5 = sld [smem:[#allocation0]]
  $region49: #{seq2seq_transformer_forward.34} parent=0
    _
  %s7 = ssub.s32 1, %s5
  %s8 = scalar_select 0, %s7, %s5
  loop: start=0, step=1, limit=4
  $region2: #{seq2seq_transformer_forward.34} parent=0 // loop_pre_header
    _
  $region3: #{seq2seq_transformer_forward.34} parent=0 // loop_header
    %s10 = sphi 0, %s14
    %p11 = scmp.ge.s32.totalorder %s10, 4
    %s20 = sphi 0, %s22
    %s23 = sphi 0, %s20
    %s24 = sphi 0, %s23
    %s40 = sphi 0, %s24
    %s46 = sphi 0, %s48
    %s49 = sphi 0, %s46
    %s50 = sphi 0, %s49
    %s66 = sphi 0, %s50
    %s72 = sphi 0, %s74
    %s75 = sphi 0, %s72
    %s76 = sphi 0, %s75
    %s92 = sphi 0, %s76
    %s98 = sphi 0, %s100
    %s101 = sphi 0, %s98
    %s102 = sphi 0, %s101
    %s118 = sphi 0, %s102
    %s124 = sphi 0, %s126
    %s127 = sphi 0, %s124
    %s128 = sphi 0, %s127
    %s144 = sphi 0, %s128
  $region4: #{seq2seq_transformer_forward.34} parent=0 // loop_header_branch
    %13 = sbr.rel (%p11) target = $region8
  $region5: #{seq2seq_transformer_forward.34} parent=0 // loop_body
    %s15 = ssub.s32 %s10, 1
    %s16 = ssub.s32 %s10, 2
    %s17 = sadd.s32 %s10, 1
    %s18 = ssub.s32 %s10, %s17
    %p19 = scmp.eq.s32.totalorder %s18, 0
    %s21 = sadd.s32 %s20, 1
    %s22 = scalar_select %p19, %s20, %s21
    %p25 = pneg %p19
    %p26 = scmp.eq.s32.totalorder %s10, 1
    %p27 = por %p25, %p26
    %p28 = scmp.ne.s32.totalorder %s20, %s23
    %p29 = scmp.eq.s32.totalorder %s10, 0
    %p30 = por %p28, %p29
    %p31 = scmp.ne.s32.totalorder %s20, %s23
    %p32 = scmp.eq.s32.totalorder %s15, 1
    %p33 = por %p31, %p32
    %p34 = scmp.ne.s32.totalorder %s23, %s24
    %p35 = scmp.eq.s32.totalorder %s15, 0
    %p36 = por %p34, %p35
    %p37 = scmp.ne.s32.totalorder %s23, %s24
    %p38 = scmp.eq.s32.totalorder %s16, 1
    %p39 = por %p37, %p38
    %p41 = scmp.ne.s32.totalorder %s24, %s40
    %p42 = scmp.eq.s32.totalorder %s16, 0
    %p43 = por %p41, %p42
    %s44 = ssub.s32 %s10, %s17
    %p45 = scmp.eq.s32.totalorder %s44, 0
    %s47 = sadd.s32 %s46, 1
    %s48 = scalar_select %p45, %s46, %s47
    %p51 = pneg %p45
    %p52 = scmp.eq.s32.totalorder %s10, 1
    %p53 = por %p51, %p52
    %p54 = scmp.ne.s32.totalorder %s46, %s49
    %p55 = scmp.eq.s32.totalorder %s10, 0
    %p56 = por %p54, %p55
    %p57 = scmp.ne.s32.totalorder %s46, %s49
    %p58 = scmp.eq.s32.totalorder %s15, 1
    %p59 = por %p57, %p58
    %p60 = scmp.ne.s32.totalorder %s49, %s50
    %p61 = scmp.eq.s32.totalorder %s15, 0
    %p62 = por %p60, %p61
    %p63 = scmp.ne.s32.totalorder %s49, %s50
    %p64 = scmp.eq.s32.totalorder %s16, 1
    %p65 = por %p63, %p64
    %p67 = scmp.ne.s32.totalorder %s50, %s66
    %p68 = scmp.eq.s32.totalorder %s16, 0
    %p69 = por %p67, %p68
    %s70 = ssub.s32 %s10, %s17
    %p71 = scmp.eq.s32.totalorder %s70, 0
    %s73 = sadd.s32 %s72, 1
    %s74 = scalar_select %p71, %s72, %s73
    %p77 = pneg %p71
    %p78 = scmp.eq.s32.totalorder %s10, 1
    %p79 = por %p77, %p78
    %p80 = scmp.ne.s32.totalorder %s72, %s75
    %p81 = scmp.eq.s32.totalorder %s10, 0
    %p82 = por %p80, %p81
    %p83 = scmp.ne.s32.totalorder %s72, %s75
    %p84 = scmp.eq.s32.totalorder %s15, 1
    %p85 = por %p83, %p84
    %p86 = scmp.ne.s32.totalorder %s75, %s76
    %p87 = scmp.eq.s32.totalorder %s15, 0
    %p88 = por %p86, %p87
    %p89 = scmp.ne.s32.totalorder %s75, %s76
    %p90 = scmp.eq.s32.totalorder %s16, 1
    %p91 = por %p89, %p90
    %p93 = scmp.ne.s32.totalorder %s76, %s92
    %p94 = scmp.eq.s32.totalorder %s16, 0
    %p95 = por %p93, %p94
    %s96 = ssub.s32 %s10, %s17
    %p97 = scmp.eq.s32.totalorder %s96, 0
    %s99 = sadd.s32 %s98, 1
    %s100 = scalar_select %p97, %s98, %s99
    %p103 = pneg %p97
    %p104 = scmp.eq.s32.totalorder %s10, 1
    %p105 = por %p103, %p104
    %p106 = scmp.ne.s32.totalorder %s98, %s101
    %p107 = scmp.eq.s32.totalorder %s10, 0
    %p108 = por %p106, %p107
    %p109 = scmp.ne.s32.totalorder %s98, %s101
    %p110 = scmp.eq.s32.totalorder %s15, 1
    %p111 = por %p109, %p110
    %p112 = scmp.ne.s32.totalorder %s101, %s102
    %p113 = scmp.eq.s32.totalorder %s15, 0
    %p114 = por %p112, %p113
    %p115 = scmp.ne.s32.totalorder %s101, %s102
    %p116 = scmp.eq.s32.totalorder %s16, 1
    %p117 = por %p115, %p116
    %p119 = scmp.ne.s32.totalorder %s102, %s118
    %p120 = scmp.eq.s32.totalorder %s16, 0
    %p121 = por %p119, %p120
    %s122 = ssub.s32 %s10, %s17
    %p123 = scmp.eq.s32.totalorder %s122, 0
    %s125 = sadd.s32 %s124, 1
    %s126 = scalar_select %p123, %s124, %s125
    %p129 = pneg %p123
    %p130 = scmp.eq.s32.totalorder %s10, 1
    %p131 = por %p129, %p130
    %p132 = scmp.ne.s32.totalorder %s124, %s127
    %p133 = scmp.eq.s32.totalorder %s10, 0
    %p134 = por %p132, %p133
    %p135 = scmp.ne.s32.totalorder %s124, %s127
    %p136 = scmp.eq.s32.totalorder %s15, 1
    %p137 = por %p135, %p136
    %p138 = scmp.ne.s32.totalorder %s127, %s128
    %p139 = scmp.eq.s32.totalorder %s15, 0
    %p140 = por %p138, %p139
    %p141 = scmp.ne.s32.totalorder %s127, %s128
    %p142 = scmp.eq.s32.totalorder %s16, 1
    %p143 = por %p141, %p142
    %p145 = scmp.ne.s32.totalorder %s128, %s144
    %p146 = scmp.eq.s32.totalorder %s16, 0
    %p147 = por %p145, %p146
    %p148 = scmp.le.s32.totalorder 1, %s10
    %p149 = scmp.lt.s32.totalorder %s10, 3
    %p150 = pnand %p148, %p149
    %p151 = pneg %p150
    // Predicated region
    $region9: #{seq2seq_transformer_forward.34} parent=5 // pred_check
      _
    $region10: #{seq2seq_transformer_forward.34} parent=5 // pred_check_branch
      %153 = sbr.rel (%p150) target = $region12
    $region11: #{seq2seq_transformer_forward.34} parent=5 // pred_region
      %s154 = ssub.s32 %s10, 1
    $region12: #{seq2seq_transformer_forward.34} parent=5 // pred_fallthru
      _
    %p155 = scmp.lt.s32.totalorder %s10, 2
    // Predicated region
    $region13: #{seq2seq_transformer_forward.34} parent=5 // pred_check
      %p156 = pneg %p155
    $region14: #{seq2seq_transformer_forward.34} parent=5 // pred_check_branch
      %158 = sbr.rel (%p156) target = $region16
    $region15: #{seq2seq_transformer_forward.34} parent=5 // pred_region
      // Predicated region
      $region17: #{seq2seq_transformer_forward.34} parent=15 // pred_check
        %p159 = pneg %p30
      $region18: #{seq2seq_transformer_forward.34} parent=15 // pred_check_branch
        %161 = sbr.rel (%p159) target = $region20
      $region19: #{seq2seq_transformer_forward.34} parent=15 // pred_region
        %p162 = scmp.lt.s32.totalorder %s10, 1
        %s163 = scalar_select %p162, %s10, 1
        %s164 = smul.addr %s163, 8
        %s165 = scalar_lea.vmem %s0, %s164
      $region20: #{seq2seq_transformer_forward.34} parent=15 // pred_fallthru
        _
      // Predicated region
      $region21: #{seq2seq_transformer_forward.34} parent=15 // pred_check
        %p166 = pneg %p56
      $region22: #{seq2seq_transformer_forward.34} parent=15 // pred_check_branch
        %168 = sbr.rel (%p166) target = $region24
      $region23: #{seq2seq_transformer_forward.34} parent=15 // pred_region
        %p169 = scmp.lt.s32.totalorder %s10, 1
        %s170 = scalar_select %p169, %s10, 1
        %s171 = smul.addr %s170, 8
        %s172 = scalar_lea.vmem %s1, %s171
      $region24: #{seq2seq_transformer_forward.34} parent=15 // pred_fallthru
        _
      // Predicated region
      $region25: #{seq2seq_transformer_forward.34} parent=15 // pred_check
        %p173 = pneg %p82
      $region26: #{seq2seq_transformer_forward.34} parent=15 // pred_check_branch
        %175 = sbr.rel (%p173) target = $region28
      $region27: #{seq2seq_transformer_forward.34} parent=15 // pred_region
        %p176 = scmp.lt.s32.totalorder %s10, 1
        %s177 = scalar_select %p176, %s10, 1
        %s178 = smul.addr %s177, 8
        %s179 = scalar_lea.vmem %s2, %s178
      $region28: #{seq2seq_transformer_forward.34} parent=15 // pred_fallthru
        _
      // Predicated region
      $region29: #{seq2seq_transformer_forward.34} parent=15 // pred_check
        %p180 = pneg %p108
      $region30: #{seq2seq_transformer_forward.34} parent=15 // pred_check_branch
        %182 = sbr.rel (%p180) target = $region32
      $region31: #{seq2seq_transformer_forward.34} parent=15 // pred_region
        %p183 = scmp.lt.s32.totalorder %s10, 1
        %s184 = scalar_select %p183, %s10, 1
        %s185 = smul.addr %s184, 8
        %s186 = scalar_lea.vmem %s3, %s185
      $region32: #{seq2seq_transformer_forward.34} parent=15 // pred_fallthru
        _
    $region16: #{seq2seq_transformer_forward.34} parent=5 // pred_fallthru
      _
    %p187 = scmp.le.s32.totalorder 1, %s10
    %p188 = scmp.lt.s32.totalorder %s10, 3
    %p189 = pnand %p187, %p188
    %p190 = pneg %p189
    // Predicated region
    $region33: #{seq2seq_transformer_forward.34} parent=5 // pred_check
      _
    $region34: #{seq2seq_transformer_forward.34} parent=5 // pred_check_branch
      %192 = sbr.rel (%p189) target = $region36
    $region35: #{seq2seq_transformer_forward.34} parent=5 // pred_region
      %s193 = ssub.s32 %s10, 1
      %p194 = scmp.lt.s32.totalorder %s15, 1
      %s195 = scalar_select %p194, %s15, 1
      %s196 = smul.addr %s195, 8
      %s197 = scalar_lea.vmem %s0, %s196
      %p198 = pneg %p36
      %p199 = pneg %p33
      %p200 = scmp.lt.s32.totalorder %s15, 1
      %s201 = scalar_select %p200, %s15, 1
      %s202 = smul.addr %s201, 8
      %s203 = scalar_lea.vmem %s1, %s202
      %p204 = pneg %p62
      %p205 = pneg %p59
      %p206 = scmp.lt.s32.totalorder %s15, 1
      %s207 = scalar_select %p206, %s15, 1
      %s208 = smul.addr %s207, 8
      %s209 = scalar_lea.vmem %s2, %s208
      %p210 = pneg %p88
      %p211 = pneg %p85
      %p212 = scmp.lt.s32.totalorder %s15, 1
      %s213 = scalar_select %p212, %s15, 1
      %s214 = smul.addr %s213, 8
      %s215 = scalar_lea.vmem %s3, %s214
      %p216 = pneg %p114
      %p217 = pneg %p111
      %p218 = pneg %p140
      %p219 = pneg %p137
      %p220 = scmp.lt.s32.totalorder %s15, 1
      %s221 = scalar_select %p220, %s15, 1
      %s222 = smul.addr %s221, 8
      %s223 = scalar_lea.vmem %s4, %s222
      %p224 = scmp.lt.s32.totalorder %s15, 1
      %s225 = scalar_select %p224, %s15, 1
      %s226 = smul.addr %s225, 8
      %s227 = scalar_lea.vmem %s0, %s226
      %p228 = scmp.lt.s32.totalorder %s15, 1
      %s229 = scalar_select %p228, %s15, 1
      %s230 = smul.addr %s229, 8
      %s231 = scalar_lea.vmem %s1, %s230
      %p232 = scmp.lt.s32.totalorder %s15, 1
      %s233 = scalar_select %p232, %s15, 1
      %s234 = smul.addr %s233, 8
      %s235 = scalar_lea.vmem %s2, %s234
      %p236 = scmp.lt.s32.totalorder %s15, 1
      %s237 = scalar_select %p236, %s15, 1
      %s238 = smul.addr %s237, 8
      %s239 = scalar_lea.vmem %s3, %s238
      %p240 = scmp.lt.s32.totalorder %s15, 1
      %s241 = scalar_select %p240, %s15, 1
      %s242 = smul.addr %s241, 8
      %s243 = scalar_lea.vmem %s4, %s242
      %v245 = vld [vmem:[%s227] sm:$0xff]
      %v246 = vmul.f32 %v245, 0.35355338
      %v247 = vld [vmem:[%s231] sm:$0xff]
      %v248 = vld [vmem:[%s235] sm:$0xff]
      %v249 = vld [vmem:[%s239] sm:$0xff]
      %vm250 = vcmp.gt.f32.partialorder %v249, 0.0
      %v251 = vpack.c.bf16 %v246, %v246
      %v252 = vpack.c.bf16 %v247, %v247
      %v253 = vpack.c.bf16 %v248, %v248
      %vm254 = vcmask 64512
      %v256 = vsel %vm254, %v251, 0
      %v259 = vsel %vm254, %v252, 0
      %261 = vmatprep.subr.bf16.mxu0 0
      %262 = vmatpush1.bf16.xpose.msra.mxu0 %v259
      %263 = vmatprep.subr.bf16.mxu0 0
      %264 = vmatpush1.bf16.xpose.msra.mxu0 0
      %265 = vmatprep.subr.bf16.mxu0 0
      %266 = vmatpush1.bf16.xpose.msra.mxu0 0
      %267 = vmatprep.subr.bf16.mxu0 0
      %268 = vmatpush1.bf16.xpose.msra.mxu0 0
      %269 = vmatprep.subr.bf16.mxu0 0
      %270 = vmatpush1.bf16.xpose.msra.mxu0 0
      %271 = vmatprep.subr.bf16.mxu0 0
      %272 = vmatpush1.bf16.xpose.msra.mxu0 0
      %273 = vmatprep.subr.bf16.mxu0 0
      %274 = vmatpush1.bf16.xpose.msra.mxu0 0
      %275 = vmatprep.subr.bf16.mxu0 0
      %276 = vmatpush1.bf16.xpose.msra.mxu0 0
      %277 = vmatprep.subr.bf16.mxu0 0
      %278 = vmatpush1.bf16.xpose.msra.mxu0 0
      %279 = vmatprep.subr.bf16.mxu0 0
      %280 = vmatpush1.bf16.xpose.msra.mxu0 0
      %281 = vmatprep.subr.bf16.mxu0 0
      %282 = vmatpush1.bf16.xpose.msra.mxu0 0
      %283 = vmatprep.subr.bf16.mxu0 0
      %284 = vmatpush1.bf16.xpose.msra.mxu0 0
      %285 = vmatprep.subr.bf16.mxu0 0
      %286 = vmatpush1.bf16.xpose.msra.mxu0 0
      %287 = vmatprep.subr.bf16.mxu0 0
      %288 = vmatpush1.bf16.xpose.msra.mxu0 0
      %289 = vmatprep.subr.bf16.mxu0 0
      %290 = vmatpush1.bf16.xpose.msra.mxu0 0
      %291 = vmatprep.subr.bf16.mxu0 0
      %292 = vmatpush1.bf16.xpose.msra.mxu0 0
      %293 = vmatprep.mubr.bf16.mxu0 0
      %294 = vmatmul.mubr.bf16.gmra.mrb[0].mxu0 %v256
      %v295 = vpop.f32.mrb[0].mxu0
      %v296 = vadd.f32 0.0, %v295
      %v297 = vpop.f32.mrb[0].mxu0
      %v298 = vpop.f32.mrb[0].mxu0
      %v299 = vpop.f32.mrb[0].mxu0
      %300 = vdwg.mxu0
      %v301 = vsel %vm250, %v296, -1e+10
      %v302 = vsel %vm254, %v301, -inf
      %303 = vmax.xlane.f32.xlu0 %v302
      %v304 = vpop.xlane.xlu0 %303
      %v305 = vsub.f32 %v301, %v304
      %v306 = vmul.f32 %v305, 1.442695
      %v307 = vpow.pop %v306
      %v308 = vsel %vm254, %v307, 0.0
      %309 = vadd.xlane.f32.xlu0 %v308
      %v310 = vpop.xlane.xlu0 %309
      %v311 = vrcp.pop %v310
      %v312 = vmul.f32 %v307, %v311
      %v313 = vpack.c.bf16 %v312, %v312
      %v315 = vsel %vm254, %v313, 0
      %vm317 = vcmask 1043456
      %v319 = vsel %vm317, %v253, 0
      %321 = vmatprep.subr.bf16.mxu0 0
      %322 = vmatpush1.bf16.msra.mxu0 %v319
      %323 = vmatprep.subr.bf16.mxu0 0
      %324 = vmatpush1.bf16.msra.mxu0 0
      %325 = vmatprep.subr.bf16.mxu0 0
      %326 = vmatpush1.bf16.msra.mxu0 0
      %327 = vmatprep.subr.bf16.mxu0 0
      %328 = vmatpush1.bf16.msra.mxu0 0
      %329 = vmatprep.subr.bf16.mxu0 0
      %330 = vmatpush1.bf16.msra.mxu0 0
      %331 = vmatprep.subr.bf16.mxu0 0
      %332 = vmatpush1.bf16.msra.mxu0 0
      %333 = vmatprep.subr.bf16.mxu0 0
      %334 = vmatpush1.bf16.msra.mxu0 0
      %335 = vmatprep.subr.bf16.mxu0 0
      %336 = vmatpush1.bf16.msra.mxu0 0
      %337 = vmatprep.subr.bf16.mxu0 0
      %338 = vmatpush1.bf16.msra.mxu0 0
      %339 = vmatprep.subr.bf16.mxu0 0
      %340 = vmatpush1.bf16.msra.mxu0 0
      %341 = vmatprep.subr.bf16.mxu0 0
      %342 = vmatpush1.bf16.msra.mxu0 0
      %343 = vmatprep.subr.bf16.mxu0 0
      %344 = vmatpush1.bf16.msra.mxu0 0
      %345 = vmatprep.subr.bf16.mxu0 0
      %346 = vmatpush1.bf16.msra.mxu0 0
      %347 = vmatprep.subr.bf16.mxu0 0
      %348 = vmatpush1.bf16.msra.mxu0 0
      %349 = vmatprep.subr.bf16.mxu0 0
      %350 = vmatpush1.bf16.msra.mxu0 0
      %351 = vmatprep.subr.bf16.mxu0 0
      %352 = vmatpush1.bf16.msra.mxu0 0
      %353 = vmatprep.mubr.bf16.mxu0 0
      %354 = vmatmul.mubr.bf16.gmra.mrb[0].mxu0 %v315
      %v355 = vpop.f32.mrb[0].mxu0
      %v356 = vadd.f32 0.0, %v355
      %v357 = vpop.f32.mrb[0].mxu0
      %v358 = vpop.f32.mrb[0].mxu0
      %v359 = vpop.f32.mrb[0].mxu0
      %360 = vdwg.mxu0
      %362 = vrot.lane.b32.xlu0 %v251, 120
      %v363 = vpop.permute.xlu0 %362
      %365 = vrot.lane.b32.xlu0 %v252, 120
      %v366 = vpop.permute.xlu0 %365
      %v368 = vsel %vm254, %v363, 0
      %v371 = vsel %vm254, %v366, 0
      %373 = vmatprep.subr.bf16.mxu0 0
      %374 = vmatpush1.bf16.xpose.msra.mxu0 %v371
      %375 = vmatprep.subr.bf16.mxu0 0
      %376 = vmatpush1.bf16.xpose.msra.mxu0 0
      %377 = vmatprep.subr.bf16.mxu0 0
      %378 = vmatpush1.bf16.xpose.msra.mxu0 0
      %379 = vmatprep.subr.bf16.mxu0 0
      %380 = vmatpush1.bf16.xpose.msra.mxu0 0
      %381 = vmatprep.subr.bf16.mxu0 0
      %382 = vmatpush1.bf16.xpose.msra.mxu0 0
      %383 = vmatprep.subr.bf16.mxu0 0
      %384 = vmatpush1.bf16.xpose.msra.mxu0 0
      %385 = vmatprep.subr.bf16.mxu0 0
      %386 = vmatpush1.bf16.xpose.msra.mxu0 0
      %387 = vmatprep.subr.bf16.mxu0 0
      %388 = vmatpush1.bf16.xpose.msra.mxu0 0
      %389 = vmatprep.subr.bf16.mxu0 0
      %390 = vmatpush1.bf16.xpose.msra.mxu0 0
      %391 = vmatprep.subr.bf16.mxu0 0
      %392 = vmatpush1.bf16.xpose.msra.mxu0 0
      %393 = vmatprep.subr.bf16.mxu0 0
      %394 = vmatpush1.bf16.xpose.msra.mxu0 0
      %395 = vmatprep.subr.bf16.mxu0 0
      %396 = vmatpush1.bf16.xpose.msra.mxu0 0
      %397 = vmatprep.subr.bf16.mxu0 0
      %398 = vmatpush1.bf16.xpose.msra.mxu0 0
      %399 = vmatprep.subr.bf16.mxu0 0
      %400 = vmatpush1.bf16.xpose.msra.mxu0 0
      %401 = vmatprep.subr.bf16.mxu0 0
      %402 = vmatpush1.bf16.xpose.msra.mxu0 0
      %403 = vmatprep.subr.bf16.mxu0 0
      %404 = vmatpush1.bf16.xpose.msra.mxu0 0
      %405 = vmatprep.mubr.bf16.mxu0 0
      %406 = vmatmul.mubr.bf16.gmra.mrb[0].mxu0 %v368
      %v407 = vpop.f32.mrb[0].mxu0
      %v408 = vadd.f32 0.0, %v407
      %v409 = vpop.f32.mrb[0].mxu0
      %v410 = vpop.f32.mrb[0].mxu0
      %v411 = vpop.f32.mrb[0].mxu0
      %412 = vdwg.mxu0
      %v413 = vsel %vm250, %v408, -1e+10
      %v414 = vsel %vm254, %v413, -inf
      %415 = vmax.xlane.f32.xlu0 %v414
      %v416 = vpop.xlane.xlu0 %415
      %v417 = vsub.f32 %v413, %v416
      %v418 = vmul.f32 %v417, 1.442695
      %v419 = vpow.pop %v418
      %v420 = vsel %vm254, %v419, 0.0
      %421 = vadd.xlane.f32.xlu0 %v420
      %v422 = vpop.xlane.xlu0 %421
      %v423 = vrcp.pop %v422
      %v424 = vmul.f32 %v419, %v423
      %v425 = vpack.c.bf16 %v424, %v424
      %427 = vrot.lane.b32.xlu0 %v253, 120
      %v428 = vpop.permute.xlu0 %427
      %v430 = vsel %vm254, %v425, 0
      %v433 = vsel %vm317, %v428, 0
      %435 = vmatprep.subr.bf16.mxu0 0
      %436 = vmatpush1.bf16.msra.mxu0 %v433
      %437 = vmatprep.subr.bf16.mxu0 0
      %438 = vmatpush1.bf16.msra.mxu0 0
      %439 = vmatprep.subr.bf16.mxu0 0
      %440 = vmatpush1.bf16.msra.mxu0 0
      %441 = vmatprep.subr.bf16.mxu0 0
      %442 = vmatpush1.bf16.msra.mxu0 0
      %443 = vmatprep.subr.bf16.mxu0 0
      %444 = vmatpush1.bf16.msra.mxu0 0
      %445 = vmatprep.subr.bf16.mxu0 0
      %446 = vmatpush1.bf16.msra.mxu0 0
      %447 = vmatprep.subr.bf16.mxu0 0
      %448 = vmatpush1.bf16.msra.mxu0 0
      %449 = vmatprep.subr.bf16.mxu0 0
      %450 = vmatpush1.bf16.msra.mxu0 0
      %451 = vmatprep.subr.bf16.mxu0 0
      %452 = vmatpush1.bf16.msra.mxu0 0
      %453 = vmatprep.subr.bf16.mxu0 0
      %454 = vmatpush1.bf16.msra.mxu0 0
      %455 = vmatprep.subr.bf16.mxu0 0
      %456 = vmatpush1.bf16.msra.mxu0 0
      %457 = vmatprep.subr.bf16.mxu0 0
      %458 = vmatpush1.bf16.msra.mxu0 0
      %459 = vmatprep.subr.bf16.mxu0 0
      %460 = vmatpush1.bf16.msra.mxu0 0
      %461 = vmatprep.subr.bf16.mxu0 0
      %462 = vmatpush1.bf16.msra.mxu0 0
      %463 = vmatprep.subr.bf16.mxu0 0
      %464 = vmatpush1.bf16.msra.mxu0 0
      %465 = vmatprep.subr.bf16.mxu0 0
      %466 = vmatpush1.bf16.msra.mxu0 0
      %467 = vmatprep.mubr.bf16.mxu0 0
      %468 = vmatmul.mubr.bf16.gmra.mrb[0].mxu0 %v430
      %v469 = vpop.f32.mrb[0].mxu0
      %v470 = vadd.f32 0.0, %v469
      %v471 = vpop.f32.mrb[0].mxu0
      %v472 = vpop.f32.mrb[0].mxu0
      %v473 = vpop.f32.mrb[0].mxu0
      %474 = vdwg.mxu0
      %475 = vrot.lane.b32.xlu0 %v251, 112
      %v476 = vpop.permute.xlu0 %475
      %477 = vrot.lane.b32.xlu0 %v252, 112
      %v478 = vpop.permute.xlu0 %477
      %v480 = vsel %vm254, %v476, 0
      %v483 = vsel %vm254, %v478, 0
      %485 = vmatprep.subr.bf16.mxu0 0
      %486 = vmatpush1.bf16.xpose.msra.mxu0 %v483
      %487 = vmatprep.subr.bf16.mxu0 0
      %488 = vmatpush1.bf16.xpose.msra.mxu0 0
      %489 = vmatprep.subr.bf16.mxu0 0
      %490 = vmatpush1.bf16.xpose.msra.mxu0 0
      %491 = vmatprep.subr.bf16.mxu0 0
      %492 = vmatpush1.bf16.xpose.msra.mxu0 0
      %493 = vmatprep.subr.bf16.mxu0 0
      %494 = vmatpush1.bf16.xpose.msra.mxu0 0
      %495 = vmatprep.subr.bf16.mxu0 0
      %496 = vmatpush1.bf16.xpose.msra.mxu0 0
      %497 = vmatprep.subr.bf16.mxu0 0
      %498 = vmatpush1.bf16.xpose.msra.mxu0 0
      %499 = vmatprep.subr.bf16.mxu0 0
      %500 = vmatpush1.bf16.xpose.msra.mxu0 0
      %501 = vmatprep.subr.bf16.mxu0 0
      %502 = vmatpush1.bf16.xpose.msra.mxu0 0
      %503 = vmatprep.subr.bf16.mxu0 0
      %504 = vmatpush1.bf16.xpose.msra.mxu0 0
      %505 = vmatprep.subr.bf16.mxu0 0
      %506 = vmatpush1.bf16.xpose.msra.mxu0 0
      %507 = vmatprep.subr.bf16.mxu0 0
      %508 = vmatpush1.bf16.xpose.msra.mxu0 0
      %509 = vmatprep.subr.bf16.mxu0 0
      %510 = vmatpush1.bf16.xpose.msra.mxu0 0
      %511 = vmatprep.subr.bf16.mxu0 0
      %512 = vmatpush1.bf16.xpose.msra.mxu0 0
      %513 = vmatprep.subr.bf16.mxu0 0
      %514 = vmatpush1.bf16.xpose.msra.mxu0 0
      %515 = vmatprep.subr.bf16.mxu0 0
      %516 = vmatpush1.bf16.xpose.msra.mxu0 0
      %517 = vmatprep.mubr.bf16.mxu0 0
      %518 = vmatmul.mubr.bf16.gmra.mrb[0].mxu0 %v480
      %v519 = vpop.f32.mrb[0].mxu0
      %v520 = vadd.f32 0.0, %v519
      %v521 = vpop.f32.mrb[0].mxu0
      %v522 = vpop.f32.mrb[0].mxu0
      %v523 = vpop.f32.mrb[0].mxu0
      %524 = vdwg.mxu0
      %v525 = vsel %vm250, %v520, -1e+10
      %v526 = vsel %vm254, %v525, -inf
      %527 = vmax.xlane.f32.xlu0 %v526
      %v528 = vpop.xlane.xlu0 %527
      %v529 = vsub.f32 %v525, %v528
      %v530 = vmul.f32 %v529, 1.442695
      %v531 = vpow.pop %v530
      %v532 = vsel %vm254, %v531, 0.0
      %533 = vadd.xlane.f32.xlu0 %v532
      %v534 = vpop.xlane.xlu0 %533
      %v535 = vrcp.pop %v534
      %v536 = vmul.f32 %v531, %v535
      %v537 = vpack.c.bf16 %v536, %v536
      %538 = vrot.lane.b32.xlu0 %v253, 112
      %v539 = vpop.permute.xlu0 %538
      %v541 = vsel %vm254, %v537, 0
      %v544 = vsel %vm317, %v539, 0
      %546 = vmatprep.subr.bf16.mxu0 0
      %547 = vmatpush1.bf16.msra.mxu0 %v544
      %548 = vmatprep.subr.bf16.mxu0 0
      %549 = vmatpush1.bf16.msra.mxu0 0
      %550 = vmatprep.subr.bf16.mxu0 0
      %551 = vmatpush1.bf16.msra.mxu0 0
      %552 = vmatprep.subr.bf16.mxu0 0
      %553 = vmatpush1.bf16.msra.mxu0 0
      %554 = vmatprep.subr.bf16.mxu0 0
      %555 = vmatpush1.bf16.msra.mxu0 0
      %556 = vmatprep.subr.bf16.mxu0 0
      %557 = vmatpush1.bf16.msra.mxu0 0
      %558 = vmatprep.subr.bf16.mxu0 0
      %559 = vmatpush1.bf16.msra.mxu0 0
      %560 = vmatprep.subr.bf16.mxu0 0
      %561 = vmatpush1.bf16.msra.mxu0 0
      %562 = vmatprep.subr.bf16.mxu0 0
      %563 = vmatpush1.bf16.msra.mxu0 0
      %564 = vmatprep.subr.bf16.mxu0 0
      %565 = vmatpush1.bf16.msra.mxu0 0
      %566 = vmatprep.subr.bf16.mxu0 0
      %567 = vmatpush1.bf16.msra.mxu0 0
      %568 = vmatprep.subr.bf16.mxu0 0
      %569 = vmatpush1.bf16.msra.mxu0 0
      %570 = vmatprep.subr.bf16.mxu0 0
      %571 = vmatpush1.bf16.msra.mxu0 0
      %572 = vmatprep.subr.bf16.mxu0 0
      %573 = vmatpush1.bf16.msra.mxu0 0
      %574 = vmatprep.subr.bf16.mxu0 0
      %575 = vmatpush1.bf16.msra.mxu0 0
      %576 = vmatprep.subr.bf16.mxu0 0
      %577 = vmatpush1.bf16.msra.mxu0 0
      %578 = vmatprep.mubr.bf16.mxu0 0
      %579 = vmatmul.mubr.bf16.gmra.mrb[0].mxu0 %v541
      %v580 = vpop.f32.mrb[0].mxu0
      %v581 = vadd.f32 0.0, %v580
      %v582 = vpop.f32.mrb[0].mxu0
      %v583 = vpop.f32.mrb[0].mxu0
      %v584 = vpop.f32.mrb[0].mxu0
      %585 = vdwg.mxu0
      %586 = vrot.lane.b32.xlu0 %v251, 104
      %v587 = vpop.permute.xlu0 %586
      %588 = vrot.lane.b32.xlu0 %v252, 104
      %v589 = vpop.permute.xlu0 %588
      %v591 = vsel %vm254, %v587, 0
      %v594 = vsel %vm254, %v589, 0
      %596 = vmatprep.subr.bf16.mxu0 0
      %597 = vmatpush1.bf16.xpose.msra.mxu0 %v594
      %598 = vmatprep.subr.bf16.mxu0 0
      %599 = vmatpush1.bf16.xpose.msra.mxu0 0
      %600 = vmatprep.subr.bf16.mxu0 0
      %601 = vmatpush1.bf16.xpose.msra.mxu0 0
      %602 = vmatprep.subr.bf16.mxu0 0
      %603 = vmatpush1.bf16.xpose.msra.mxu0 0
      %604 = vmatprep.subr.bf16.mxu0 0
      %605 = vmatpush1.bf16.xpose.msra.mxu0 0
      %606 = vmatprep.subr.bf16.mxu0 0
      %607 = vmatpush1.bf16.xpose.msra.mxu0 0
      %608 = vmatprep.subr.bf16.mxu0 0
      %609 = vmatpush1.bf16.xpose.msra.mxu0 0
      %610 = vmatprep.subr.bf16.mxu0 0
      %611 = vmatpush1.bf16.xpose.msra.mxu0 0
      %612 = vmatprep.subr.bf16.mxu0 0
      %613 = vmatpush1.bf16.xpose.msra.mxu0 0
      %614 = vmatprep.subr.bf16.mxu0 0
      %615 = vmatpush1.bf16.xpose.msra.mxu0 0
      %616 = vmatprep.subr.bf16.mxu0 0
      %617 = vmatpush1.bf16.xpose.msra.mxu0 0
      %618 = vmatprep.subr.bf16.mxu0 0
      %619 = vmatpush1.bf16.xpose.msra.mxu0 0
      %620 = vmatprep.subr.bf16.mxu0 0
      %621 = vmatpush1.bf16.xpose.msra.mxu0 0
      %622 = vmatprep.subr.bf16.mxu0 0
      %623 = vmatpush1.bf16.xpose.msra.mxu0 0
      %624 = vmatprep.subr.bf16.mxu0 0
      %625 = vmatpush1.bf16.xpose.msra.mxu0 0
      %626 = vmatprep.subr.bf16.mxu0 0
      %627 = vmatpush1.bf16.xpose.msra.mxu0 0
      %628 = vmatprep.mubr.bf16.mxu0 0
      %629 = vmatmul.mubr.bf16.gmra.mrb[0].mxu0 %v591
      %v630 = vpop.f32.mrb[0].mxu0
      %v631 = vadd.f32 0.0, %v630
      %v632 = vpop.f32.mrb[0].mxu0
      %v633 = vpop.f32.mrb[0].mxu0
      %v634 = vpop.f32.mrb[0].mxu0
      %635 = vdwg.mxu0
      %v636 = vsel %vm250, %v631, -1e+10
      %v637 = vsel %vm254, %v636, -inf
      %638 = vmax.xlane.f32.xlu0 %v637
      %v639 = vpop.xlane.xlu0 %638
      %v640 = vsub.f32 %v636, %v639
      %v641 = vmul.f32 %v640, 1.442695
      %v642 = vpow.pop %v641
      %v643 = vsel %vm254, %v642, 0.0
      %644 = vadd.xlane.f32.xlu0 %v643
      %v645 = vpop.xlane.xlu0 %644
      %v646 = vrcp.pop %v645
      %v647 = vmul.f32 %v642, %v646
      %v648 = vpack.c.bf16 %v647, %v647
      %649 = vrot.lane.b32.xlu0 %v253, 104
      %v650 = vpop.permute.xlu0 %649
      %v652 = vsel %vm254, %v648, 0
      %v655 = vsel %vm317, %v650, 0
      %657 = vmatprep.subr.bf16.mxu0 0
      %658 = vmatpush1.bf16.msra.mxu0 %v655
      %659 = vmatprep.subr.bf16.mxu0 0
      %660 = vmatpush1.bf16.msra.mxu0 0
      %661 = vmatprep.subr.bf16.mxu0 0
      %662 = vmatpush1.bf16.msra.mxu0 0
      %663 = vmatprep.subr.bf16.mxu0 0
      %664 = vmatpush1.bf16.msra.mxu0 0
      %665 = vmatprep.subr.bf16.mxu0 0
      %666 = vmatpush1.bf16.msra.mxu0 0
      %667 = vmatprep.subr.bf16.mxu0 0
      %668 = vmatpush1.bf16.msra.mxu0 0
      %669 = vmatprep.subr.bf16.mxu0 0
      %670 = vmatpush1.bf16.msra.mxu0 0
      %671 = vmatprep.subr.bf16.mxu0 0
      %672 = vmatpush1.bf16.msra.mxu0 0
      %673 = vmatprep.subr.bf16.mxu0 0
      %674 = vmatpush1.bf16.msra.mxu0 0
      %675 = vmatprep.subr.bf16.mxu0 0
      %676 = vmatpush1.bf16.msra.mxu0 0
      %677 = vmatprep.subr.bf16.mxu0 0
      %678 = vmatpush1.bf16.msra.mxu0 0
      %679 = vmatprep.subr.bf16.mxu0 0
      %680 = vmatpush1.bf16.msra.mxu0 0
      %681 = vmatprep.subr.bf16.mxu0 0
      %682 = vmatpush1.bf16.msra.mxu0 0
      %683 = vmatprep.subr.bf16.mxu0 0
      %684 = vmatpush1.bf16.msra.mxu0 0
      %685 = vmatprep.subr.bf16.mxu0 0
      %686 = vmatpush1.bf16.msra.mxu0 0
      %687 = vmatprep.subr.bf16.mxu0 0
      %688 = vmatpush1.bf16.msra.mxu0 0
      %689 = vmatprep.mubr.bf16.mxu0 0
      %690 = vmatmul.mubr.bf16.gmra.mrb[0].mxu0 %v652
      %v691 = vpop.f32.mrb[0].mxu0
      %v692 = vadd.f32 0.0, %v691
      %v693 = vpop.f32.mrb[0].mxu0
      %v694 = vpop.f32.mrb[0].mxu0
      %v695 = vpop.f32.mrb[0].mxu0
      %696 = vdwg.mxu0
      %698 = vrot.lane.b32.xlu0 %v470, 8
      %v699 = vpop.permute.xlu0 %698
      %702 = vrot.lane.b32.xlu0 %v581, 16
      %v703 = vpop.permute.xlu0 %702
      %706 = vrot.lane.b32.xlu0 %v692, 24
      %v707 = vpop.permute.xlu0 %706
      %v709 = vsel %vm254, %v356, %v699
      %vm710 = vcmask 130048
      %v711 = vsel %vm710, %v709, %v703
      %vm712 = vcmask 195584
      %v713 = vsel %vm712, %v711, %v707
      %vm714 = vcmask 261120
      %715 = vst.msk [vmem:[%s243] sm:$0xff] %vm714, %v713
      %p716 = scmp.lt.s32.totalorder %s15, 1
      %s717 = scalar_select %p716, %s15, 1
      %s718 = smul.addr %s717, 8
      %s719 = scalar_lea.vmem %s4, %s718
      // Predicated region
      $region37: #{seq2seq_transformer_forward.34} parent=35 // pred_check
        %p720 = pneg %p137
      $region38: #{seq2seq_transformer_forward.34} parent=35 // pred_check_branch
        %722 = sbr.rel (%p720) target = $region40
      $region39: #{seq2seq_transformer_forward.34} parent=35 // pred_region
        _
      $region40: #{seq2seq_transformer_forward.34} parent=35 // pred_fallthru
        _
    $region36: #{seq2seq_transformer_forward.34} parent=5 // pred_fallthru
      _
    %p723 = scmp.le.s32.totalorder 2, %s10
    // Predicated region
    $region41: #{seq2seq_transformer_forward.34} parent=5 // pred_check
      %p724 = pneg %p723
    $region42: #{seq2seq_transformer_forward.34} parent=5 // pred_check_branch
      %726 = sbr.rel (%p724) target = $region44
    $region43: #{seq2seq_transformer_forward.34} parent=5 // pred_region
      %s727 = ssub.s32 %s10, 2
      // Predicated region
      $region45: #{seq2seq_transformer_forward.34} parent=43 // pred_check
        %p728 = pneg %p143
      $region46: #{seq2seq_transformer_forward.34} parent=43 // pred_check_branch
        %730 = sbr.rel (%p728) target = $region48
      $region47: #{seq2seq_transformer_forward.34} parent=43 // pred_region
        %p731 = scmp.lt.s32.totalorder %s16, 1
        %s732 = scalar_select %p731, %s16, 1
        %s733 = smul.addr %s732, 8
        %s734 = scalar_lea.vmem %s4, %s733
      $region48: #{seq2seq_transformer_forward.34} parent=43 // pred_fallthru
        _
    $region44: #{seq2seq_transformer_forward.34} parent=5 // pred_fallthru
      _
  $region6: #{seq2seq_transformer_forward.34} parent=0 // loop_footer
    %s14 = sadd.s32 1, %s10
  $region7: #{seq2seq_transformer_forward.34} parent=0 // loop_footer_branch
    %9 = sbr.rel target = $region3
  $region8: #{seq2seq_transformer_forward.34} parent=0 // loop_exit
    _

// kernel: seq2seq_transformer_forward.49
$region0: #{seq2seq_transformer_forward.49}
  #allocation0 [shape = 'u32[]', space=smem, size = 0x4, offset = 0x4, fixed_abs, tag = 'smem constant byte address 0x4 - core index']
  #allocation1 [shape = 'u32[144,128]{1,0:T(1,128)}', space=vmem, size = 0x12000, scoped, tag = 'internal scratch']
  %s0 = inlined_call_operand.vmem [shape: f32[16,32], index: 0, kind: input, shape index: {}]
  %s1 = inlined_call_operand.vmem [shape: bf16[32,16], index: 1, kind: input, shape index: {}]
  %s2 = inlined_call_operand.vmem [shape: f32[1,16], index: 2, kind: input, shape index: {}]
  %s3 = inlined_call_operand.hbm [shape: f32[16,16], index: 3, kind: output, shape index: {}]
  %s4 = sld [smem:[#allocation0]]
  $region22: #{seq2seq_transformer_forward.49} parent=0
    _
  %s6 = ssub.s32 1, %s4
  %s7 = scalar_select 0, %s6, %s4
  $region1: #{seq2seq_transformer_forward.49} parent=0
    #allocation2 [shape = 'u8[8192]{0}', space=vmem, size = 0x2000, scoped, tag = 'output window, operand 0, single buffered']
    #allocation3 [shape = 's32[1]{0}', space=sflag, size = 0x4, scoped, tag = 'scoped memory for seq2seq_transformer_forward.49']
    %8 = vsyncpa [#allocation3], 0
    // Predicated region
    $region2: #{seq2seq_transformer_forward.49} parent=1 // pred_check
      _
    $region3: #{seq2seq_transformer_forward.49} parent=1 // pred_check_branch
      %10 = sbr.rel (0) target = $region5
    $region4: #{seq2seq_transformer_forward.49} parent=1 // pred_region
      _
    $region5: #{seq2seq_transformer_forward.49} parent=1 // pred_fallthru
      _
    // Predicated region
    $region6: #{seq2seq_transformer_forward.49} parent=1 // pred_check
      _
    $region7: #{seq2seq_transformer_forward.49} parent=1 // pred_check_branch
      %12 = sbr.rel (0) target = $region9
    $region8: #{seq2seq_transformer_forward.49} parent=1 // pred_region
      _
    $region9: #{seq2seq_transformer_forward.49} parent=1 // pred_fallthru
      _
    // Predicated region
    $region10: #{seq2seq_transformer_forward.49} parent=1 // pred_check
      _
    $region11: #{seq2seq_transformer_forward.49} parent=1 // pred_check_branch
      %14 = sbr.rel (0) target = $region13
    $region12: #{seq2seq_transformer_forward.49} parent=1 // pred_region
      _
    $region13: #{seq2seq_transformer_forward.49} parent=1 // pred_fallthru
      _
    %v16 = vld [vmem:[%s0] sm:$0xff]
    %v17 = vld [vmem:[%s0 + $0x8] sm:$0xff]
    %v18 = vpack.c.bf16 %v17, %v16
    %v19 = vld [vmem:[%s1] sm:$0xf]
    %v20 = vld [vmem:[%s1 + $0x4] sm:$0xf]
    %v21 = vld [vmem:[%s1 + $0x8] sm:$0xf]
    %v22 = vld [vmem:[%s1 + $0xc] sm:$0xf]
    %v23 = vld [vmem:[%s2] sm:$0x1]
    %v25 = vlaneseq
    %v26 = vshrl.u32 %v25, 7
    %v27 = vsub.s32 0, %v26
    %v28 = vrot.slane %v23, %v27
    %v34 = vunpack.c.l.b16 %v19
    %v35 = vunpack.c.l.b16 %v20
    %v36 = vunpack.c.l.b16 %v21
    %v37 = vunpack.c.l.b16 %v22
    %v38 = vpack.c.b16 %v35, %v34
    %v39 = vpack.c.b16 %v37, %v36
    %vm42 = vcmask 261120
    %v44 = vsel %vm42, %v18, 0
    %46 = vmatprep.subr.bf16.mxu0 0
    %47 = vmatpush1.bf16.msra.mxu0 %v38
    %48 = vmatprep.subr.bf16.mxu0 0
    %49 = vmatpush1.bf16.msra.mxu0 %v39
    %50 = vmatprep.subr.bf16.mxu0 0
    %51 = vmatpush1.bf16.msra.mxu0 0
    %52 = vmatprep.subr.bf16.mxu0 0
    %53 = vmatpush1.bf16.msra.mxu0 0
    %54 = vmatprep.subr.bf16.mxu0 0
    %55 = vmatpush1.bf16.msra.mxu0 0
    %56 = vmatprep.subr.bf16.mxu0 0
    %57 = vmatpush1.bf16.msra.mxu0 0
    %58 = vmatprep.subr.bf16.mxu0 0
    %59 = vmatpush1.bf16.msra.mxu0 0
    %60 = vmatprep.subr.bf16.mxu0 0
    %61 = vmatpush1.bf16.msra.mxu0 0
    %62 = vmatprep.subr.bf16.mxu0 0
    %63 = vmatpush1.bf16.msra.mxu0 0
    %64 = vmatprep.subr.bf16.mxu0 0
    %65 = vmatpush1.bf16.msra.mxu0 0
    %66 = vmatprep.subr.bf16.mxu0 0
    %67 = vmatpush1.bf16.msra.mxu0 0
    %68 = vmatprep.subr.bf16.mxu0 0
    %69 = vmatpush1.bf16.msra.mxu0 0
    %70 = vmatprep.subr.bf16.mxu0 0
    %71 = vmatpush1.bf16.msra.mxu0 0
    %72 = vmatprep.subr.bf16.mxu0 0
    %73 = vmatpush1.bf16.msra.mxu0 0
    %74 = vmatprep.subr.bf16.mxu0 0
    %75 = vmatpush1.bf16.msra.mxu0 0
    %76 = vmatprep.subr.bf16.mxu0 0
    %77 = vmatpush1.bf16.msra.mxu0 0
    %78 = vmatprep.mubr.bf16.mxu0 0
    %79 = vmatmul.mubr.bf16.gmra.mrb[0].mxu0 %v44
    %v80 = vpop.f32.mrb[0].mxu0
    %v81 = vadd.f32 %v28, %v80
    %v82 = vpop.f32.mrb[0].mxu0
    %v83 = vpop.f32.mrb[0].mxu0
    %v84 = vadd.f32 %v28, %v83
    %v85 = vpop.f32.mrb[0].mxu0
    %86 = vdwg.mxu0
    %vm87 = vcmask 130048
    %88 = vst.msk [vmem:[#allocation2] sm:$0xff] %vm87, %v81
    %89 = vst.msk [vmem:[#allocation2 + $0x8] sm:$0xff] %vm87, %v84
    // Predicated region
    $region14: #{seq2seq_transformer_forward.49} parent=1 // pred_check
      _
    $region15: #{seq2seq_transformer_forward.49} parent=1 // pred_check_branch
      %91 = sbr.rel (0) target = $region17
    $region16: #{seq2seq_transformer_forward.49} parent=1 // pred_region
      %s93 = ssub.s32 256, 256
      %94 = vsyncadd [#allocation3], %s93
      %s95 = sshll.u32 [#allocation2], 4
      %s96 = int_to_ptr.vmem [resolvable:$true] %s95
      %101 = dma.vmem_to_hbm [thread:$0]  %s96, 256, %s3, [#allocation3], 128, 128, 8
    $region17: #{seq2seq_transformer_forward.49} parent=1 // pred_fallthru
      _
    // Predicated region
    $region18: #{seq2seq_transformer_forward.49} parent=1 // pred_check
      _
    $region19: #{seq2seq_transformer_forward.49} parent=1 // pred_check_branch
      %103 = sbr.rel (0) target = $region21
    $region20: #{seq2seq_transformer_forward.49} parent=1 // pred_region
      %104 = dma.done [#allocation3], 256
    $region21: #{seq2seq_transformer_forward.49} parent=1 // pred_fallthru
      _
    %105 = vsyncpa [#allocation3], 1

// kernel: seq2seq_transformer_forward.46
$region0: #{seq2seq_transformer_forward.46}
  #allocation0 [shape = 'u32[]', space=smem, size = 0x4, offset = 0x4, fixed_abs, tag = 'smem constant byte address 0x4 - core index']
  #allocation1 [shape = 'u32[144,128]{1,0:T(1,128)}', space=vmem, size = 0x12000, scoped, tag = 'internal scratch']
  %s0 = inlined_call_operand.vmem [shape: f32[2,8,32], index: 0, kind: input, shape index: {}]
  %s1 = inlined_call_operand.vmem [shape: f32[2,8,32], index: 1, kind: input, shape index: {}]
  %s2 = inlined_call_operand.vmem [shape: f32[2,8,32], index: 2, kind: input, shape index: {}]
  %s3 = inlined_call_operand.vmem [shape: f32[2,1,8], index: 3, kind: input, shape index: {}]
  %s4 = inlined_call_operand.vmem [shape: f32[2,8,32], index: 4, kind: output, shape index: {0}]
  %s5 = inlined_call_operand.hbm [shape: f32[2,4,8,8], index: 5, kind: output, shape index: {1}]
  %6 = xla_tuple %s4, %s5
  %s7 = sld [smem:[#allocation0]]
  $region57: #{seq2seq_transformer_forward.46} parent=0
    _
  %s9 = ssub.s32 1, %s7
  %s10 = scalar_select 0, %s9, %s7
  $region1: #{seq2seq_transformer_forward.46} parent=0
    #allocation2 [shape = 'u8[32768]{0}', space=vmem, size = 0x8000, scoped, tag = 'output window, operand 1']
    #allocation3 [shape = 's32[2]{0}', space=sflag, size = 0x8, scoped, tag = 'scoped memory for seq2seq_transformer_forward.46']
    %11 = vsyncpa [#allocation3], 0
    %s12 = scalar_lea.sflag [#allocation3], 1
    %13 = vsyncpa %s12, 0
    loop: start=0, step=1, limit=4
    $region2: #{seq2seq_transformer_forward.46} parent=1 // loop_pre_header
      _
    $region3: #{seq2seq_transformer_forward.46} parent=1 // loop_header
      %s15 = sphi 0, %s19
      %p16 = scmp.ge.s32.totalorder %s15, 4
      %s25 = sphi 0, %s27
      %s28 = sphi 0, %s25
      %s29 = sphi 0, %s28
      %s45 = sphi 0, %s29
      %s51 = sphi 0, %s53
      %s54 = sphi 0, %s51
      %s55 = sphi 0, %s54
      %s71 = sphi 0, %s55
      %s77 = sphi 0, %s79
      %s80 = sphi 0, %s77
      %s81 = sphi 0, %s80
      %s97 = sphi 0, %s81
      %s103 = sphi 0, %s105
      %s106 = sphi 0, %s103
      %s107 = sphi 0, %s106
      %s123 = sphi 0, %s107
      %s129 = sphi 0, %s131
      %s132 = sphi 0, %s129
      %s133 = sphi 0, %s132
      %s149 = sphi 0, %s133
      %s155 = sphi 0, %s157
      %s158 = sphi 0, %s155
      %s159 = sphi 0, %s158
      %s175 = sphi 0, %s159
    $region4: #{seq2seq_transformer_forward.46} parent=1 // loop_header_branch
      %18 = sbr.rel (%p16) target = $region8
    $region5: #{seq2seq_transformer_forward.46} parent=1 // loop_body
      %s20 = ssub.s32 %s15, 1
      %s21 = ssub.s32 %s15, 2
      %s22 = sadd.s32 %s15, 1
      %s23 = ssub.s32 %s15, %s22
      %p24 = scmp.eq.s32.totalorder %s23, 0
      %s26 = sadd.s32 %s25, 1
      %s27 = scalar_select %p24, %s25, %s26
      %p30 = pneg %p24
      %p31 = scmp.eq.s32.totalorder %s15, 1
      %p32 = por %p30, %p31
      %p33 = scmp.ne.s32.totalorder %s25, %s28
      %p34 = scmp.eq.s32.totalorder %s15, 0
      %p35 = por %p33, %p34
      %p36 = scmp.ne.s32.totalorder %s25, %s28
      %p37 = scmp.eq.s32.totalorder %s20, 1
      %p38 = por %p36, %p37
      %p39 = scmp.ne.s32.totalorder %s28, %s29
      %p40 = scmp.eq.s32.totalorder %s20, 0
      %p41 = por %p39, %p40
      %p42 = scmp.ne.s32.totalorder %s28, %s29
      %p43 = scmp.eq.s32.totalorder %s21, 1
      %p44 = por %p42, %p43
      %p46 = scmp.ne.s32.totalorder %s29, %s45
      %p47 = scmp.eq.s32.totalorder %s21, 0
      %p48 = por %p46, %p47
      %s49 = ssub.s32 %s15, %s22
      %p50 = scmp.eq.s32.totalorder %s49, 0
      %s52 = sadd.s32 %s51, 1
      %s53 = scalar_select %p50, %s51, %s52
      %p56 = pneg %p50
      %p57 = scmp.eq.s32.totalorder %s15, 1
      %p58 = por %p56, %p57
      %p59 = scmp.ne.s32.totalorder %s51, %s54
      %p60 = scmp.eq.s32.totalorder %s15, 0
      %p61 = por %p59, %p60
      %p62 = scmp.ne.s32.totalorder %s51, %s54
      %p63 = scmp.eq.s32.totalorder %s20, 1
      %p64 = por %p62, %p63
      %p65 = scmp.ne.s32.totalorder %s54, %s55
      %p66 = scmp.eq.s32.totalorder %s20, 0
      %p67 = por %p65, %p66
      %p68 = scmp.ne.s32.totalorder %s54, %s55
      %p69 = scmp.eq.s32.totalorder %s21, 1
      %p70 = por %p68, %p69
      %p72 = scmp.ne.s32.totalorder %s55, %s71
      %p73 = scmp.eq.s32.totalorder %s21, 0
      %p74 = por %p72, %p73
      %s75 = ssub.s32 %s15, %s22
      %p76 = scmp.eq.s32.totalorder %s75, 0
      %s78 = sadd.s32 %s77, 1
      %s79 = scalar_select %p76, %s77, %s78
      %p82 = pneg %p76
      %p83 = scmp.eq.s32.totalorder %s15, 1
      %p84 = por %p82, %p83
      %p85 = scmp.ne.s32.totalorder %s77, %s80
      %p86 = scmp.eq.s32.totalorder %s15, 0
      %p87 = por %p85, %p86
      %p88 = scmp.ne.s32.totalorder %s77, %s80
      %p89 = scmp.eq.s32.totalorder %s20, 1
      %p90 = por %p88, %p89
      %p91 = scmp.ne.s32.totalorder %s80, %s81
      %p92 = scmp.eq.s32.totalorder %s20, 0
      %p93 = por %p91, %p92
      %p94 = scmp.ne.s32.totalorder %s80, %s81
      %p95 = scmp.eq.s32.totalorder %s21, 1
      %p96 = por %p94, %p95
      %p98 = scmp.ne.s32.totalorder %s81, %s97
      %p99 = scmp.eq.s32.totalorder %s21, 0
      %p100 = por %p98, %p99
      %s101 = ssub.s32 %s15, %s22
      %p102 = scmp.eq.s32.totalorder %s101, 0
      %s104 = sadd.s32 %s103, 1
      %s105 = scalar_select %p102, %s103, %s104
      %p108 = pneg %p102
      %p109 = scmp.eq.s32.totalorder %s15, 1
      %p110 = por %p108, %p109
      %p111 = scmp.ne.s32.totalorder %s103, %s106
      %p112 = scmp.eq.s32.totalorder %s15, 0
      %p113 = por %p111, %p112
      %p114 = scmp.ne.s32.totalorder %s103, %s106
      %p115 = scmp.eq.s32.totalorder %s20, 1
      %p116 = por %p114, %p115
      %p117 = scmp.ne.s32.totalorder %s106, %s107
      %p118 = scmp.eq.s32.totalorder %s20, 0
      %p119 = por %p117, %p118
      %p120 = scmp.ne.s32.totalorder %s106, %s107
      %p121 = scmp.eq.s32.totalorder %s21, 1
      %p122 = por %p120, %p121
      %p124 = scmp.ne.s32.totalorder %s107, %s123
      %p125 = scmp.eq.s32.totalorder %s21, 0
      %p126 = por %p124, %p125
      %s127 = ssub.s32 %s15, %s22
      %p128 = scmp.eq.s32.totalorder %s127, 0
      %s130 = sadd.s32 %s129, 1
      %s131 = scalar_select %p128, %s129, %s130
      %p134 = pneg %p128
      %p135 = scmp.eq.s32.totalorder %s15, 1
      %p136 = por %p134, %p135
      %p137 = scmp.ne.s32.totalorder %s129, %s132
      %p138 = scmp.eq.s32.totalorder %s15, 0
      %p139 = por %p137, %p138
      %p140 = scmp.ne.s32.totalorder %s129, %s132
      %p141 = scmp.eq.s32.totalorder %s20, 1
      %p142 = por %p140, %p141
      %p143 = scmp.ne.s32.totalorder %s132, %s133
      %p144 = scmp.eq.s32.totalorder %s20, 0
      %p145 = por %p143, %p144
      %p146 = scmp.ne.s32.totalorder %s132, %s133
      %p147 = scmp.eq.s32.totalorder %s21, 1
      %p148 = por %p146, %p147
      %p150 = scmp.ne.s32.totalorder %s133, %s149
      %p151 = scmp.eq.s32.totalorder %s21, 0
      %p152 = por %p150, %p151
      %s153 = ssub.s32 %s15, %s22
      %p154 = scmp.eq.s32.totalorder %s153, 0
      %s156 = sadd.s32 %s155, 1
      %s157 = scalar_select %p154, %s155, %s156
      %p160 = pneg %p154
      %p161 = scmp.eq.s32.totalorder %s15, 1
      %p162 = por %p160, %p161
      %p163 = scmp.ne.s32.totalorder %s155, %s158
      %p164 = scmp.eq.s32.totalorder %s15, 0
      %p165 = por %p163, %p164
      %p166 = scmp.ne.s32.totalorder %s155, %s158
      %p167 = scmp.eq.s32.totalorder %s20, 1
      %p168 = por %p166, %p167
      %p169 = scmp.ne.s32.totalorder %s158, %s159
      %p170 = scmp.eq.s32.totalorder %s20, 0
      %p171 = por %p169, %p170
      %p172 = scmp.ne.s32.totalorder %s158, %s159
      %p173 = scmp.eq.s32.totalorder %s21, 1
      %p174 = por %p172, %p173
      %p176 = scmp.ne.s32.totalorder %s159, %s175
      %p177 = scmp.eq.s32.totalorder %s21, 0
      %p178 = por %p176, %p177
      %p179 = scmp.le.s32.totalorder 1, %s15
      %p180 = scmp.lt.s32.totalorder %s15, 3
      %p181 = pnand %p179, %p180
      %p182 = pneg %p181
      // Predicated region
      $region9: #{seq2seq_transformer_forward.46} parent=5 // pred_check
        _
      $region10: #{seq2seq_transformer_forward.46} parent=5 // pred_check_branch
        %184 = sbr.rel (%p181) target = $region12
      $region11: #{seq2seq_transformer_forward.46} parent=5 // pred_region
        %s185 = ssub.s32 %s15, 1
      $region12: #{seq2seq_transformer_forward.46} parent=5 // pred_fallthru
        _
      %p186 = scmp.lt.s32.totalorder %s15, 2
      // Predicated region
      $region13: #{seq2seq_transformer_forward.46} parent=5 // pred_check
        %p187 = pneg %p186
      $region14: #{seq2seq_transformer_forward.46} parent=5 // pred_check_branch
        %189 = sbr.rel (%p187) target = $region16
      $region15: #{seq2seq_transformer_forward.46} parent=5 // pred_region
        // Predicated region
        $region17: #{seq2seq_transformer_forward.46} parent=15 // pred_check
          %p190 = pneg %p35
        $region18: #{seq2seq_transformer_forward.46} parent=15 // pred_check_branch
          %192 = sbr.rel (%p190) target = $region20
        $region19: #{seq2seq_transformer_forward.46} parent=15 // pred_region
          %p193 = scmp.lt.s32.totalorder %s15, 1
          %s194 = scalar_select %p193, %s15, 1
          %s195 = smul.addr %s194, 8
          %s196 = scalar_lea.vmem %s0, %s195
        $region20: #{seq2seq_transformer_forward.46} parent=15 // pred_fallthru
          _
        // Predicated region
        $region21: #{seq2seq_transformer_forward.46} parent=15 // pred_check
          %p197 = pneg %p61
        $region22: #{seq2seq_transformer_forward.46} parent=15 // pred_check_branch
          %199 = sbr.rel (%p197) target = $region24
        $region23: #{seq2seq_transformer_forward.46} parent=15 // pred_region
          %p200 = scmp.lt.s32.totalorder %s15, 1
          %s201 = scalar_select %p200, %s15, 1
          %s202 = smul.addr %s201, 8
          %s203 = scalar_lea.vmem %s1, %s202
        $region24: #{seq2seq_transformer_forward.46} parent=15 // pred_fallthru
          _
        // Predicated region
        $region25: #{seq2seq_transformer_forward.46} parent=15 // pred_check
          %p204 = pneg %p87
        $region26: #{seq2seq_transformer_forward.46} parent=15 // pred_check_branch
          %206 = sbr.rel (%p204) target = $region28
        $region27: #{seq2seq_transformer_forward.46} parent=15 // pred_region
          %p207 = scmp.lt.s32.totalorder %s15, 1
          %s208 = scalar_select %p207, %s15, 1
          %s209 = smul.addr %s208, 8
          %s210 = scalar_lea.vmem %s2, %s209
        $region28: #{seq2seq_transformer_forward.46} parent=15 // pred_fallthru
          _
        // Predicated region
        $region29: #{seq2seq_transformer_forward.46} parent=15 // pred_check
          %p211 = pneg %p113
        $region30: #{seq2seq_transformer_forward.46} parent=15 // pred_check_branch
          %213 = sbr.rel (%p211) target = $region32
        $region31: #{seq2seq_transformer_forward.46} parent=15 // pred_region
          %p214 = scmp.lt.s32.totalorder %s15, 1
          %s215 = scalar_select %p214, %s15, 1
          %s216 = scalar_lea.vmem %s3, %s215
        $region32: #{seq2seq_transformer_forward.46} parent=15 // pred_fallthru
          _
      $region16: #{seq2seq_transformer_forward.46} parent=5 // pred_fallthru
        _
      %p217 = scmp.le.s32.totalorder 1, %s15
      %p218 = scmp.lt.s32.totalorder %s15, 3
      %p219 = pnand %p217, %p218
      %p220 = pneg %p219
      // Predicated region
      $region33: #{seq2seq_transformer_forward.46} parent=5 // pred_check
        _
      $region34: #{seq2seq_transformer_forward.46} parent=5 // pred_check_branch
        %222 = sbr.rel (%p219) target = $region36
      $region35: #{seq2seq_transformer_forward.46} parent=5 // pred_region
        %s223 = ssub.s32 %s15, 1
        %p224 = scmp.lt.s32.totalorder %s20, 1
        %s225 = scalar_select %p224, %s20, 1
        %s226 = smul.addr %s225, 8
        %s227 = scalar_lea.vmem %s0, %s226
        %p228 = pneg %p41
        %p229 = pneg %p38
        %p230 = scmp.lt.s32.totalorder %s20, 1
        %s231 = scalar_select %p230, %s20, 1
        %s232 = smul.addr %s231, 8
        %s233 = scalar_lea.vmem %s1, %s232
        %p234 = pneg %p67
        %p235 = pneg %p64
        %p236 = scmp.lt.s32.totalorder %s20, 1
        %s237 = scalar_select %p236, %s20, 1
        %s238 = smul.addr %s237, 8
        %s239 = scalar_lea.vmem %s2, %s238
        %p240 = pneg %p93
        %p241 = pneg %p90
        %p242 = scmp.lt.s32.totalorder %s20, 1
        %s243 = scalar_select %p242, %s20, 1
        %s244 = scalar_lea.vmem %s3, %s243
        %p245 = pneg %p119
        %p246 = pneg %p116
        %p247 = pneg %p145
        %p248 = pneg %p142
        %p249 = scmp.lt.s32.totalorder %s20, 1
        %s250 = scalar_select %p249, %s20, 1
        %s251 = smul.addr %s250, 8
        %s252 = scalar_lea.vmem %s4, %s251
        %p253 = pneg %p171
        %p254 = pneg %p168
        %s255 = sand.u32 %s158, 1
        %s256 = scalar_lea.sflag [#allocation3], %s255
        %s257 = sand.u32 %s158, 1
        %s258 = smul.addr %s257, 32
        %s259 = scalar_lea.vmem [#allocation2], %s258
        %p260 = scmp.lt.s32.totalorder %s20, 1
        %s261 = scalar_select %p260, %s20, 1
        %s262 = smul.addr %s261, 8
        %s263 = scalar_lea.vmem %s0, %s262
        %p264 = scmp.lt.s32.totalorder %s20, 1
        %s265 = scalar_select %p264, %s20, 1
        %s266 = smul.addr %s265, 8
        %s267 = scalar_lea.vmem %s1, %s266
        %p268 = scmp.lt.s32.totalorder %s20, 1
        %s269 = scalar_select %p268, %s20, 1
        %s270 = smul.addr %s269, 8
        %s271 = scalar_lea.vmem %s2, %s270
        %p272 = scmp.lt.s32.totalorder %s20, 1
        %s273 = scalar_select %p272, %s20, 1
        %s274 = scalar_lea.vmem %s3, %s273
        %p275 = scmp.lt.s32.totalorder %s20, 1
        %s276 = scalar_select %p275, %s20, 1
        %s277 = smul.addr %s276, 8
        %s278 = scalar_lea.vmem %s4, %s277
        %v280 = vld [vmem:[%s263] sm:$0xff]
        %v281 = vmul.f32 %v280, 0.35355338
        %v282 = vld [vmem:[%s267] sm:$0xff]
        %v283 = vld [vmem:[%s271] sm:$0xff]
        %v284 = vld [vmem:[%s274] sm:$0x1]
        %vm285 = vcmp.gt.f32.partialorder %v284, 0.0
        %v286 = vpack.c.bf16 %v281, %v281
        %v287 = vpack.c.bf16 %v282, %v282
        %v288 = vpack.c.bf16 %v283, %v283
        %vm289 = vcmask 64512
        %v291 = vsel %vm289, %v286, 0
        %v294 = vsel %vm289, %v287, 0
        %296 = vmatprep.subr.bf16.mxu0 0
        %297 = vmatpush1.bf16.xpose.msra.mxu0 %v294
        %298 = vmatprep.subr.bf16.mxu0 0
        %299 = vmatpush1.bf16.xpose.msra.mxu0 0
        %300 = vmatprep.subr.bf16.mxu0 0
        %301 = vmatpush1.bf16.xpose.msra.mxu0 0
        %302 = vmatprep.subr.bf16.mxu0 0
        %303 = vmatpush1.bf16.xpose.msra.mxu0 0
        %304 = vmatprep.subr.bf16.mxu0 0
        %305 = vmatpush1.bf16.xpose.msra.mxu0 0
        %306 = vmatprep.subr.bf16.mxu0 0
        %307 = vmatpush1.bf16.xpose.msra.mxu0 0
        %308 = vmatprep.subr.bf16.mxu0 0
        %309 = vmatpush1.bf16.xpose.msra.mxu0 0
        %310 = vmatprep.subr.bf16.mxu0 0
        %311 = vmatpush1.bf16.xpose.msra.mxu0 0
        %312 = vmatprep.subr.bf16.mxu0 0
        %313 = vmatpush1.bf16.xpose.msra.mxu0 0
        %314 = vmatprep.subr.bf16.mxu0 0
        %315 = vmatpush1.bf16.xpose.msra.mxu0 0
        %316 = vmatprep.subr.bf16.mxu0 0
        %317 = vmatpush1.bf16.xpose.msra.mxu0 0
        %318 = vmatprep.subr.bf16.mxu0 0
        %319 = vmatpush1.bf16.xpose.msra.mxu0 0
        %320 = vmatprep.subr.bf16.mxu0 0
        %321 = vmatpush1.bf16.xpose.msra.mxu0 0
        %322 = vmatprep.subr.bf16.mxu0 0
        %323 = vmatpush1.bf16.xpose.msra.mxu0 0
        %324 = vmatprep.subr.bf16.mxu0 0
        %325 = vmatpush1.bf16.xpose.msra.mxu0 0
        %326 = vmatprep.subr.bf16.mxu0 0
        %327 = vmatpush1.bf16.xpose.msra.mxu0 0
        %328 = vmatprep.mubr.bf16.mxu0 0
        %329 = vmatmul.mubr.bf16.gmra.mrb[0].mxu0 %v291
        %v330 = vpop.f32.mrb[0].mxu0
        %v331 = vadd.f32 0.0, %v330
        %v332 = vpop.f32.mrb[0].mxu0
        %v333 = vpop.f32.mrb[0].mxu0
        %v334 = vpop.f32.mrb[0].mxu0
        %335 = vdwg.mxu0
        %v336 = vsel %vm285, 1, 0
        %v337 = vlaneseq
        %v338 = vshrl.u32 %v337, 7
        %v339 = vsub.s32 0, %v338
        %v340 = vrot.slane %v336, %v339
        %vm341 = vcmp.eq.s32.totalorder %v340, 1
        %v342 = vsel %vm341, %v331, -1e+10
        %v343 = vsel %vm289, %v342, -inf
        %344 = vmax.xlane.f32.xlu0 %v343
        %v345 = vpop.xlane.xlu0 %344
        %v346 = vsub.f32 %v342, %v345
        %v347 = vmul.f32 %v346, 1.442695
        %v348 = vpow.pop %v347
        %v349 = vsel %vm289, %v348, 0.0
        %350 = vadd.xlane.f32.xlu0 %v349
        %v351 = vpop.xlane.xlu0 %350
        %v352 = vrcp.pop %v351
        %v353 = vmul.f32 %v348, %v352
        %354 = vst.msk [vmem:[%s259] sm:$0xff] %vm289, %v353
        %v355 = vpack.c.bf16 %v353, %v353
        %v357 = vsel %vm289, %v355, 0
        %vm359 = vcmask 1043456
        %v361 = vsel %vm359, %v288, 0
        %363 = vmatprep.subr.bf16.mxu0 0
        %364 = vmatpush1.bf16.msra.mxu0 %v361
        %365 = vmatprep.subr.bf16.mxu0 0
        %366 = vmatpush1.bf16.msra.mxu0 0
        %367 = vmatprep.subr.bf16.mxu0 0
        %368 = vmatpush1.bf16.msra.mxu0 0
        %369 = vmatprep.subr.bf16.mxu0 0
        %370 = vmatpush1.bf16.msra.mxu0 0
        %371 = vmatprep.subr.bf16.mxu0 0
        %372 = vmatpush1.bf16.msra.mxu0 0
        %373 = vmatprep.subr.bf16.mxu0 0
        %374 = vmatpush1.bf16.msra.mxu0 0
        %375 = vmatprep.subr.bf16.mxu0 0
        %376 = vmatpush1.bf16.msra.mxu0 0
        %377 = vmatprep.subr.bf16.mxu0 0
        %378 = vmatpush1.bf16.msra.mxu0 0
        %379 = vmatprep.subr.bf16.mxu0 0
        %380 = vmatpush1.bf16.msra.mxu0 0
        %381 = vmatprep.subr.bf16.mxu0 0
        %382 = vmatpush1.bf16.msra.mxu0 0
        %383 = vmatprep.subr.bf16.mxu0 0
        %384 = vmatpush1.bf16.msra.mxu0 0
        %385 = vmatprep.subr.bf16.mxu0 0
        %386 = vmatpush1.bf16.msra.mxu0 0
        %387 = vmatprep.subr.bf16.mxu0 0
        %388 = vmatpush1.bf16.msra.mxu0 0
        %389 = vmatprep.subr.bf16.mxu0 0
        %390 = vmatpush1.bf16.msra.mxu0 0
        %391 = vmatprep.subr.bf16.mxu0 0
        %392 = vmatpush1.bf16.msra.mxu0 0
        %393 = vmatprep.subr.bf16.mxu0 0
        %394 = vmatpush1.bf16.msra.mxu0 0
        %395 = vmatprep.mubr.bf16.mxu0 0
        %396 = vmatmul.mubr.bf16.gmra.mrb[0].mxu0 %v357
        %v397 = vpop.f32.mrb[0].mxu0
        %v398 = vadd.f32 0.0, %v397
        %v399 = vpop.f32.mrb[0].mxu0
        %v400 = vpop.f32.mrb[0].mxu0
        %v401 = vpop.f32.mrb[0].mxu0
        %402 = vdwg.mxu0
        %404 = vrot.lane.b32.xlu0 %v286, 120
        %v405 = vpop.permute.xlu0 %404
        %407 = vrot.lane.b32.xlu0 %v287, 120
        %v408 = vpop.permute.xlu0 %407
        %v410 = vsel %vm289, %v405, 0
        %v413 = vsel %vm289, %v408, 0
        %415 = vmatprep.subr.bf16.mxu0 0
        %416 = vmatpush1.bf16.xpose.msra.mxu0 %v413
        %417 = vmatprep.subr.bf16.mxu0 0
        %418 = vmatpush1.bf16.xpose.msra.mxu0 0
        %419 = vmatprep.subr.bf16.mxu0 0
        %420 = vmatpush1.bf16.xpose.msra.mxu0 0
        %421 = vmatprep.subr.bf16.mxu0 0
        %422 = vmatpush1.bf16.xpose.msra.mxu0 0
        %423 = vmatprep.subr.bf16.mxu0 0
        %424 = vmatpush1.bf16.xpose.msra.mxu0 0
        %425 = vmatprep.subr.bf16.mxu0 0
        %426 = vmatpush1.bf16.xpose.msra.mxu0 0
        %427 = vmatprep.subr.bf16.mxu0 0
        %428 = vmatpush1.bf16.xpose.msra.mxu0 0
        %429 = vmatprep.subr.bf16.mxu0 0
        %430 = vmatpush1.bf16.xpose.msra.mxu0 0
        %431 = vmatprep.subr.bf16.mxu0 0
        %432 = vmatpush1.bf16.xpose.msra.mxu0 0
        %433 = vmatprep.subr.bf16.mxu0 0
        %434 = vmatpush1.bf16.xpose.msra.mxu0 0
        %435 = vmatprep.subr.bf16.mxu0 0
        %436 = vmatpush1.bf16.xpose.msra.mxu0 0
        %437 = vmatprep.subr.bf16.mxu0 0
        %438 = vmatpush1.bf16.xpose.msra.mxu0 0
        %439 = vmatprep.subr.bf16.mxu0 0
        %440 = vmatpush1.bf16.xpose.msra.mxu0 0
        %441 = vmatprep.subr.bf16.mxu0 0
        %442 = vmatpush1.bf16.xpose.msra.mxu0 0
        %443 = vmatprep.subr.bf16.mxu0 0
        %444 = vmatpush1.bf16.xpose.msra.mxu0 0
        %445 = vmatprep.subr.bf16.mxu0 0
        %446 = vmatpush1.bf16.xpose.msra.mxu0 0
        %447 = vmatprep.mubr.bf16.mxu0 0
        %448 = vmatmul.mubr.bf16.gmra.mrb[0].mxu0 %v410
        %v449 = vpop.f32.mrb[0].mxu0
        %v450 = vadd.f32 0.0, %v449
        %v451 = vpop.f32.mrb[0].mxu0
        %v452 = vpop.f32.mrb[0].mxu0
        %v453 = vpop.f32.mrb[0].mxu0
        %454 = vdwg.mxu0
        %v455 = vsel %vm341, %v450, -1e+10
        %v456 = vsel %vm289, %v455, -inf
        %457 = vmax.xlane.f32.xlu0 %v456
        %v458 = vpop.xlane.xlu0 %457
        %v459 = vsub.f32 %v455, %v458
        %v460 = vmul.f32 %v459, 1.442695
        %v461 = vpow.pop %v460
        %v462 = vsel %vm289, %v461, 0.0
        %463 = vadd.xlane.f32.xlu0 %v462
        %v464 = vpop.xlane.xlu0 %463
        %v465 = vrcp.pop %v464
        %v466 = vmul.f32 %v461, %v465
        %s467 = scalar_lea.vmem %s259, 8 [#allocation2]
        %468 = vst.msk [vmem:[%s467] sm:$0xff] %vm289, %v466
        %v469 = vpack.c.bf16 %v466, %v466
        %471 = vrot.lane.b32.xlu0 %v288, 120
        %v472 = vpop.permute.xlu0 %471
        %v474 = vsel %vm289, %v469, 0
        %v477 = vsel %vm359, %v472, 0
        %479 = vmatprep.subr.bf16.mxu0 0
        %480 = vmatpush1.bf16.msra.mxu0 %v477
        %481 = vmatprep.subr.bf16.mxu0 0
        %482 = vmatpush1.bf16.msra.mxu0 0
        %483 = vmatprep.subr.bf16.mxu0 0
        %484 = vmatpush1.bf16.msra.mxu0 0
        %485 = vmatprep.subr.bf16.mxu0 0
        %486 = vmatpush1.bf16.msra.mxu0 0
        %487 = vmatprep.subr.bf16.mxu0 0
        %488 = vmatpush1.bf16.msra.mxu0 0
        %489 = vmatprep.subr.bf16.mxu0 0
        %490 = vmatpush1.bf16.msra.mxu0 0
        %491 = vmatprep.subr.bf16.mxu0 0
        %492 = vmatpush1.bf16.msra.mxu0 0
        %493 = vmatprep.subr.bf16.mxu0 0
        %494 = vmatpush1.bf16.msra.mxu0 0
        %495 = vmatprep.subr.bf16.mxu0 0
        %496 = vmatpush1.bf16.msra.mxu0 0
        %497 = vmatprep.subr.bf16.mxu0 0
        %498 = vmatpush1.bf16.msra.mxu0 0
        %499 = vmatprep.subr.bf16.mxu0 0
        %500 = vmatpush1.bf16.msra.mxu0 0
        %501 = vmatprep.subr.bf16.mxu0 0
        %502 = vmatpush1.bf16.msra.mxu0 0
        %503 = vmatprep.subr.bf16.mxu0 0
        %504 = vmatpush1.bf16.msra.mxu0 0
        %505 = vmatprep.subr.bf16.mxu0 0
        %506 = vmatpush1.bf16.msra.mxu0 0
        %507 = vmatprep.subr.bf16.mxu0 0
        %508 = vmatpush1.bf16.msra.mxu0 0
        %509 = vmatprep.subr.bf16.mxu0 0
        %510 = vmatpush1.bf16.msra.mxu0 0
        %511 = vmatprep.mubr.bf16.mxu0 0
        %512 = vmatmul.mubr.bf16.gmra.mrb[0].mxu0 %v474
        %v513 = vpop.f32.mrb[0].mxu0
        %v514 = vadd.f32 0.0, %v513
        %v515 = vpop.f32.mrb[0].mxu0
        %v516 = vpop.f32.mrb[0].mxu0
        %v517 = vpop.f32.mrb[0].mxu0
        %518 = vdwg.mxu0
        %519 = vrot.lane.b32.xlu0 %v286, 112
        %v520 = vpop.permute.xlu0 %519
        %521 = vrot.lane.b32.xlu0 %v287, 112
        %v522 = vpop.permute.xlu0 %521
        %v524 = vsel %vm289, %v520, 0
        %v527 = vsel %vm289, %v522, 0
        %529 = vmatprep.subr.bf16.mxu0 0
        %530 = vmatpush1.bf16.xpose.msra.mxu0 %v527
        %531 = vmatprep.subr.bf16.mxu0 0
        %532 = vmatpush1.bf16.xpose.msra.mxu0 0
        %533 = vmatprep.subr.bf16.mxu0 0
        %534 = vmatpush1.bf16.xpose.msra.mxu0 0
        %535 = vmatprep.subr.bf16.mxu0 0
        %536 = vmatpush1.bf16.xpose.msra.mxu0 0
        %537 = vmatprep.subr.bf16.mxu0 0
        %538 = vmatpush1.bf16.xpose.msra.mxu0 0
        %539 = vmatprep.subr.bf16.mxu0 0
        %540 = vmatpush1.bf16.xpose.msra.mxu0 0
        %541 = vmatprep.subr.bf16.mxu0 0
        %542 = vmatpush1.bf16.xpose.msra.mxu0 0
        %543 = vmatprep.subr.bf16.mxu0 0
        %544 = vmatpush1.bf16.xpose.msra.mxu0 0
        %545 = vmatprep.subr.bf16.mxu0 0
        %546 = vmatpush1.bf16.xpose.msra.mxu0 0
        %547 = vmatprep.subr.bf16.mxu0 0
        %548 = vmatpush1.bf16.xpose.msra.mxu0 0
        %549 = vmatprep.subr.bf16.mxu0 0
        %550 = vmatpush1.bf16.xpose.msra.mxu0 0
        %551 = vmatprep.subr.bf16.mxu0 0
        %552 = vmatpush1.bf16.xpose.msra.mxu0 0
        %553 = vmatprep.subr.bf16.mxu0 0
        %554 = vmatpush1.bf16.xpose.msra.mxu0 0
        %555 = vmatprep.subr.bf16.mxu0 0
        %556 = vmatpush1.bf16.xpose.msra.mxu0 0
        %557 = vmatprep.subr.bf16.mxu0 0
        %558 = vmatpush1.bf16.xpose.msra.mxu0 0
        %559 = vmatprep.subr.bf16.mxu0 0
        %560 = vmatpush1.bf16.xpose.msra.mxu0 0
        %561 = vmatprep.mubr.bf16.mxu0 0
        %562 = vmatmul.mubr.bf16.gmra.mrb[0].mxu0 %v524
        %v563 = vpop.f32.mrb[0].mxu0
        %v564 = vadd.f32 0.0, %v563
        %v565 = vpop.f32.mrb[0].mxu0
        %v566 = vpop.f32.mrb[0].mxu0
        %v567 = vpop.f32.mrb[0].mxu0
        %568 = vdwg.mxu0
        %v569 = vsel %vm341, %v564, -1e+10
        %v570 = vsel %vm289, %v569, -inf
        %571 = vmax.xlane.f32.xlu0 %v570
        %v572 = vpop.xlane.xlu0 %571
        %v573 = vsub.f32 %v569, %v572
        %v574 = vmul.f32 %v573, 1.442695
        %v575 = vpow.pop %v574
        %v576 = vsel %vm289, %v575, 0.0
        %577 = vadd.xlane.f32.xlu0 %v576
        %v578 = vpop.xlane.xlu0 %577
        %v579 = vrcp.pop %v578
        %v580 = vmul.f32 %v575, %v579
        %s581 = scalar_lea.vmem %s259, 16 [#allocation2]
        %582 = vst.msk [vmem:[%s581] sm:$0xff] %vm289, %v580
        %v583 = vpack.c.bf16 %v580, %v580
        %584 = vrot.lane.b32.xlu0 %v288, 112
        %v585 = vpop.permute.xlu0 %584
        %v587 = vsel %vm289, %v583, 0
        %v590 = vsel %vm359, %v585, 0
        %592 = vmatprep.subr.bf16.mxu0 0
        %593 = vmatpush1.bf16.msra.mxu0 %v590
        %594 = vmatprep.subr.bf16.mxu0 0
        %595 = vmatpush1.bf16.msra.mxu0 0
        %596 = vmatprep.subr.bf16.mxu0 0
        %597 = vmatpush1.bf16.msra.mxu0 0
        %598 = vmatprep.subr.bf16.mxu0 0
        %599 = vmatpush1.bf16.msra.mxu0 0
        %600 = vmatprep.subr.bf16.mxu0 0
        %601 = vmatpush1.bf16.msra.mxu0 0
        %602 = vmatprep.subr.bf16.mxu0 0
        %603 = vmatpush1.bf16.msra.mxu0 0
        %604 = vmatprep.subr.bf16.mxu0 0
        %605 = vmatpush1.bf16.msra.mxu0 0
        %606 = vmatprep.subr.bf16.mxu0 0
        %607 = vmatpush1.bf16.msra.mxu0 0
        %608 = vmatprep.subr.bf16.mxu0 0
        %609 = vmatpush1.bf16.msra.mxu0 0
        %610 = vmatprep.subr.bf16.mxu0 0
        %611 = vmatpush1.bf16.msra.mxu0 0
        %612 = vmatprep.subr.bf16.mxu0 0
        %613 = vmatpush1.bf16.msra.mxu0 0
        %614 = vmatprep.subr.bf16.mxu0 0
        %615 = vmatpush1.bf16.msra.mxu0 0
        %616 = vmatprep.subr.bf16.mxu0 0
        %617 = vmatpush1.bf16.msra.mxu0 0
        %618 = vmatprep.subr.bf16.mxu0 0
        %619 = vmatpush1.bf16.msra.mxu0 0
        %620 = vmatprep.subr.bf16.mxu0 0
        %621 = vmatpush1.bf16.msra.mxu0 0
        %622 = vmatprep.subr.bf16.mxu0 0
        %623 = vmatpush1.bf16.msra.mxu0 0
        %624 = vmatprep.mubr.bf16.mxu0 0
        %625 = vmatmul.mubr.bf16.gmra.mrb[0].mxu0 %v587
        %v626 = vpop.f32.mrb[0].mxu0
        %v627 = vadd.f32 0.0, %v626
        %v628 = vpop.f32.mrb[0].mxu0
        %v629 = vpop.f32.mrb[0].mxu0
        %v630 = vpop.f32.mrb[0].mxu0
        %631 = vdwg.mxu0
        %632 = vrot.lane.b32.xlu0 %v286, 104
        %v633 = vpop.permute.xlu0 %632
        %634 = vrot.lane.b32.xlu0 %v287, 104
        %v635 = vpop.permute.xlu0 %634
        %v637 = vsel %vm289, %v633, 0
        %v640 = vsel %vm289, %v635, 0
        %642 = vmatprep.subr.bf16.mxu0 0
        %643 = vmatpush1.bf16.xpose.msra.mxu0 %v640
        %644 = vmatprep.subr.bf16.mxu0 0
        %645 = vmatpush1.bf16.xpose.msra.mxu0 0
        %646 = vmatprep.subr.bf16.mxu0 0
        %647 = vmatpush1.bf16.xpose.msra.mxu0 0
        %648 = vmatprep.subr.bf16.mxu0 0
        %649 = vmatpush1.bf16.xpose.msra.mxu0 0
        %650 = vmatprep.subr.bf16.mxu0 0
        %651 = vmatpush1.bf16.xpose.msra.mxu0 0
        %652 = vmatprep.subr.bf16.mxu0 0
        %653 = vmatpush1.bf16.xpose.msra.mxu0 0
        %654 = vmatprep.subr.bf16.mxu0 0
        %655 = vmatpush1.bf16.xpose.msra.mxu0 0
        %656 = vmatprep.subr.bf16.mxu0 0
        %657 = vmatpush1.bf16.xpose.msra.mxu0 0
        %658 = vmatprep.subr.bf16.mxu0 0
        %659 = vmatpush1.bf16.xpose.msra.mxu0 0
        %660 = vmatprep.subr.bf16.mxu0 0
        %661 = vmatpush1.bf16.xpose.msra.mxu0 0
        %662 = vmatprep.subr.bf16.mxu0 0
        %663 = vmatpush1.bf16.xpose.msra.mxu0 0
        %664 = vmatprep.subr.bf16.mxu0 0
        %665 = vmatpush1.bf16.xpose.msra.mxu0 0
        %666 = vmatprep.subr.bf16.mxu0 0
        %667 = vmatpush1.bf16.xpose.msra.mxu0 0
        %668 = vmatprep.subr.bf16.mxu0 0
        %669 = vmatpush1.bf16.xpose.msra.mxu0 0
        %670 = vmatprep.subr.bf16.mxu0 0
        %671 = vmatpush1.bf16.xpose.msra.mxu0 0
        %672 = vmatprep.subr.bf16.mxu0 0
        %673 = vmatpush1.bf16.xpose.msra.mxu0 0
        %674 = vmatprep.mubr.bf16.mxu0 0
        %675 = vmatmul.mubr.bf16.gmra.mrb[0].mxu0 %v637
        %v676 = vpop.f32.mrb[0].mxu0
        %v677 = vadd.f32 0.0, %v676
        %v678 = vpop.f32.mrb[0].mxu0
        %v679 = vpop.f32.mrb[0].mxu0
        %v680 = vpop.f32.mrb[0].mxu0
        %681 = vdwg.mxu0
        %v682 = vsel %vm341, %v677, -1e+10
        %v683 = vsel %vm289, %v682, -inf
        %684 = vmax.xlane.f32.xlu0 %v683
        %v685 = vpop.xlane.xlu0 %684
        %v686 = vsub.f32 %v682, %v685
        %v687 = vmul.f32 %v686, 1.442695
        %v688 = vpow.pop %v687
        %v689 = vsel %vm289, %v688, 0.0
        %690 = vadd.xlane.f32.xlu0 %v689
        %v691 = vpop.xlane.xlu0 %690
        %v692 = vrcp.pop %v691
        %v693 = vmul.f32 %v688, %v692
        %s694 = scalar_lea.vmem %s259, 24 [#allocation2]
        %695 = vst.msk [vmem:[%s694] sm:$0xff] %vm289, %v693
        %v696 = vpack.c.bf16 %v693, %v693
        %697 = vrot.lane.b32.xlu0 %v288, 104
        %v698 = vpop.permute.xlu0 %697
        %v700 = vsel %vm289, %v696, 0
        %v703 = vsel %vm359, %v698, 0
        %705 = vmatprep.subr.bf16.mxu0 0
        %706 = vmatpush1.bf16.msra.mxu0 %v703
        %707 = vmatprep.subr.bf16.mxu0 0
        %708 = vmatpush1.bf16.msra.mxu0 0
        %709 = vmatprep.subr.bf16.mxu0 0
        %710 = vmatpush1.bf16.msra.mxu0 0
        %711 = vmatprep.subr.bf16.mxu0 0
        %712 = vmatpush1.bf16.msra.mxu0 0
        %713 = vmatprep.subr.bf16.mxu0 0
        %714 = vmatpush1.bf16.msra.mxu0 0
        %715 = vmatprep.subr.bf16.mxu0 0
        %716 = vmatpush1.bf16.msra.mxu0 0
        %717 = vmatprep.subr.bf16.mxu0 0
        %718 = vmatpush1.bf16.msra.mxu0 0
        %719 = vmatprep.subr.bf16.mxu0 0
        %720 = vmatpush1.bf16.msra.mxu0 0
        %721 = vmatprep.subr.bf16.mxu0 0
        %722 = vmatpush1.bf16.msra.mxu0 0
        %723 = vmatprep.subr.bf16.mxu0 0
        %724 = vmatpush1.bf16.msra.mxu0 0
        %725 = vmatprep.subr.bf16.mxu0 0
        %726 = vmatpush1.bf16.msra.mxu0 0
        %727 = vmatprep.subr.bf16.mxu0 0
        %728 = vmatpush1.bf16.msra.mxu0 0
        %729 = vmatprep.subr.bf16.mxu0 0
        %730 = vmatpush1.bf16.msra.mxu0 0
        %731 = vmatprep.subr.bf16.mxu0 0
        %732 = vmatpush1.bf16.msra.mxu0 0
        %733 = vmatprep.subr.bf16.mxu0 0
        %734 = vmatpush1.bf16.msra.mxu0 0
        %735 = vmatprep.subr.bf16.mxu0 0
        %736 = vmatpush1.bf16.msra.mxu0 0
        %737 = vmatprep.mubr.bf16.mxu0 0
        %738 = vmatmul.mubr.bf16.gmra.mrb[0].mxu0 %v700
        %v739 = vpop.f32.mrb[0].mxu0
        %v740 = vadd.f32 0.0, %v739
        %v741 = vpop.f32.mrb[0].mxu0
        %v742 = vpop.f32.mrb[0].mxu0
        %v743 = vpop.f32.mrb[0].mxu0
        %744 = vdwg.mxu0
        %746 = vrot.lane.b32.xlu0 %v514, 8
        %v747 = vpop.permute.xlu0 %746
        %750 = vrot.lane.b32.xlu0 %v627, 16
        %v751 = vpop.permute.xlu0 %750
        %754 = vrot.lane.b32.xlu0 %v740, 24
        %v755 = vpop.permute.xlu0 %754
        %v757 = vsel %vm289, %v398, %v747
        %vm758 = vcmask 130048
        %v759 = vsel %vm758, %v757, %v751
        %vm760 = vcmask 195584
        %v761 = vsel %vm760, %v759, %v755
        %vm762 = vcmask 261120
        %763 = vst.msk [vmem:[%s278] sm:$0xff] %vm762, %v761
        %p764 = scmp.lt.s32.totalorder %s20, 1
        %s765 = scalar_select %p764, %s20, 1
        %s766 = smul.addr %s765, 8
        %s767 = scalar_lea.vmem %s4, %s766
        %s768 = sand.u32 %s158, 1
        %s769 = scalar_lea.sflag [#allocation3], %s768
        %s770 = sand.u32 %s158, 1
        %s771 = smul.addr %s770, 32
        %s772 = scalar_lea.vmem [#allocation2], %s771
        // Predicated region
        $region37: #{seq2seq_transformer_forward.46} parent=35 // pred_check
          %p773 = pneg %p142
        $region38: #{seq2seq_transformer_forward.46} parent=35 // pred_check_branch
          %775 = sbr.rel (%p773) target = $region40
        $region39: #{seq2seq_transformer_forward.46} parent=35 // pred_region
          _
        $region40: #{seq2seq_transformer_forward.46} parent=35 // pred_fallthru
          _
        // Predicated region
        $region41: #{seq2seq_transformer_forward.46} parent=35 // pred_check
          %p776 = pneg %p168
        $region42: #{seq2seq_transformer_forward.46} parent=35 // pred_check_branch
          %778 = sbr.rel (%p776) target = $region44
        $region43: #{seq2seq_transformer_forward.46} parent=35 // pred_region
          %s780 = ssub.s32 512, 512
          %781 = vsyncadd %s769, %s780
          %s782 = smul.addr %s20, 4
          %s783 = smul.addr %s782, 128
          %s784 = scalar_lea.hbm %s5, %s783
          %s785 = sshll.u32 %s772, 4
          %s786 = int_to_ptr.vmem [resolvable:$true] %s785
          %791 = dma.vmem_to_hbm [thread:$0]  %s786, 512, %s784, %s769, 128, 128, 8
        $region44: #{seq2seq_transformer_forward.46} parent=35 // pred_fallthru
          _
      $region36: #{seq2seq_transformer_forward.46} parent=5 // pred_fallthru
        _
      %p792 = scmp.le.s32.totalorder 2, %s15
      // Predicated region
      $region45: #{seq2seq_transformer_forward.46} parent=5 // pred_check
        %p793 = pneg %p792
      $region46: #{seq2seq_transformer_forward.46} parent=5 // pred_check_branch
        %795 = sbr.rel (%p793) target = $region48
      $region47: #{seq2seq_transformer_forward.46} parent=5 // pred_region
        %s796 = ssub.s32 %s15, 2
        // Predicated region
        $region49: #{seq2seq_transformer_forward.46} parent=47 // pred_check
          %p797 = pneg %p148
        $region50: #{seq2seq_transformer_forward.46} parent=47 // pred_check_branch
          %799 = sbr.rel (%p797) target = $region52
        $region51: #{seq2seq_transformer_forward.46} parent=47 // pred_region
          %p800 = scmp.lt.s32.totalorder %s21, 1
          %s801 = scalar_select %p800, %s21, 1
          %s802 = smul.addr %s801, 8
          %s803 = scalar_lea.vmem %s4, %s802
        $region52: #{seq2seq_transformer_forward.46} parent=47 // pred_fallthru
          _
        // Predicated region
        $region53: #{seq2seq_transformer_forward.46} parent=47 // pred_check
          %p804 = pneg %p174
        $region54: #{seq2seq_transformer_forward.46} parent=47 // pred_check_branch
          %806 = sbr.rel (%p804) target = $region56
        $region55: #{seq2seq_transformer_forward.46} parent=47 // pred_region
          %s807 = sand.u32 %s159, 1
          %s808 = scalar_lea.sflag [#allocation3], %s807
          %s809 = sand.u32 %s159, 1
          %s810 = smul.addr %s809, 32
          %s811 = scalar_lea.vmem [#allocation2], %s810
          %812 = dma.done %s808, 512
        $region56: #{seq2seq_transformer_forward.46} parent=47 // pred_fallthru
          _
      $region48: #{seq2seq_transformer_forward.46} parent=5 // pred_fallthru
        _
    $region6: #{seq2seq_transformer_forward.46} parent=1 // loop_footer
      %s19 = sadd.s32 1, %s15
    $region7: #{seq2seq_transformer_forward.46} parent=1 // loop_footer_branch
      %14 = sbr.rel target = $region3
    $region8: #{seq2seq_transformer_forward.46} parent=1 // loop_exit
      _
    %813 = vsyncpa [#allocation3], 1
    %s814 = scalar_lea.sflag [#allocation3], 1
    %815 = vsyncpa %s814, 1

</llo_original>
